<compile_context>
chip_gen: v6e
topology: v6e:2x2x1
jax: 0.10.0
libtpu: 0.0.40
codegen_flags: <defaults>
</compile_context>

<pallas_src>
import jax
import jax.numpy as jnp
from jax.experimental import pallas as pl
from jax.experimental.pallas import tpu as pltpu

INPUT_DIM = 784
HIDDEN = 400
LATENT = 20

# Lane-dense padded sizes (multiples of 128) for output/N dimensions.
INPUT_PAD = 896     # 7 * 128 (decoder output lanes)
HIDDEN_PAD = 512    # 4 * 128
LATENT_PAD = 128    # 1 * 128
ML_PAD = 2 * LATENT_PAD   # fused mu || logvar head


def vae_kernel(x_ref, eps_ref,
               w1_ref, b1_ref, wh_ref, bh_ref,
               w3_ref, b3_ref, w4_ref, b4_ref,
               recon_ref, ml_ref):
    # ---- encode: (TM, 784) bf16 @ (784, 512) bf16 -> f32 accumulate ----
    h1 = jnp.dot(x_ref[...], w1_ref[...],
                 preferred_element_type=jnp.float32) + b1_ref[...]
    h1 = jnp.maximum(h1, 0.0)                                  # relu, f32

    # fused mu/logvar head: (TM, 512) @ (512, 256) -> single MXU pass,
    # stored as one lane-dense 256-wide block (split in the wrapper).
    ml = jnp.dot(h1.astype(jnp.bfloat16), wh_ref[...],
                 preferred_element_type=jnp.float32) + bh_ref[...]
    ml_ref[...] = ml

    mu = ml[:, :LATENT_PAD]           # 128-lane aligned slices
    logvar = ml[:, LATENT_PAD:]

    # ---- reparameterize (padded lanes of z feed zero rows of w3 -> exact) ----
    std = jnp.exp(0.5 * logvar)
    z = mu + eps_ref[...] * std                                # (TM, 128) f32

    # ---- decode ----
    h3 = jnp.dot(z.astype(jnp.bfloat16), w3_ref[...],
                 preferred_element_type=jnp.float32) + b3_ref[...]
    h3 = jnp.maximum(h3, 0.0)                                  # relu
    logits = jnp.dot(h3.astype(jnp.bfloat16), w4_ref[...],
                     preferred_element_type=jnp.float32) + b4_ref[...]
    # single-transcendental sigmoid: sigmoid(x) = 0.5 * tanh(0.5 * x) + 0.5
    # (1 EUP op/elem instead of exp + recip); bf16 store halves writeback bytes.
    recon_ref[...] = (0.5 * jnp.tanh(0.5 * logits) + 0.5).astype(recon_ref.dtype)


def _pad2(a, rows, cols):
    return jnp.pad(a, ((0, rows - a.shape[0]), (0, cols - a.shape[1])))


def prepare_params(params):
    """Pad to lane-dense sizes, fuse the mu/logvar heads, cast weights to bf16."""
    (w1, b1, w21, b21, w22, b22, w3, b3, w4, b4) = params
    w1p = _pad2(w1, INPUT_DIM, HIDDEN_PAD).astype(jnp.bfloat16)          # (784, 512)
    b1p = _pad2(b1, 1, HIDDEN_PAD)                                       # (1, 512) f32
    whp = jnp.concatenate(
        [_pad2(w21, HIDDEN_PAD, LATENT_PAD),
         _pad2(w22, HIDDEN_PAD, LATENT_PAD)], axis=1).astype(jnp.bfloat16)  # (512, 256)
    bhp = jnp.concatenate(
        [_pad2(b21, 1, LATENT_PAD), _pad2(b22, 1, LATENT_PAD)], axis=1)  # (1, 256) f32
    w3p = _pad2(w3, LATENT_PAD, HIDDEN_PAD).astype(jnp.bfloat16)         # (128, 512)
    b3p = _pad2(b3, 1, HIDDEN_PAD)                                       # (1, 512) f32
    w4p = _pad2(w4, HIDDEN_PAD, INPUT_PAD).astype(jnp.bfloat16)          # (512, 896)
    b4p = _pad2(b4, 1, INPUT_PAD)                                        # (1, 896) f32
    return (w1p, b1p, whp, bhp, w3p, b3p, w4p, b4p)


def _choose_tile_m(B, tile_m):
    """Full-M tiles: tm = min(tile_m, batch) rounded to a multiple of 16 (bf16
    sublane packing).  No forced grid split -- the batch axis only splits into
    multiple grid steps (megacore shardable) when B >= 2 * tile_m."""
    b16 = ((B + 15) // 16) * 16
    tm = min(((tile_m + 15) // 16) * 16, b16)
    return max(tm, 16)


def vae_forward(x_nchw, eps, padded_params, *, tile_m=256):
    """x_nchw: (B, 1, 28, 28) float32.  eps: (B, LATENT) float32."""
    # The bf16 cast is the only wrapper op on x (no materialized lane-pad copy).
    x = x_nchw.reshape(-1, INPUT_DIM).astype(jnp.bfloat16)
    B = x.shape[0]
    tm = _choose_tile_m(B, tile_m)
    Bp = ((B + tm - 1) // tm) * tm
    if Bp > B:
        x = jnp.pad(x, ((0, Bp - B), (0, 0)))
    # eps is tiny (20 f32/row); pad it to 128 lanes so z is lane-dense.
    eps_p = jnp.pad(eps.astype(jnp.float32),
                    ((0, Bp - B), (0, LATENT_PAD - LATENT)))

    (w1p, b1p, whp, bhp, w3p, b3p, w4p, b4p) = padded_params

    def batch_spec(cols):
        return pl.BlockSpec((tm, cols), lambda i: (i, 0))

    def full_spec(arr):
        # grid-invariant weights/biases: whole array, constant block index
        # (stays resident in VMEM; no re-DMA across grid steps).
        return pl.BlockSpec(arr.shape, lambda i: (0, 0))

    in_specs = [
        batch_spec(INPUT_DIM),        # x, (tm, 784): 784 == full trailing dim
        batch_spec(LATENT_PAD),       # eps
        full_spec(w1p), full_spec(b1p),
        full_spec(whp), full_spec(bhp),
        full_spec(w3p), full_spec(b3p),
        full_spec(w4p), full_spec(b4p),
    ]
    out_specs = [
        batch_spec(INPUT_PAD),        # recon (bf16, unmasked 896-lane stores)
        batch_spec(ML_PAD),           # fused mu||logvar (f32, 256 lanes)
    ]
    out_shape = [
        jax.ShapeDtypeStruct((Bp, INPUT_PAD), jnp.bfloat16),
        jax.ShapeDtypeStruct((Bp, ML_PAD), jnp.float32),
    ]

    flops = 2 * Bp * (INPUT_DIM * HIDDEN_PAD + HIDDEN_PAD * ML_PAD
                      + LATENT_PAD * HIDDEN_PAD + HIDDEN_PAD * INPUT_PAD)
    transcendentals = Bp * (LATENT_PAD + INPUT_PAD)     # exp(std) + tanh(sigmoid)
    bytes_accessed = (
        Bp * INPUT_DIM * 2 + Bp * LATENT_PAD * 4
        + sum(int(p.size) * p.dtype.itemsize for p in padded_params)
        + Bp * INPUT_PAD * 2 + Bp * ML_PAD * 4)

    recon, ml = pl.pallas_call(
        vae_kernel,
        out_shape=out_shape,
        grid_spec=pltpu.PrefetchScalarGridSpec(
            num_scalar_prefetch=0,
            grid=(Bp // tm,),
            in_specs=in_specs,
            out_specs=out_specs,
        ),
        compiler_params=pltpu.CompilerParams(
            dimension_semantics=("parallel",)),
        cost_estimate=pl.CostEstimate(
            flops=flops,
            transcendentals=transcendentals,
            bytes_accessed=bytes_accessed),
    )(x, eps_p, w1p, b1p, whp, bhp, w3p, b3p, w4p, b4p)

    mu = ml[:B, :LATENT]
    logvar = ml[:B, LATENT_PAD:LATENT_PAD + LATENT]
    return recon[:B, :INPUT_DIM], mu, logvar


def init_params(key):
    """Deterministic init. Weights stored as (in, out); biases as (1, out)."""
    def linear(k, fan_in, fan_out):
        kw, kb = jax.random.split(k)
        bound = 1.0 / jnp.sqrt(fan_in)
        w = jax.random.uniform(kw, (fan_in, fan_out), jnp.float32, -bound, bound)
        b = jax.random.uniform(kb, (1, fan_out), jnp.float32, -bound, bound)
        return w, b

    k1, k2, k3, k4, k5 = jax.random.split(key, 5)
    w1, b1 = linear(k1, INPUT_DIM, HIDDEN)
    w21, b21 = linear(k2, HIDDEN, LATENT)
    w22, b22 = linear(k3, HIDDEN, LATENT)
    w3, b3 = linear(k4, LATENT, HIDDEN)
    w4, b4 = linear(k5, HIDDEN, INPUT_DIM)
    return (w1, b1, w21, b21, w22, b22, w3, b3, w4, b4)


def reference_forward(x_nchw, eps, params):
    """Pure-JAX f32 reference (same math as the PyTorch module)."""
    (w1, b1, w21, b21, w22, b22, w3, b3, w4, b4) = params
    x = x_nchw.reshape(-1, INPUT_DIM)
    h1 = jax.nn.relu(x @ w1 + b1)
    mu = h1 @ w21 + b21
    logvar = h1 @ w22 + b22
    z = mu + eps * jnp.exp(0.5 * logvar)
    h3 = jax.nn.relu(z @ w3 + b3)
    recon = jax.nn.sigmoid(h3 @ w4 + b4)
    return recon, mu, logvar


if __name__ == "__main__":
    key = jax.random.PRNGKey(0)
    k_params, k_x, k_eps = jax.random.split(key, 3)

    B = 16
    params = init_params(k_params)
    padded = prepare_params(params)
    x = jax.random.normal(k_x, (B, 1, 28, 28), jnp.float32)   # NCHW input
    eps = jax.random.normal(k_eps, (B, LATENT), jnp.float32)  # reparam noise

    recon, mu, logvar = vae_forward(x, eps, padded, tile_m=256)
    jax.block_until_ready((recon, mu, logvar))

    # correctness check against pure-JAX f32 reference
    # (bf16 MXU inputs + bf16 recon output -> relaxed tolerance)
    r_ref, mu_ref, lv_ref = reference_forward(x, eps, params)
    assert jnp.allclose(recon.astype(jnp.float32), r_ref, atol=2e-2, rtol=2e-2)
    assert jnp.allclose(mu, mu_ref, atol=2e-2, rtol=2e-2)
    assert jnp.allclose(logvar, lv_ref, atol=2e-2, rtol=2e-2)

    print("KERNEL_OK")
</pallas_src>

<mosaic_0001>
module attributes {stable_mosaic.version = 11 : i64} {
  func.func @vae_kernel(%arg0: i32, %arg1: memref<16x784xbf16, #tpu.memory_space<vmem>>, %arg2: memref<16x128xf32, #tpu.memory_space<vmem>>, %arg3: memref<784x512xbf16, #tpu.memory_space<vmem>>, %arg4: memref<1x512xf32, #tpu.memory_space<vmem>>, %arg5: memref<512x256xbf16, #tpu.memory_space<vmem>>, %arg6: memref<1x256xf32, #tpu.memory_space<vmem>>, %arg7: memref<128x512xbf16, #tpu.memory_space<vmem>>, %arg8: memref<1x512xf32, #tpu.memory_space<vmem>>, %arg9: memref<512x896xbf16, #tpu.memory_space<vmem>>, %arg10: memref<1x896xf32, #tpu.memory_space<vmem>>, %arg11: memref<16x896xbf16, #tpu.memory_space<vmem>>, %arg12: memref<16x256xf32, #tpu.memory_space<vmem>>) attributes {dimension_semantics = [#tpu.dimension_semantics<parallel>], iteration_bounds = array<i64: 1>, scalar_prefetch = 0 : i64, scratch_operands = 0 : i64, tpu.core_type = #tpu.core_type<tc>, window_params = [{transform_indices = @transform_0, window_bounds = array<i64: 16, 784>}, {transform_indices = @transform_1, window_bounds = array<i64: 16, 128>}, {pipeline_mode = #tpu.pipeline_mode<synchronous>, transform_indices = @transform_2, window_bounds = array<i64: 784, 512>}, {pipeline_mode = #tpu.pipeline_mode<synchronous>, transform_indices = @transform_3, window_bounds = array<i64: 1, 512>}, {pipeline_mode = #tpu.pipeline_mode<synchronous>, transform_indices = @transform_4, window_bounds = array<i64: 512, 256>}, {pipeline_mode = #tpu.pipeline_mode<synchronous>, transform_indices = @transform_5, window_bounds = array<i64: 1, 256>}, {pipeline_mode = #tpu.pipeline_mode<synchronous>, transform_indices = @transform_6, window_bounds = array<i64: 128, 512>}, {pipeline_mode = #tpu.pipeline_mode<synchronous>, transform_indices = @transform_7, window_bounds = array<i64: 1, 512>}, {pipeline_mode = #tpu.pipeline_mode<synchronous>, transform_indices = @transform_8, window_bounds = array<i64: 512, 896>}, {pipeline_mode = #tpu.pipeline_mode<synchronous>, transform_indices = @transform_9, window_bounds = array<i64: 1, 896>}, {transform_indices = @transform_10, window_bounds = array<i64: 16, 896>}, {transform_indices = @transform_11, window_bounds = array<i64: 16, 256>}]} {
    %c0 = arith.constant 0 : index
    %c0_0 = arith.constant 0 : index
    %0 = vector.load %arg1[%c0, %c0_0] : memref<16x784xbf16, #tpu.memory_space<vmem>>, vector<16x784xbf16>
    %c0_1 = arith.constant 0 : index
    %c0_2 = arith.constant 0 : index
    %1 = vector.load %arg3[%c0_1, %c0_2] : memref<784x512xbf16, #tpu.memory_space<vmem>>, vector<784x512xbf16>
    %cst = arith.constant dense<0.000000e+00> : vector<16x512xf32>
    %2 = tpu.matmul %0, %1, %cst {dimension_numbers = #tpu.dot_dimension_numbers<[1], [0], [0], [1], [0, 0, 1, 1], [], []>} : vector<16x784xbf16>, vector<784x512xbf16>, vector<16x512xf32> -> vector<16x512xf32>
    %c0_3 = arith.constant 0 : index
    %c0_4 = arith.constant 0 : index
    %3 = vector.load %arg4[%c0_3, %c0_4] : memref<1x512xf32, #tpu.memory_space<vmem>>, vector<1x512xf32>
    %4 = vector.broadcast %3 : vector<1x512xf32> to vector<16x512xf32>
    %5 = arith.addf %2, %4 : vector<16x512xf32>
    %cst_5 = arith.constant 0.000000e+00 : f32
    %6 = vector.broadcast %cst_5 : f32 to vector<16x512xf32>
    %7 = arith.maximumf %5, %6 : vector<16x512xf32>
    %8 = arith.truncf %7 : vector<16x512xf32> to vector<16x512xbf16>
    %c0_6 = arith.constant 0 : index
    %c0_7 = arith.constant 0 : index
    %9 = vector.load %arg5[%c0_6, %c0_7] : memref<512x256xbf16, #tpu.memory_space<vmem>>, vector<512x256xbf16>
    %cst_8 = arith.constant dense<0.000000e+00> : vector<16x256xf32>
    %10 = tpu.matmul %8, %9, %cst_8 {dimension_numbers = #tpu.dot_dimension_numbers<[1], [0], [0], [1], [0, 0, 1, 1], [], []>} : vector<16x512xbf16>, vector<512x256xbf16>, vector<16x256xf32> -> vector<16x256xf32>
    %c0_9 = arith.constant 0 : index
    %c0_10 = arith.constant 0 : index
    %11 = vector.load %arg6[%c0_9, %c0_10] : memref<1x256xf32, #tpu.memory_space<vmem>>, vector<1x256xf32>
    %12 = vector.broadcast %11 : vector<1x256xf32> to vector<16x256xf32>
    %13 = arith.addf %10, %12 : vector<16x256xf32>
    %c0_11 = arith.constant 0 : index
    %c0_12 = arith.constant 0 : index
    %14 = vector.load %arg12[%c0_11, %c0_12] : memref<16x256xf32, #tpu.memory_space<vmem>>, vector<16x256xf32>
    tpu.vector_store %arg12[%c0_11, %c0_12], %13 {strides = array<i32>} : memref<16x256xf32, #tpu.memory_space<vmem>>, vector<16x256xf32>,
    %15 = vector.extract_strided_slice %13 {offsets = [0, 0], sizes = [16, 128], strides = [1, 1]} : vector<16x256xf32> to vector<16x128xf32>
    %16 = vector.extract_strided_slice %13 {offsets = [0, 128], sizes = [16, 128], strides = [1, 1]} : vector<16x256xf32> to vector<16x128xf32>
    %cst_13 = arith.constant 5.000000e-01 : f32
    %17 = vector.broadcast %cst_13 : f32 to vector<16x128xf32>
    %18 = arith.mulf %17, %16 : vector<16x128xf32>
    %19 = math.exp %18 : vector<16x128xf32>
    %c0_14 = arith.constant 0 : index
    %c0_15 = arith.constant 0 : index
    %20 = vector.load %arg2[%c0_14, %c0_15] : memref<16x128xf32, #tpu.memory_space<vmem>>, vector<16x128xf32>
    %21 = arith.mulf %20, %19 : vector<16x128xf32>
    %22 = arith.addf %15, %21 : vector<16x128xf32>
    %23 = arith.truncf %22 : vector<16x128xf32> to vector<16x128xbf16>
    %c0_16 = arith.constant 0 : index
    %c0_17 = arith.constant 0 : index
    %24 = vector.load %arg7[%c0_16, %c0_17] : memref<128x512xbf16, #tpu.memory_space<vmem>>, vector<128x512xbf16>
    %cst_18 = arith.constant dense<0.000000e+00> : vector<16x512xf32>
    %25 = tpu.matmul %23, %24, %cst_18 {dimension_numbers = #tpu.dot_dimension_numbers<[1], [0], [0], [1], [0, 0, 1, 1], [], []>} : vector<16x128xbf16>, vector<128x512xbf16>, vector<16x512xf32> -> vector<16x512xf32>
    %c0_19 = arith.constant 0 : index
    %c0_20 = arith.constant 0 : index
    %26 = vector.load %arg8[%c0_19, %c0_20] : memref<1x512xf32, #tpu.memory_space<vmem>>, vector<1x512xf32>
    %27 = vector.broadcast %26 : vector<1x512xf32> to vector<16x512xf32>
    %28 = arith.addf %25, %27 : vector<16x512xf32>
    %cst_21 = arith.constant 0.000000e+00 : f32
    %29 = vector.broadcast %cst_21 : f32 to vector<16x512xf32>
    %30 = arith.maximumf %28, %29 : vector<16x512xf32>
    %31 = arith.truncf %30 : vector<16x512xf32> to vector<16x512xbf16>
    %c0_22 = arith.constant 0 : index
    %c0_23 = arith.constant 0 : index
    %32 = vector.load %arg9[%c0_22, %c0_23] : memref<512x896xbf16, #tpu.memory_space<vmem>>, vector<512x896xbf16>
    %cst_24 = arith.constant dense<0.000000e+00> : vector<16x896xf32>
    %33 = tpu.matmul %31, %32, %cst_24 {dimension_numbers = #tpu.dot_dimension_numbers<[1], [0], [0], [1], [0, 0, 1, 1], [], []>} : vector<16x512xbf16>, vector<512x896xbf16>, vector<16x896xf32> -> vector<16x896xf32>
    %c0_25 = arith.constant 0 : index
    %c0_26 = arith.constant 0 : index
    %34 = vector.load %arg10[%c0_25, %c0_26] : memref<1x896xf32, #tpu.memory_space<vmem>>, vector<1x896xf32>
    %35 = vector.broadcast %34 : vector<1x896xf32> to vector<16x896xf32>
    %36 = arith.addf %33, %35 : vector<16x896xf32>
    %cst_27 = arith.constant 5.000000e-01 : f32
    %37 = vector.broadcast %cst_27 : f32 to vector<16x896xf32>
    %38 = arith.mulf %37, %36 : vector<16x896xf32>
    %39 = math.tanh %38 : vector<16x896xf32>
    %cst_28 = arith.constant 5.000000e-01 : f32
    %40 = vector.broadcast %cst_28 : f32 to vector<16x896xf32>
    %41 = arith.mulf %40, %39 : vector<16x896xf32>
    %cst_29 = arith.constant 5.000000e-01 : f32
    %42 = vector.broadcast %cst_29 : f32 to vector<16x896xf32>
    %43 = arith.addf %41, %42 : vector<16x896xf32>
    %44 = arith.truncf %43 : vector<16x896xf32> to vector<16x896xbf16>
    %c0_30 = arith.constant 0 : index
    %c0_31 = arith.constant 0 : index
    %45 = vector.load %arg11[%c0_30, %c0_31] : memref<16x896xbf16, #tpu.memory_space<vmem>>, vector<16x896xbf16>
    tpu.vector_store %arg11[%c0_30, %c0_31], %44 {strides = array<i32>} : memref<16x896xbf16, #tpu.memory_space<vmem>>, vector<16x896xbf16>,
    return
  }
  func.func @transform_0(%arg0: i32) -> (i32, i32) {
    %c0_i32 = arith.constant 0 : i32
    %c0_i32_0 = arith.constant 0 : i32
    return %arg0, %c0_i32 : i32, i32
  }
  func.func @transform_1(%arg0: i32) -> (i32, i32) {
    %c0_i32 = arith.constant 0 : i32
    %c0_i32_0 = arith.constant 0 : i32
    return %arg0, %c0_i32 : i32, i32
  }
  func.func @transform_2(%arg0: i32) -> (i32, i32) {
    %c0_i32 = arith.constant 0 : i32
    %c0_i32_0 = arith.constant 0 : i32
    %c0_i32_1 = arith.constant 0 : i32
    return %c0_i32, %c0_i32_0 : i32, i32
  }
  func.func @transform_3(%arg0: i32) -> (i32, i32) {
    %c0_i32 = arith.constant 0 : i32
    %c0_i32_0 = arith.constant 0 : i32
    %c0_i32_1 = arith.constant 0 : i32
    return %c0_i32, %c0_i32_0 : i32, i32
  }
  func.func @transform_4(%arg0: i32) -> (i32, i32) {
    %c0_i32 = arith.constant 0 : i32
    %c0_i32_0 = arith.constant 0 : i32
    %c0_i32_1 = arith.constant 0 : i32
    return %c0_i32, %c0_i32_0 : i32, i32
  }
  func.func @transform_5(%arg0: i32) -> (i32, i32) {
    %c0_i32 = arith.constant 0 : i32
    %c0_i32_0 = arith.constant 0 : i32
    %c0_i32_1 = arith.constant 0 : i32
    return %c0_i32, %c0_i32_0 : i32, i32
  }
  func.func @transform_6(%arg0: i32) -> (i32, i32) {
    %c0_i32 = arith.constant 0 : i32
    %c0_i32_0 = arith.constant 0 : i32
    %c0_i32_1 = arith.constant 0 : i32
    return %c0_i32, %c0_i32_0 : i32, i32
  }
  func.func @transform_7(%arg0: i32) -> (i32, i32) {
    %c0_i32 = arith.constant 0 : i32
    %c0_i32_0 = arith.constant 0 : i32
    %c0_i32_1 = arith.constant 0 : i32
    return %c0_i32, %c0_i32_0 : i32, i32
  }
  func.func @transform_8(%arg0: i32) -> (i32, i32) {
    %c0_i32 = arith.constant 0 : i32
    %c0_i32_0 = arith.constant 0 : i32
    %c0_i32_1 = arith.constant 0 : i32
    return %c0_i32, %c0_i32_0 : i32, i32
  }
  func.func @transform_9(%arg0: i32) -> (i32, i32) {
    %c0_i32 = arith.constant 0 : i32
    %c0_i32_0 = arith.constant 0 : i32
    %c0_i32_1 = arith.constant 0 : i32
    return %c0_i32, %c0_i32_0 : i32, i32
  }
  func.func @transform_10(%arg0: i32) -> (i32, i32) {
    %c0_i32 = arith.constant 0 : i32
    %c0_i32_0 = arith.constant 0 : i32
    return %arg0, %c0_i32 : i32, i32
  }
  func.func @transform_11(%arg0: i32) -> (i32, i32) {
    %c0_i32 = arith.constant 0 : i32
    %c0_i32_0 = arith.constant 0 : i32
    return %arg0, %c0_i32 : i32, i32
  }
}

</mosaic_0001>

<llo_original>
// kernel: tpu_custom_call.1
$region0: #{tpu_custom_call.1}
  #allocation0 [shape = 'u32[]', space=smem, size = 0x4, offset = 0x4, fixed_abs, tag = 'smem constant byte address 0x4 - core index']
  #allocation1 [shape = 'u32[144,128]{1,0:T(1,128)}', space=vmem, size = 0x12000, scoped, tag = 'internal scratch']
  %s0 = inlined_call_operand.hbm [shape: bf16[16,784], index: 0, kind: input, shape index: {}]
  %s1 = inlined_call_operand.hbm [shape: f32[16,128], index: 1, kind: input, shape index: {}]
  %s2 = inlined_call_operand.hbm [shape: bf16[784,512], index: 2, kind: input, shape index: {}]
  %s3 = inlined_call_operand.vmem [shape: f32[1,512], index: 3, kind: input, shape index: {}]
  %s4 = inlined_call_operand.hbm [shape: bf16[512,256], index: 4, kind: input, shape index: {}]
  %s5 = inlined_call_operand.vmem [shape: f32[1,256], index: 5, kind: input, shape index: {}]
  %s6 = inlined_call_operand.hbm [shape: bf16[128,512], index: 6, kind: input, shape index: {}]
  %s7 = inlined_call_operand.hbm [shape: f32[1,512], index: 7, kind: input, shape index: {}]
  %s8 = inlined_call_operand.hbm [shape: bf16[512,896], index: 8, kind: input, shape index: {}]
  %s9 = inlined_call_operand.vmem [shape: f32[1,896], index: 9, kind: input, shape index: {}]
  %s10 = inlined_call_operand.hbm [shape: bf16[16,896], index: 10, kind: output, shape index: {0}]
  %s11 = inlined_call_operand.hbm [shape: f32[16,256], index: 11, kind: output, shape index: {1}]
  %12 = xla_tuple %s10, %s11
  %s13 = sld [smem:[#allocation0]]
  $region86: #{tpu_custom_call.1} parent=0
    _
  %s15 = ssub.s32 1, %s13
  %s16 = scalar_select 0, %s15, %s13
  $region1: #{tpu_custom_call.1} parent=0
    #allocation2 [shape = 'u8[28672]{0}', space=vmem, size = 0x7000, scoped, tag = 'input window, operand 0, single buffered']
    #allocation3 [shape = 's32[1]{0}', space=sflag, size = 0x4, scoped, tag = 'scoped memory for tpu_custom_call.1']
    #allocation4 [shape = 's32[1]{0}', space=sflag, size = 0x4, scoped, tag = 'scoped memory for tpu_custom_call.1']
    #allocation5 [shape = 'u8[8192]{0}', space=vmem, size = 0x2000, scoped, tag = 'input window, operand 1, single buffered']
    #allocation6 [shape = 's32[1]{0}', space=sflag, size = 0x4, scoped, tag = 'scoped memory for tpu_custom_call.1']
    #allocation7 [shape = 'u8[802816]{0}', space=vmem, size = 0xc4000, scoped, tag = 'input window, operand 2, single buffered']
    #allocation8 [shape = 'u8[262144]{0}', space=vmem, size = 0x40000, scoped, tag = 'input window, operand 4, single buffered']
    #allocation9 [shape = 's32[1]{0}', space=sflag, size = 0x4, scoped, tag = 'scoped memory for tpu_custom_call.1']
    #allocation10 [shape = 'u8[131072]{0}', space=vmem, size = 0x20000, scoped, tag = 'input window, operand 6, single buffered']
    #allocation11 [shape = 'u8[2048]{0}', space=vmem, size = 0x800, scoped, tag = 'input window, operand 7, single buffered']
    #allocation12 [shape = 's32[1]{0}', space=sflag, size = 0x4, scoped, tag = 'scoped memory for tpu_custom_call.1']
    #allocation13 [shape = 'u8[917504]{0}', space=vmem, size = 0xe0000, scoped, tag = 'input window, operand 8, single buffered']
    #allocation14 [shape = 'u8[28672]{0}', space=vmem, size = 0x7000, scoped, tag = 'output window, operand 0, single buffered']
    #allocation15 [shape = 'u8[16384]{0}', space=vmem, size = 0x4000, scoped, tag = 'output window, operand 1, single buffered']
    #allocation16 [shape = 's32[1]{0}', space=sflag, size = 0x4, scoped, tag = 'scoped memory for tpu_custom_call.1']
    %17 = vsyncpa [#allocation3], 0
    %18 = vsyncpa [#allocation6], 0
    %19 = vsyncpa [#allocation9], 0
    %20 = vsyncpa [#allocation12], 0
    %21 = vsyncpa [#allocation4], 0
    %22 = vsyncpa [#allocation16], 0
    // Predicated region
    $region2: #{tpu_custom_call.1} parent=1 // pred_check
      _
    $region3: #{tpu_custom_call.1} parent=1 // pred_check_branch
      %24 = sbr.rel (0) target = $region5
    $region4: #{tpu_custom_call.1} parent=1 // pred_region
      %s26 = ssub.s32 896, 896
      %27 = vsyncadd [#allocation3], %s26
      %s28 = sshll.u32 [#allocation2], 4
      %s29 = int_to_ptr.vmem [resolvable:$true] %s28
      %34 = dma.hbm_to_vmem [thread:$0]  %s0, 896, %s29, [#allocation3], 448, 448, 28
    $region5: #{tpu_custom_call.1} parent=1 // pred_fallthru
      _
    // Predicated region
    $region6: #{tpu_custom_call.1} parent=1 // pred_check
      _
    $region7: #{tpu_custom_call.1} parent=1 // pred_check_branch
      %36 = sbr.rel (0) target = $region9
    $region8: #{tpu_custom_call.1} parent=1 // pred_region
      %s38 = ssub.s32 256, 256
      %39 = vsyncadd [#allocation6], %s38
      %s40 = sshll.u32 [#allocation5], 4
      %s41 = int_to_ptr.vmem [resolvable:$true] %s40
      %46 = dma.hbm_to_vmem [thread:$0]  %s1, 256, %s41, [#allocation6], 128, 128, 8
    $region9: #{tpu_custom_call.1} parent=1 // pred_fallthru
      _
    // Predicated region
    $region10: #{tpu_custom_call.1} parent=1 // pred_check
      _
    $region11: #{tpu_custom_call.1} parent=1 // pred_check_branch
      %48 = sbr.rel (0) target = $region13
    $region12: #{tpu_custom_call.1} parent=1 // pred_region
      %s50 = ssub.s32 25088, 25088
      %51 = vsyncadd [#allocation6], %s50
      %s52 = sshll.u32 [#allocation7], 4
      %s53 = int_to_ptr.vmem [resolvable:$true] %s52
      %58 = dma.hbm_to_vmem [thread:$0]  %s2, 25088, %s53, [#allocation6], 256, 256, 16
    $region13: #{tpu_custom_call.1} parent=1 // pred_fallthru
      _
    // Predicated region
    $region14: #{tpu_custom_call.1} parent=1 // pred_check
      _
    $region15: #{tpu_custom_call.1} parent=1 // pred_check_branch
      %60 = sbr.rel (0) target = $region17
    $region16: #{tpu_custom_call.1} parent=1 // pred_region
      _
    $region17: #{tpu_custom_call.1} parent=1 // pred_fallthru
      _
    // Predicated region
    $region18: #{tpu_custom_call.1} parent=1 // pred_check
      _
    $region19: #{tpu_custom_call.1} parent=1 // pred_check_branch
      %62 = sbr.rel (0) target = $region21
    $region20: #{tpu_custom_call.1} parent=1 // pred_region
      %s64 = ssub.s32 8192, 8192
      %65 = vsyncadd [#allocation9], %s64
      %s66 = sshll.u32 [#allocation8], 4
      %s67 = int_to_ptr.vmem [resolvable:$true] %s66
      %72 = dma.hbm_to_vmem [thread:$0]  %s4, 8192, %s67, [#allocation9], 128, 128, 8
    $region21: #{tpu_custom_call.1} parent=1 // pred_fallthru
      _
    // Predicated region
    $region22: #{tpu_custom_call.1} parent=1 // pred_check
      _
    $region23: #{tpu_custom_call.1} parent=1 // pred_check_branch
      %74 = sbr.rel (0) target = $region25
    $region24: #{tpu_custom_call.1} parent=1 // pred_region
      _
    $region25: #{tpu_custom_call.1} parent=1 // pred_fallthru
      _
    // Predicated region
    $region26: #{tpu_custom_call.1} parent=1 // pred_check
      _
    $region27: #{tpu_custom_call.1} parent=1 // pred_check_branch
      %76 = sbr.rel (0) target = $region29
    $region28: #{tpu_custom_call.1} parent=1 // pred_region
      %s78 = ssub.s32 4096, 4096
      %79 = vsyncadd [#allocation9], %s78
      %s80 = sshll.u32 [#allocation10], 4
      %s81 = int_to_ptr.vmem [resolvable:$true] %s80
      %86 = dma.hbm_to_vmem [thread:$0]  %s6, 4096, %s81, [#allocation9], 256, 256, 16
    $region29: #{tpu_custom_call.1} parent=1 // pred_fallthru
      _
    // Predicated region
    $region30: #{tpu_custom_call.1} parent=1 // pred_check
      _
    $region31: #{tpu_custom_call.1} parent=1 // pred_check_branch
      %88 = sbr.rel (0) target = $region33
    $region32: #{tpu_custom_call.1} parent=1 // pred_region
      %s90 = ssub.s32 64, 64
      %91 = vsyncadd [#allocation12], %s90
      %s93 = sshll.u32 [#allocation11], 4
      %s94 = int_to_ptr.vmem [resolvable:$true] %s93
      %96 = dma.hbm_to_vmem [thread:$0]  %s7, 64, %s94, [#allocation12]
    $region33: #{tpu_custom_call.1} parent=1 // pred_fallthru
      _
    // Predicated region
    $region34: #{tpu_custom_call.1} parent=1 // pred_check
      _
    $region35: #{tpu_custom_call.1} parent=1 // pred_check_branch
      %98 = sbr.rel (0) target = $region37
    $region36: #{tpu_custom_call.1} parent=1 // pred_region
      %s100 = ssub.s32 28672, 28672
      %101 = vsyncadd [#allocation12], %s100
      %s102 = sshll.u32 [#allocation13], 4
      %s103 = int_to_ptr.vmem [resolvable:$true] %s102
      %108 = dma.hbm_to_vmem [thread:$0]  %s8, 28672, %s103, [#allocation12], 448, 448, 28
    $region37: #{tpu_custom_call.1} parent=1 // pred_fallthru
      _
    // Predicated region
    $region38: #{tpu_custom_call.1} parent=1 // pred_check
      _
    $region39: #{tpu_custom_call.1} parent=1 // pred_check_branch
      %110 = sbr.rel (0) target = $region41
    $region40: #{tpu_custom_call.1} parent=1 // pred_region
      _
    $region41: #{tpu_custom_call.1} parent=1 // pred_fallthru
      _
    // Predicated region
    $region42: #{tpu_custom_call.1} parent=1 // pred_check
      _
    $region43: #{tpu_custom_call.1} parent=1 // pred_check_branch
      %112 = sbr.rel (0) target = $region45
    $region44: #{tpu_custom_call.1} parent=1 // pred_region
      %113 = dma.done [#allocation3], 896
    $region45: #{tpu_custom_call.1} parent=1 // pred_fallthru
      _
    // Predicated region
    $region46: #{tpu_custom_call.1} parent=1 // pred_check
      _
    $region47: #{tpu_custom_call.1} parent=1 // pred_check_branch
      %115 = sbr.rel (0) target = $region49
    $region48: #{tpu_custom_call.1} parent=1 // pred_region
      %116 = dma.done [#allocation6], 256
    $region49: #{tpu_custom_call.1} parent=1 // pred_fallthru
      _
    // Predicated region
    $region50: #{tpu_custom_call.1} parent=1 // pred_check
      _
    $region51: #{tpu_custom_call.1} parent=1 // pred_check_branch
      %118 = sbr.rel (0) target = $region53
    $region52: #{tpu_custom_call.1} parent=1 // pred_region
      %119 = dma.done [#allocation6], 25088
    $region53: #{tpu_custom_call.1} parent=1 // pred_fallthru
      _
    // Predicated region
    $region54: #{tpu_custom_call.1} parent=1 // pred_check
      _
    $region55: #{tpu_custom_call.1} parent=1 // pred_check_branch
      %121 = sbr.rel (0) target = $region57
    $region56: #{tpu_custom_call.1} parent=1 // pred_region
      %122 = dma.done [#allocation9], 8192
    $region57: #{tpu_custom_call.1} parent=1 // pred_fallthru
      _
    // Predicated region
    $region58: #{tpu_custom_call.1} parent=1 // pred_check
      _
    $region59: #{tpu_custom_call.1} parent=1 // pred_check_branch
      %124 = sbr.rel (0) target = $region61
    $region60: #{tpu_custom_call.1} parent=1 // pred_region
      %125 = dma.done [#allocation9], 4096
    $region61: #{tpu_custom_call.1} parent=1 // pred_fallthru
      _
    // Predicated region
    $region62: #{tpu_custom_call.1} parent=1 // pred_check
      _
    $region63: #{tpu_custom_call.1} parent=1 // pred_check_branch
      %127 = sbr.rel (0) target = $region65
    $region64: #{tpu_custom_call.1} parent=1 // pred_region
      %128 = dma.done [#allocation12], 64
    $region65: #{tpu_custom_call.1} parent=1 // pred_fallthru
      _
    // Predicated region
    $region66: #{tpu_custom_call.1} parent=1 // pred_check
      _
    $region67: #{tpu_custom_call.1} parent=1 // pred_check_branch
      %130 = sbr.rel (0) target = $region69
    $region68: #{tpu_custom_call.1} parent=1 // pred_region
      %131 = dma.done [#allocation12], 28672
    $region69: #{tpu_custom_call.1} parent=1 // pred_fallthru
      _
    %v133 = vld [vmem:[#allocation2] sm:$0xff]
    %v134 = vld [vmem:[#allocation2 + $0x8] sm:$0xff]
    %v135 = vld [vmem:[#allocation2 + $0x10] sm:$0xff]
    %v136 = vld [vmem:[#allocation2 + $0x18] sm:$0xf]
    %v137 = vld [vmem:[#allocation2 + $0x1c] sm:$0xff]
    %v138 = vld [vmem:[#allocation2 + $0x24] sm:$0xff]
    %v139 = vld [vmem:[#allocation2 + $0x2c] sm:$0xff]
    %v140 = vld [vmem:[#allocation2 + $0x34] sm:$0xf]
    %v141 = vld [vmem:[#allocation7] sm:$0xff]
    %v142 = vld [vmem:[#allocation7 + $0x8] sm:$0xff]
    %v143 = vld [vmem:[#allocation7 + $0x10] sm:$0xff]
    %v144 = vld [vmem:[#allocation7 + $0x18] sm:$0xff]
    %v145 = vld [vmem:[#allocation7 + $0x20] sm:$0xff]
    %v146 = vld [vmem:[#allocation7 + $0x28] sm:$0xff]
    %v147 = vld [vmem:[#allocation7 + $0x30] sm:$0xff]
    %v148 = vld [vmem:[#allocation7 + $0x38] sm:$0xff]
    %v149 = vld [vmem:[#allocation7 + $0x40] sm:$0xff]
    %v150 = vld [vmem:[#allocation7 + $0x48] sm:$0xff]
    %v151 = vld [vmem:[#allocation7 + $0x50] sm:$0xff]
    %v152 = vld [vmem:[#allocation7 + $0x58] sm:$0xff]
    %v153 = vld [vmem:[#allocation7 + $0x60] sm:$0xff]
    %v154 = vld [vmem:[#allocation7 + $0x68] sm:$0xff]
    %v155 = vld [vmem:[#allocation7 + $0x70] sm:$0xff]
    %v156 = vld [vmem:[#allocation7 + $0x78] sm:$0xff]
    %v157 = vld [vmem:[#allocation7 + $0x80] sm:$0xff]
    %v158 = vld [vmem:[#allocation7 + $0x88] sm:$0xff]
    %v159 = vld [vmem:[#allocation7 + $0x90] sm:$0xff]
    %v160 = vld [vmem:[#allocation7 + $0x98] sm:$0xff]
    %v161 = vld [vmem:[#allocation7 + $0xa0] sm:$0xff]
    %v162 = vld [vmem:[#allocation7 + $0xa8] sm:$0xff]
    %v163 = vld [vmem:[#allocation7 + $0xb0] sm:$0xff]
    %v164 = vld [vmem:[#allocation7 + $0xb8] sm:$0xff]
    %v165 = vld [vmem:[#allocation7 + $0xc0] sm:$0xff]
    %v166 = vld [vmem:[#allocation7 + $0xc8] sm:$0xff]
    %v167 = vld [vmem:[#allocation7 + $0xd0] sm:$0xff]
    %v168 = vld [vmem:[#allocation7 + $0xd8] sm:$0xff]
    %v169 = vld [vmem:[#allocation7 + $0xe0] sm:$0xff]
    %v170 = vld [vmem:[#allocation7 + $0xe8] sm:$0xff]
    %v171 = vld [vmem:[#allocation7 + $0xf0] sm:$0xff]
    %v172 = vld [vmem:[#allocation7 + $0xf8] sm:$0xff]
    %v173 = vld [vmem:[#allocation7 + $0x100] sm:$0xff]
    %v174 = vld [vmem:[#allocation7 + $0x108] sm:$0xff]
    %v175 = vld [vmem:[#allocation7 + $0x110] sm:$0xff]
    %v176 = vld [vmem:[#allocation7 + $0x118] sm:$0xff]
    %v177 = vld [vmem:[#allocation7 + $0x120] sm:$0xff]
    %v178 = vld [vmem:[#allocation7 + $0x128] sm:$0xff]
    %v179 = vld [vmem:[#allocation7 + $0x130] sm:$0xff]
    %v180 = vld [vmem:[#allocation7 + $0x138] sm:$0xff]
    %v181 = vld [vmem:[#allocation7 + $0x140] sm:$0xff]
    %v182 = vld [vmem:[#allocation7 + $0x148] sm:$0xff]
    %v183 = vld [vmem:[#allocation7 + $0x150] sm:$0xff]
    %v184 = vld [vmem:[#allocation7 + $0x158] sm:$0xff]
    %v185 = vld [vmem:[#allocation7 + $0x160] sm:$0xff]
    %v186 = vld [vmem:[#allocation7 + $0x168] sm:$0xff]
    %v187 = vld [vmem:[#allocation7 + $0x170] sm:$0xff]
    %v188 = vld [vmem:[#allocation7 + $0x178] sm:$0xff]
    %v189 = vld [vmem:[#allocation7 + $0x180] sm:$0xff]
    %v190 = vld [vmem:[#allocation7 + $0x188] sm:$0xff]
    %v191 = vld [vmem:[#allocation7 + $0x190] sm:$0xff]
    %v192 = vld [vmem:[#allocation7 + $0x198] sm:$0xff]
    %v193 = vld [vmem:[#allocation7 + $0x1a0] sm:$0xff]
    %v194 = vld [vmem:[#allocation7 + $0x1a8] sm:$0xff]
    %v195 = vld [vmem:[#allocation7 + $0x1b0] sm:$0xff]
    %v196 = vld [vmem:[#allocation7 + $0x1b8] sm:$0xff]
    %v197 = vld [vmem:[#allocation7 + $0x1c0] sm:$0xff]
    %v198 = vld [vmem:[#allocation7 + $0x1c8] sm:$0xff]
    %v199 = vld [vmem:[#allocation7 + $0x1d0] sm:$0xff]
    %v200 = vld [vmem:[#allocation7 + $0x1d8] sm:$0xff]
    %v201 = vld [vmem:[#allocation7 + $0x1e0] sm:$0xff]
    %v202 = vld [vmem:[#allocation7 + $0x1e8] sm:$0xff]
    %v203 = vld [vmem:[#allocation7 + $0x1f0] sm:$0xff]
    %v204 = vld [vmem:[#allocation7 + $0x1f8] sm:$0xff]
    %v205 = vld [vmem:[#allocation7 + $0x200] sm:$0xff]
    %v206 = vld [vmem:[#allocation7 + $0x208] sm:$0xff]
    %v207 = vld [vmem:[#allocation7 + $0x210] sm:$0xff]
    %v208 = vld [vmem:[#allocation7 + $0x218] sm:$0xff]
    %v209 = vld [vmem:[#allocation7 + $0x220] sm:$0xff]
    %v210 = vld [vmem:[#allocation7 + $0x228] sm:$0xff]
    %v211 = vld [vmem:[#allocation7 + $0x230] sm:$0xff]
    %v212 = vld [vmem:[#allocation7 + $0x238] sm:$0xff]
    %v213 = vld [vmem:[#allocation7 + $0x240] sm:$0xff]
    %v214 = vld [vmem:[#allocation7 + $0x248] sm:$0xff]
    %v215 = vld [vmem:[#allocation7 + $0x250] sm:$0xff]
    %v216 = vld [vmem:[#allocation7 + $0x258] sm:$0xff]
    %v217 = vld [vmem:[#allocation7 + $0x260] sm:$0xff]
    %v218 = vld [vmem:[#allocation7 + $0x268] sm:$0xff]
    %v219 = vld [vmem:[#allocation7 + $0x270] sm:$0xff]
    %v220 = vld [vmem:[#allocation7 + $0x278] sm:$0xff]
    %v221 = vld [vmem:[#allocation7 + $0x280] sm:$0xff]
    %v222 = vld [vmem:[#allocation7 + $0x288] sm:$0xff]
    %v223 = vld [vmem:[#allocation7 + $0x290] sm:$0xff]
    %v224 = vld [vmem:[#allocation7 + $0x298] sm:$0xff]
    %v225 = vld [vmem:[#allocation7 + $0x2a0] sm:$0xff]
    %v226 = vld [vmem:[#allocation7 + $0x2a8] sm:$0xff]
    %v227 = vld [vmem:[#allocation7 + $0x2b0] sm:$0xff]
    %v228 = vld [vmem:[#allocation7 + $0x2b8] sm:$0xff]
    %v229 = vld [vmem:[#allocation7 + $0x2c0] sm:$0xff]
    %v230 = vld [vmem:[#allocation7 + $0x2c8] sm:$0xff]
    %v231 = vld [vmem:[#allocation7 + $0x2d0] sm:$0xff]
    %v232 = vld [vmem:[#allocation7 + $0x2d8] sm:$0xff]
    %v233 = vld [vmem:[#allocation7 + $0x2e0] sm:$0xff]
    %v234 = vld [vmem:[#allocation7 + $0x2e8] sm:$0xff]
    %v235 = vld [vmem:[#allocation7 + $0x2f0] sm:$0xff]
    %v236 = vld [vmem:[#allocation7 + $0x2f8] sm:$0xff]
    %v237 = vld [vmem:[#allocation7 + $0x300] sm:$0xff]
    %v238 = vld [vmem:[#allocation7 + $0x308] sm:$0xff]
    %v239 = vld [vmem:[#allocation7 + $0x310] sm:$0xff]
    %v240 = vld [vmem:[#allocation7 + $0x318] sm:$0xff]
    %v241 = vld [vmem:[#allocation7 + $0x320] sm:$0xff]
    %v242 = vld [vmem:[#allocation7 + $0x328] sm:$0xff]
    %v243 = vld [vmem:[#allocation7 + $0x330] sm:$0xff]
    %v244 = vld [vmem:[#allocation7 + $0x338] sm:$0xff]
    %v245 = vld [vmem:[#allocation7 + $0x340] sm:$0xff]
    %v246 = vld [vmem:[#allocation7 + $0x348] sm:$0xff]
    %v247 = vld [vmem:[#allocation7 + $0x350] sm:$0xff]
    %v248 = vld [vmem:[#allocation7 + $0x358] sm:$0xff]
    %v249 = vld [vmem:[#allocation7 + $0x360] sm:$0xff]
    %v250 = vld [vmem:[#allocation7 + $0x368] sm:$0xff]
    %v251 = vld [vmem:[#allocation7 + $0x370] sm:$0xff]
    %v252 = vld [vmem:[#allocation7 + $0x378] sm:$0xff]
    %v253 = vld [vmem:[#allocation7 + $0x380] sm:$0xff]
    %v254 = vld [vmem:[#allocation7 + $0x388] sm:$0xff]
    %v255 = vld [vmem:[#allocation7 + $0x390] sm:$0xff]
    %v256 = vld [vmem:[#allocation7 + $0x398] sm:$0xff]
    %v257 = vld [vmem:[#allocation7 + $0x3a0] sm:$0xff]
    %v258 = vld [vmem:[#allocation7 + $0x3a8] sm:$0xff]
    %v259 = vld [vmem:[#allocation7 + $0x3b0] sm:$0xff]
    %v260 = vld [vmem:[#allocation7 + $0x3b8] sm:$0xff]
    %v261 = vld [vmem:[#allocation7 + $0x3c0] sm:$0xff]
    %v262 = vld [vmem:[#allocation7 + $0x3c8] sm:$0xff]
    %v263 = vld [vmem:[#allocation7 + $0x3d0] sm:$0xff]
    %v264 = vld [vmem:[#allocation7 + $0x3d8] sm:$0xff]
    %v265 = vld [vmem:[#allocation7 + $0x3e0] sm:$0xff]
    %v266 = vld [vmem:[#allocation7 + $0x3e8] sm:$0xff]
    %v267 = vld [vmem:[#allocation7 + $0x3f0] sm:$0xff]
    %v268 = vld [vmem:[#allocation7 + $0x3f8] sm:$0xff]
    %v269 = vld [vmem:[#allocation7 + $0x400] sm:$0xff]
    %v270 = vld [vmem:[#allocation7 + $0x408] sm:$0xff]
    %v271 = vld [vmem:[#allocation7 + $0x410] sm:$0xff]
    %v272 = vld [vmem:[#allocation7 + $0x418] sm:$0xff]
    %v273 = vld [vmem:[#allocation7 + $0x420] sm:$0xff]
    %v274 = vld [vmem:[#allocation7 + $0x428] sm:$0xff]
    %v275 = vld [vmem:[#allocation7 + $0x430] sm:$0xff]
    %v276 = vld [vmem:[#allocation7 + $0x438] sm:$0xff]
    %v277 = vld [vmem:[#allocation7 + $0x440] sm:$0xff]
    %v278 = vld [vmem:[#allocation7 + $0x448] sm:$0xff]
    %v279 = vld [vmem:[#allocation7 + $0x450] sm:$0xff]
    %v280 = vld [vmem:[#allocation7 + $0x458] sm:$0xff]
    %v281 = vld [vmem:[#allocation7 + $0x460] sm:$0xff]
    %v282 = vld [vmem:[#allocation7 + $0x468] sm:$0xff]
    %v283 = vld [vmem:[#allocation7 + $0x470] sm:$0xff]
    %v284 = vld [vmem:[#allocation7 + $0x478] sm:$0xff]
    %v285 = vld [vmem:[#allocation7 + $0x480] sm:$0xff]
    %v286 = vld [vmem:[#allocation7 + $0x488] sm:$0xff]
    %v287 = vld [vmem:[#allocation7 + $0x490] sm:$0xff]
    %v288 = vld [vmem:[#allocation7 + $0x498] sm:$0xff]
    %v289 = vld [vmem:[#allocation7 + $0x4a0] sm:$0xff]
    %v290 = vld [vmem:[#allocation7 + $0x4a8] sm:$0xff]
    %v291 = vld [vmem:[#allocation7 + $0x4b0] sm:$0xff]
    %v292 = vld [vmem:[#allocation7 + $0x4b8] sm:$0xff]
    %v293 = vld [vmem:[#allocation7 + $0x4c0] sm:$0xff]
    %v294 = vld [vmem:[#allocation7 + $0x4c8] sm:$0xff]
    %v295 = vld [vmem:[#allocation7 + $0x4d0] sm:$0xff]
    %v296 = vld [vmem:[#allocation7 + $0x4d8] sm:$0xff]
    %v297 = vld [vmem:[#allocation7 + $0x4e0] sm:$0xff]
    %v298 = vld [vmem:[#allocation7 + $0x4e8] sm:$0xff]
    %v299 = vld [vmem:[#allocation7 + $0x4f0] sm:$0xff]
    %v300 = vld [vmem:[#allocation7 + $0x4f8] sm:$0xff]
    %v301 = vld [vmem:[#allocation7 + $0x500] sm:$0xff]
    %v302 = vld [vmem:[#allocation7 + $0x508] sm:$0xff]
    %v303 = vld [vmem:[#allocation7 + $0x510] sm:$0xff]
    %v304 = vld [vmem:[#allocation7 + $0x518] sm:$0xff]
    %v305 = vld [vmem:[#allocation7 + $0x520] sm:$0xff]
    %v306 = vld [vmem:[#allocation7 + $0x528] sm:$0xff]
    %v307 = vld [vmem:[#allocation7 + $0x530] sm:$0xff]
    %v308 = vld [vmem:[#allocation7 + $0x538] sm:$0xff]
    %v309 = vld [vmem:[#allocation7 + $0x540] sm:$0xff]
    %v310 = vld [vmem:[#allocation7 + $0x548] sm:$0xff]
    %v311 = vld [vmem:[#allocation7 + $0x550] sm:$0xff]
    %v312 = vld [vmem:[#allocation7 + $0x558] sm:$0xff]
    %v313 = vld [vmem:[#allocation7 + $0x560] sm:$0xff]
    %v314 = vld [vmem:[#allocation7 + $0x568] sm:$0xff]
    %v315 = vld [vmem:[#allocation7 + $0x570] sm:$0xff]
    %v316 = vld [vmem:[#allocation7 + $0x578] sm:$0xff]
    %v317 = vld [vmem:[#allocation7 + $0x580] sm:$0xff]
    %v318 = vld [vmem:[#allocation7 + $0x588] sm:$0xff]
    %v319 = vld [vmem:[#allocation7 + $0x590] sm:$0xff]
    %v320 = vld [vmem:[#allocation7 + $0x598] sm:$0xff]
    %v321 = vld [vmem:[#allocation7 + $0x5a0] sm:$0xff]
    %v322 = vld [vmem:[#allocation7 + $0x5a8] sm:$0xff]
    %v323 = vld [vmem:[#allocation7 + $0x5b0] sm:$0xff]
    %v324 = vld [vmem:[#allocation7 + $0x5b8] sm:$0xff]
    %v325 = vld [vmem:[#allocation7 + $0x5c0] sm:$0xff]
    %v326 = vld [vmem:[#allocation7 + $0x5c8] sm:$0xff]
    %v327 = vld [vmem:[#allocation7 + $0x5d0] sm:$0xff]
    %v328 = vld [vmem:[#allocation7 + $0x5d8] sm:$0xff]
    %v329 = vld [vmem:[#allocation7 + $0x5e0] sm:$0xff]
    %v330 = vld [vmem:[#allocation7 + $0x5e8] sm:$0xff]
    %v331 = vld [vmem:[#allocation7 + $0x5f0] sm:$0xff]
    %v332 = vld [vmem:[#allocation7 + $0x5f8] sm:$0xff]
    %v333 = vld [vmem:[#allocation7 + $0x600] sm:$0xff]
    %v334 = vld [vmem:[#allocation7 + $0x608] sm:$0xff]
    %v335 = vld [vmem:[#allocation7 + $0x610] sm:$0xff]
    %v336 = vld [vmem:[#allocation7 + $0x618] sm:$0xff]
    %v337 = vld [vmem:[%s3] sm:$0xf]
    %v339 = vlaneseq
    %v340 = vshrl.u32 %v339, 7
    %v341 = vsub.s32 0, %v340
    %v342 = vrot.slane %v337, %v341
    %v343 = vlaneseq
    %v344 = vshrl.u32 %v343, 7
    %v345 = vsub.s32 1, %v344
    %v346 = vrot.slane %v337, %v345
    %v347 = vlaneseq
    %v348 = vshrl.u32 %v347, 7
    %v349 = vsub.s32 2, %v348
    %v350 = vrot.slane %v337, %v349
    %v351 = vlaneseq
    %v352 = vshrl.u32 %v351, 7
    %v353 = vsub.s32 3, %v352
    %v354 = vrot.slane %v337, %v353
    %v367 = vunpack.c.l.b16 %v133
    %v368 = vunpack.c.h.b16 %v133
    %v369 = vunpack.c.l.b16 %v134
    %v370 = vunpack.c.h.b16 %v134
    %v371 = vunpack.c.l.b16 %v135
    %v372 = vunpack.c.h.b16 %v135
    %v373 = vunpack.c.l.b16 %v136
    %v374 = vunpack.c.l.b16 %v137
    %v375 = vunpack.c.h.b16 %v137
    %v376 = vunpack.c.l.b16 %v138
    %v377 = vunpack.c.h.b16 %v138
    %v378 = vunpack.c.l.b16 %v139
    %v379 = vunpack.c.h.b16 %v139
    %v380 = vunpack.c.l.b16 %v140
    %v381 = vpack.c.b16 %v374, %v367
    %v382 = vpack.c.b16 %v375, %v368
    %v383 = vpack.c.b16 %v376, %v369
    %v384 = vpack.c.b16 %v377, %v370
    %v385 = vpack.c.b16 %v378, %v371
    %v386 = vpack.c.b16 %v379, %v372
    %v387 = vpack.c.b16 %v380, %v373
    %v590 = vunpack.c.l.b16 %v141
    %v591 = vunpack.c.h.b16 %v141
    %v592 = vunpack.c.l.b16 %v142
    %v593 = vunpack.c.h.b16 %v142
    %v594 = vunpack.c.l.b16 %v143
    %v595 = vunpack.c.h.b16 %v143
    %v596 = vunpack.c.l.b16 %v144
    %v597 = vunpack.c.h.b16 %v144
    %v598 = vunpack.c.l.b16 %v145
    %v599 = vunpack.c.h.b16 %v145
    %v600 = vunpack.c.l.b16 %v146
    %v601 = vunpack.c.h.b16 %v146
    %v602 = vunpack.c.l.b16 %v147
    %v603 = vunpack.c.h.b16 %v147
    %v604 = vunpack.c.l.b16 %v148
    %v605 = vunpack.c.h.b16 %v148
    %v606 = vunpack.c.l.b16 %v149
    %v607 = vunpack.c.h.b16 %v149
    %v608 = vunpack.c.l.b16 %v150
    %v609 = vunpack.c.h.b16 %v150
    %v610 = vunpack.c.l.b16 %v151
    %v611 = vunpack.c.h.b16 %v151
    %v612 = vunpack.c.l.b16 %v152
    %v613 = vunpack.c.h.b16 %v152
    %v614 = vunpack.c.l.b16 %v153
    %v615 = vunpack.c.h.b16 %v153
    %v616 = vunpack.c.l.b16 %v154
    %v617 = vunpack.c.h.b16 %v154
    %v618 = vunpack.c.l.b16 %v155
    %v619 = vunpack.c.h.b16 %v155
    %v620 = vunpack.c.l.b16 %v156
    %v621 = vunpack.c.h.b16 %v156
    %v622 = vunpack.c.l.b16 %v157
    %v623 = vunpack.c.h.b16 %v157
    %v624 = vunpack.c.l.b16 %v158
    %v625 = vunpack.c.h.b16 %v158
    %v626 = vunpack.c.l.b16 %v159
    %v627 = vunpack.c.h.b16 %v159
    %v628 = vunpack.c.l.b16 %v160
    %v629 = vunpack.c.h.b16 %v160
    %v630 = vunpack.c.l.b16 %v161
    %v631 = vunpack.c.h.b16 %v161
    %v632 = vunpack.c.l.b16 %v162
    %v633 = vunpack.c.h.b16 %v162
    %v634 = vunpack.c.l.b16 %v163
    %v635 = vunpack.c.h.b16 %v163
    %v636 = vunpack.c.l.b16 %v164
    %v637 = vunpack.c.h.b16 %v164
    %v638 = vunpack.c.l.b16 %v165
    %v639 = vunpack.c.h.b16 %v165
    %v640 = vunpack.c.l.b16 %v166
    %v641 = vunpack.c.h.b16 %v166
    %v642 = vunpack.c.l.b16 %v167
    %v643 = vunpack.c.h.b16 %v167
    %v644 = vunpack.c.l.b16 %v168
    %v645 = vunpack.c.h.b16 %v168
    %v646 = vunpack.c.l.b16 %v169
    %v647 = vunpack.c.h.b16 %v169
    %v648 = vunpack.c.l.b16 %v170
    %v649 = vunpack.c.h.b16 %v170
    %v650 = vunpack.c.l.b16 %v171
    %v651 = vunpack.c.h.b16 %v171
    %v652 = vunpack.c.l.b16 %v172
    %v653 = vunpack.c.h.b16 %v172
    %v654 = vunpack.c.l.b16 %v173
    %v655 = vunpack.c.h.b16 %v173
    %v656 = vunpack.c.l.b16 %v174
    %v657 = vunpack.c.h.b16 %v174
    %v658 = vunpack.c.l.b16 %v175
    %v659 = vunpack.c.h.b16 %v175
    %v660 = vunpack.c.l.b16 %v176
    %v661 = vunpack.c.h.b16 %v176
    %v662 = vunpack.c.l.b16 %v177
    %v663 = vunpack.c.h.b16 %v177
    %v664 = vunpack.c.l.b16 %v178
    %v665 = vunpack.c.h.b16 %v178
    %v666 = vunpack.c.l.b16 %v179
    %v667 = vunpack.c.h.b16 %v179
    %v668 = vunpack.c.l.b16 %v180
    %v669 = vunpack.c.h.b16 %v180
    %v670 = vunpack.c.l.b16 %v181
    %v671 = vunpack.c.h.b16 %v181
    %v672 = vunpack.c.l.b16 %v182
    %v673 = vunpack.c.h.b16 %v182
    %v674 = vunpack.c.l.b16 %v183
    %v675 = vunpack.c.h.b16 %v183
    %v676 = vunpack.c.l.b16 %v184
    %v677 = vunpack.c.h.b16 %v184
    %v678 = vunpack.c.l.b16 %v185
    %v679 = vunpack.c.h.b16 %v185
    %v680 = vunpack.c.l.b16 %v186
    %v681 = vunpack.c.h.b16 %v186
    %v682 = vunpack.c.l.b16 %v187
    %v683 = vunpack.c.h.b16 %v187
    %v684 = vunpack.c.l.b16 %v188
    %v685 = vunpack.c.h.b16 %v188
    %v686 = vunpack.c.l.b16 %v189
    %v687 = vunpack.c.h.b16 %v189
    %v688 = vunpack.c.l.b16 %v190
    %v689 = vunpack.c.h.b16 %v190
    %v690 = vunpack.c.l.b16 %v191
    %v691 = vunpack.c.h.b16 %v191
    %v692 = vunpack.c.l.b16 %v192
    %v693 = vunpack.c.h.b16 %v192
    %v694 = vunpack.c.l.b16 %v193
    %v695 = vunpack.c.h.b16 %v193
    %v696 = vunpack.c.l.b16 %v194
    %v697 = vunpack.c.h.b16 %v194
    %v698 = vunpack.c.l.b16 %v195
    %v699 = vunpack.c.h.b16 %v195
    %v700 = vunpack.c.l.b16 %v196
    %v701 = vunpack.c.h.b16 %v196
    %v702 = vunpack.c.l.b16 %v197
    %v703 = vunpack.c.h.b16 %v197
    %v704 = vunpack.c.l.b16 %v198
    %v705 = vunpack.c.h.b16 %v198
    %v706 = vunpack.c.l.b16 %v199
    %v707 = vunpack.c.h.b16 %v199
    %v708 = vunpack.c.l.b16 %v200
    %v709 = vunpack.c.h.b16 %v200
    %v710 = vunpack.c.l.b16 %v201
    %v711 = vunpack.c.h.b16 %v201
    %v712 = vunpack.c.l.b16 %v202
    %v713 = vunpack.c.h.b16 %v202
    %v714 = vunpack.c.l.b16 %v203
    %v715 = vunpack.c.h.b16 %v203
    %v716 = vunpack.c.l.b16 %v204
    %v717 = vunpack.c.h.b16 %v204
    %v718 = vunpack.c.l.b16 %v205
    %v719 = vunpack.c.h.b16 %v205
    %v720 = vunpack.c.l.b16 %v206
    %v721 = vunpack.c.h.b16 %v206
    %v722 = vunpack.c.l.b16 %v207
    %v723 = vunpack.c.h.b16 %v207
    %v724 = vunpack.c.l.b16 %v208
    %v725 = vunpack.c.h.b16 %v208
    %v726 = vunpack.c.l.b16 %v209
    %v727 = vunpack.c.h.b16 %v209
    %v728 = vunpack.c.l.b16 %v210
    %v729 = vunpack.c.h.b16 %v210
    %v730 = vunpack.c.l.b16 %v211
    %v731 = vunpack.c.h.b16 %v211
    %v732 = vunpack.c.l.b16 %v212
    %v733 = vunpack.c.h.b16 %v212
    %v734 = vunpack.c.l.b16 %v213
    %v735 = vunpack.c.h.b16 %v213
    %v736 = vunpack.c.l.b16 %v214
    %v737 = vunpack.c.h.b16 %v214
    %v738 = vunpack.c.l.b16 %v215
    %v739 = vunpack.c.h.b16 %v215
    %v740 = vunpack.c.l.b16 %v216
    %v741 = vunpack.c.h.b16 %v216
    %v742 = vunpack.c.l.b16 %v217
    %v743 = vunpack.c.h.b16 %v217
    %v744 = vunpack.c.l.b16 %v218
    %v745 = vunpack.c.h.b16 %v218
    %v746 = vunpack.c.l.b16 %v219
    %v747 = vunpack.c.h.b16 %v219
    %v748 = vunpack.c.l.b16 %v220
    %v749 = vunpack.c.h.b16 %v220
    %v750 = vunpack.c.l.b16 %v221
    %v751 = vunpack.c.h.b16 %v221
    %v752 = vunpack.c.l.b16 %v222
    %v753 = vunpack.c.h.b16 %v222
    %v754 = vunpack.c.l.b16 %v223
    %v755 = vunpack.c.h.b16 %v223
    %v756 = vunpack.c.l.b16 %v224
    %v757 = vunpack.c.h.b16 %v224
    %v758 = vunpack.c.l.b16 %v225
    %v759 = vunpack.c.h.b16 %v225
    %v760 = vunpack.c.l.b16 %v226
    %v761 = vunpack.c.h.b16 %v226
    %v762 = vunpack.c.l.b16 %v227
    %v763 = vunpack.c.h.b16 %v227
    %v764 = vunpack.c.l.b16 %v228
    %v765 = vunpack.c.h.b16 %v228
    %v766 = vunpack.c.l.b16 %v229
    %v767 = vunpack.c.h.b16 %v229
    %v768 = vunpack.c.l.b16 %v230
    %v769 = vunpack.c.h.b16 %v230
    %v770 = vunpack.c.l.b16 %v231
    %v771 = vunpack.c.h.b16 %v231
    %v772 = vunpack.c.l.b16 %v232
    %v773 = vunpack.c.h.b16 %v232
    %v774 = vunpack.c.l.b16 %v233
    %v775 = vunpack.c.h.b16 %v233
    %v776 = vunpack.c.l.b16 %v234
    %v777 = vunpack.c.h.b16 %v234
    %v778 = vunpack.c.l.b16 %v235
    %v779 = vunpack.c.h.b16 %v235
    %v780 = vunpack.c.l.b16 %v236
    %v781 = vunpack.c.h.b16 %v236
    %v782 = vunpack.c.l.b16 %v237
    %v783 = vunpack.c.h.b16 %v237
    %v784 = vunpack.c.l.b16 %v238
    %v785 = vunpack.c.h.b16 %v238
    %v786 = vunpack.c.l.b16 %v239
    %v787 = vunpack.c.h.b16 %v239
    %v788 = vunpack.c.l.b16 %v240
    %v789 = vunpack.c.h.b16 %v240
    %v790 = vunpack.c.l.b16 %v241
    %v791 = vunpack.c.h.b16 %v241
    %v792 = vunpack.c.l.b16 %v242
    %v793 = vunpack.c.h.b16 %v242
    %v794 = vunpack.c.l.b16 %v243
    %v795 = vunpack.c.h.b16 %v243
    %v796 = vunpack.c.l.b16 %v244
    %v797 = vunpack.c.h.b16 %v244
    %v798 = vunpack.c.l.b16 %v245
    %v799 = vunpack.c.h.b16 %v245
    %v800 = vunpack.c.l.b16 %v246
    %v801 = vunpack.c.h.b16 %v246
    %v802 = vunpack.c.l.b16 %v247
    %v803 = vunpack.c.h.b16 %v247
    %v804 = vunpack.c.l.b16 %v248
    %v805 = vunpack.c.h.b16 %v248
    %v806 = vunpack.c.l.b16 %v249
    %v807 = vunpack.c.h.b16 %v249
    %v808 = vunpack.c.l.b16 %v250
    %v809 = vunpack.c.h.b16 %v250
    %v810 = vunpack.c.l.b16 %v251
    %v811 = vunpack.c.h.b16 %v251
    %v812 = vunpack.c.l.b16 %v252
    %v813 = vunpack.c.h.b16 %v252
    %v814 = vunpack.c.l.b16 %v253
    %v815 = vunpack.c.h.b16 %v253
    %v816 = vunpack.c.l.b16 %v254
    %v817 = vunpack.c.h.b16 %v254
    %v818 = vunpack.c.l.b16 %v255
    %v819 = vunpack.c.h.b16 %v255
    %v820 = vunpack.c.l.b16 %v256
    %v821 = vunpack.c.h.b16 %v256
    %v822 = vunpack.c.l.b16 %v257
    %v823 = vunpack.c.h.b16 %v257
    %v824 = vunpack.c.l.b16 %v258
    %v825 = vunpack.c.h.b16 %v258
    %v826 = vunpack.c.l.b16 %v259
    %v827 = vunpack.c.h.b16 %v259
    %v828 = vunpack.c.l.b16 %v260
    %v829 = vunpack.c.h.b16 %v260
    %v830 = vunpack.c.l.b16 %v261
    %v831 = vunpack.c.h.b16 %v261
    %v832 = vunpack.c.l.b16 %v262
    %v833 = vunpack.c.h.b16 %v262
    %v834 = vunpack.c.l.b16 %v263
    %v835 = vunpack.c.h.b16 %v263
    %v836 = vunpack.c.l.b16 %v264
    %v837 = vunpack.c.h.b16 %v264
    %v838 = vunpack.c.l.b16 %v265
    %v839 = vunpack.c.h.b16 %v265
    %v840 = vunpack.c.l.b16 %v266
    %v841 = vunpack.c.h.b16 %v266
    %v842 = vunpack.c.l.b16 %v267
    %v843 = vunpack.c.h.b16 %v267
    %v844 = vunpack.c.l.b16 %v268
    %v845 = vunpack.c.h.b16 %v268
    %v846 = vunpack.c.l.b16 %v269
    %v847 = vunpack.c.h.b16 %v269
    %v848 = vunpack.c.l.b16 %v270
    %v849 = vunpack.c.h.b16 %v270
    %v850 = vunpack.c.l.b16 %v271
    %v851 = vunpack.c.h.b16 %v271
    %v852 = vunpack.c.l.b16 %v272
    %v853 = vunpack.c.h.b16 %v272
    %v854 = vunpack.c.l.b16 %v273
    %v855 = vunpack.c.h.b16 %v273
    %v856 = vunpack.c.l.b16 %v274
    %v857 = vunpack.c.h.b16 %v274
    %v858 = vunpack.c.l.b16 %v275
    %v859 = vunpack.c.h.b16 %v275
    %v860 = vunpack.c.l.b16 %v276
    %v861 = vunpack.c.h.b16 %v276
    %v862 = vunpack.c.l.b16 %v277
    %v863 = vunpack.c.h.b16 %v277
    %v864 = vunpack.c.l.b16 %v278
    %v865 = vunpack.c.h.b16 %v278
    %v866 = vunpack.c.l.b16 %v279
    %v867 = vunpack.c.h.b16 %v279
    %v868 = vunpack.c.l.b16 %v280
    %v869 = vunpack.c.h.b16 %v280
    %v870 = vunpack.c.l.b16 %v281
    %v871 = vunpack.c.h.b16 %v281
    %v872 = vunpack.c.l.b16 %v282
    %v873 = vunpack.c.h.b16 %v282
    %v874 = vunpack.c.l.b16 %v283
    %v875 = vunpack.c.h.b16 %v283
    %v876 = vunpack.c.l.b16 %v284
    %v877 = vunpack.c.h.b16 %v284
    %v878 = vunpack.c.l.b16 %v285
    %v879 = vunpack.c.h.b16 %v285
    %v880 = vunpack.c.l.b16 %v286
    %v881 = vunpack.c.h.b16 %v286
    %v882 = vunpack.c.l.b16 %v287
    %v883 = vunpack.c.h.b16 %v287
    %v884 = vunpack.c.l.b16 %v288
    %v885 = vunpack.c.h.b16 %v288
    %v886 = vunpack.c.l.b16 %v289
    %v887 = vunpack.c.h.b16 %v289
    %v888 = vunpack.c.l.b16 %v290
    %v889 = vunpack.c.h.b16 %v290
    %v890 = vunpack.c.l.b16 %v291
    %v891 = vunpack.c.h.b16 %v291
    %v892 = vunpack.c.l.b16 %v292
    %v893 = vunpack.c.h.b16 %v292
    %v894 = vunpack.c.l.b16 %v293
    %v895 = vunpack.c.h.b16 %v293
    %v896 = vunpack.c.l.b16 %v294
    %v897 = vunpack.c.h.b16 %v294
    %v898 = vunpack.c.l.b16 %v295
    %v899 = vunpack.c.h.b16 %v295
    %v900 = vunpack.c.l.b16 %v296
    %v901 = vunpack.c.h.b16 %v296
    %v902 = vunpack.c.l.b16 %v297
    %v903 = vunpack.c.h.b16 %v297
    %v904 = vunpack.c.l.b16 %v298
    %v905 = vunpack.c.h.b16 %v298
    %v906 = vunpack.c.l.b16 %v299
    %v907 = vunpack.c.h.b16 %v299
    %v908 = vunpack.c.l.b16 %v300
    %v909 = vunpack.c.h.b16 %v300
    %v910 = vunpack.c.l.b16 %v301
    %v911 = vunpack.c.h.b16 %v301
    %v912 = vunpack.c.l.b16 %v302
    %v913 = vunpack.c.h.b16 %v302
    %v914 = vunpack.c.l.b16 %v303
    %v915 = vunpack.c.h.b16 %v303
    %v916 = vunpack.c.l.b16 %v304
    %v917 = vunpack.c.h.b16 %v304
    %v918 = vunpack.c.l.b16 %v305
    %v919 = vunpack.c.h.b16 %v305
    %v920 = vunpack.c.l.b16 %v306
    %v921 = vunpack.c.h.b16 %v306
    %v922 = vunpack.c.l.b16 %v307
    %v923 = vunpack.c.h.b16 %v307
    %v924 = vunpack.c.l.b16 %v308
    %v925 = vunpack.c.h.b16 %v308
    %v926 = vunpack.c.l.b16 %v309
    %v927 = vunpack.c.h.b16 %v309
    %v928 = vunpack.c.l.b16 %v310
    %v929 = vunpack.c.h.b16 %v310
    %v930 = vunpack.c.l.b16 %v311
    %v931 = vunpack.c.h.b16 %v311
    %v932 = vunpack.c.l.b16 %v312
    %v933 = vunpack.c.h.b16 %v312
    %v934 = vunpack.c.l.b16 %v313
    %v935 = vunpack.c.h.b16 %v313
    %v936 = vunpack.c.l.b16 %v314
    %v937 = vunpack.c.h.b16 %v314
    %v938 = vunpack.c.l.b16 %v315
    %v939 = vunpack.c.h.b16 %v315
    %v940 = vunpack.c.l.b16 %v316
    %v941 = vunpack.c.h.b16 %v316
    %v942 = vunpack.c.l.b16 %v317
    %v943 = vunpack.c.h.b16 %v317
    %v944 = vunpack.c.l.b16 %v318
    %v945 = vunpack.c.h.b16 %v318
    %v946 = vunpack.c.l.b16 %v319
    %v947 = vunpack.c.h.b16 %v319
    %v948 = vunpack.c.l.b16 %v320
    %v949 = vunpack.c.h.b16 %v320
    %v950 = vunpack.c.l.b16 %v321
    %v951 = vunpack.c.h.b16 %v321
    %v952 = vunpack.c.l.b16 %v322
    %v953 = vunpack.c.h.b16 %v322
    %v954 = vunpack.c.l.b16 %v323
    %v955 = vunpack.c.h.b16 %v323
    %v956 = vunpack.c.l.b16 %v324
    %v957 = vunpack.c.h.b16 %v324
    %v958 = vunpack.c.l.b16 %v325
    %v959 = vunpack.c.h.b16 %v325
    %v960 = vunpack.c.l.b16 %v326
    %v961 = vunpack.c.h.b16 %v326
    %v962 = vunpack.c.l.b16 %v327
    %v963 = vunpack.c.h.b16 %v327
    %v964 = vunpack.c.l.b16 %v328
    %v965 = vunpack.c.h.b16 %v328
    %v966 = vunpack.c.l.b16 %v329
    %v967 = vunpack.c.h.b16 %v329
    %v968 = vunpack.c.l.b16 %v330
    %v969 = vunpack.c.h.b16 %v330
    %v970 = vunpack.c.l.b16 %v331
    %v971 = vunpack.c.h.b16 %v331
    %v972 = vunpack.c.l.b16 %v332
    %v973 = vunpack.c.h.b16 %v332
    %v974 = vunpack.c.l.b16 %v333
    %v975 = vunpack.c.h.b16 %v333
    %v976 = vunpack.c.l.b16 %v334
    %v977 = vunpack.c.h.b16 %v334
    %v978 = vunpack.c.l.b16 %v335
    %v979 = vunpack.c.h.b16 %v335
    %v980 = vunpack.c.l.b16 %v336
    %v981 = vunpack.c.h.b16 %v336
    %v982 = vpack.c.b16 %v594, %v590
    %v983 = vpack.c.b16 %v595, %v591
    %v984 = vpack.c.b16 %v596, %v592
    %v985 = vpack.c.b16 %v597, %v593
    %v986 = vpack.c.b16 %v602, %v598
    %v987 = vpack.c.b16 %v603, %v599
    %v988 = vpack.c.b16 %v604, %v600
    %v989 = vpack.c.b16 %v605, %v601
    %v990 = vpack.c.b16 %v610, %v606
    %v991 = vpack.c.b16 %v611, %v607
    %v992 = vpack.c.b16 %v612, %v608
    %v993 = vpack.c.b16 %v613, %v609
    %v994 = vpack.c.b16 %v618, %v614
    %v995 = vpack.c.b16 %v619, %v615
    %v996 = vpack.c.b16 %v620, %v616
    %v997 = vpack.c.b16 %v621, %v617
    %v998 = vpack.c.b16 %v626, %v622
    %v999 = vpack.c.b16 %v627, %v623
    %v1000 = vpack.c.b16 %v628, %v624
    %v1001 = vpack.c.b16 %v629, %v625
    %v1002 = vpack.c.b16 %v634, %v630
    %v1003 = vpack.c.b16 %v635, %v631
    %v1004 = vpack.c.b16 %v636, %v632
    %v1005 = vpack.c.b16 %v637, %v633
    %v1006 = vpack.c.b16 %v642, %v638
    %v1007 = vpack.c.b16 %v643, %v639
    %v1008 = vpack.c.b16 %v644, %v640
    %v1009 = vpack.c.b16 %v645, %v641
    %v1010 = vpack.c.b16 %v650, %v646
    %v1011 = vpack.c.b16 %v651, %v647
    %v1012 = vpack.c.b16 %v652, %v648
    %v1013 = vpack.c.b16 %v653, %v649
    %v1014 = vpack.c.b16 %v658, %v654
    %v1015 = vpack.c.b16 %v659, %v655
    %v1016 = vpack.c.b16 %v660, %v656
    %v1017 = vpack.c.b16 %v661, %v657
    %v1018 = vpack.c.b16 %v666, %v662
    %v1019 = vpack.c.b16 %v667, %v663
    %v1020 = vpack.c.b16 %v668, %v664
    %v1021 = vpack.c.b16 %v669, %v665
    %v1022 = vpack.c.b16 %v674, %v670
    %v1023 = vpack.c.b16 %v675, %v671
    %v1024 = vpack.c.b16 %v676, %v672
    %v1025 = vpack.c.b16 %v677, %v673
    %v1026 = vpack.c.b16 %v682, %v678
    %v1027 = vpack.c.b16 %v683, %v679
    %v1028 = vpack.c.b16 %v684, %v680
    %v1029 = vpack.c.b16 %v685, %v681
    %v1030 = vpack.c.b16 %v690, %v686
    %v1031 = vpack.c.b16 %v691, %v687
    %v1032 = vpack.c.b16 %v692, %v688
    %v1033 = vpack.c.b16 %v693, %v689
    %v1034 = vpack.c.b16 %v698, %v694
    %v1035 = vpack.c.b16 %v699, %v695
    %v1036 = vpack.c.b16 %v700, %v696
    %v1037 = vpack.c.b16 %v701, %v697
    %v1038 = vpack.c.b16 %v706, %v702
    %v1039 = vpack.c.b16 %v707, %v703
    %v1040 = vpack.c.b16 %v708, %v704
    %v1041 = vpack.c.b16 %v709, %v705
    %v1042 = vpack.c.b16 %v714, %v710
    %v1043 = vpack.c.b16 %v715, %v711
    %v1044 = vpack.c.b16 %v716, %v712
    %v1045 = vpack.c.b16 %v717, %v713
    %v1046 = vpack.c.b16 %v722, %v718
    %v1047 = vpack.c.b16 %v723, %v719
    %v1048 = vpack.c.b16 %v724, %v720
    %v1049 = vpack.c.b16 %v725, %v721
    %v1050 = vpack.c.b16 %v730, %v726
    %v1051 = vpack.c.b16 %v731, %v727
    %v1052 = vpack.c.b16 %v732, %v728
    %v1053 = vpack.c.b16 %v733, %v729
    %v1054 = vpack.c.b16 %v738, %v734
    %v1055 = vpack.c.b16 %v739, %v735
    %v1056 = vpack.c.b16 %v740, %v736
    %v1057 = vpack.c.b16 %v741, %v737
    %v1058 = vpack.c.b16 %v746, %v742
    %v1059 = vpack.c.b16 %v747, %v743
    %v1060 = vpack.c.b16 %v748, %v744
    %v1061 = vpack.c.b16 %v749, %v745
    %v1062 = vpack.c.b16 %v754, %v750
    %v1063 = vpack.c.b16 %v755, %v751
    %v1064 = vpack.c.b16 %v756, %v752
    %v1065 = vpack.c.b16 %v757, %v753
    %v1066 = vpack.c.b16 %v762, %v758
    %v1067 = vpack.c.b16 %v763, %v759
    %v1068 = vpack.c.b16 %v764, %v760
    %v1069 = vpack.c.b16 %v765, %v761
    %v1070 = vpack.c.b16 %v770, %v766
    %v1071 = vpack.c.b16 %v771, %v767
    %v1072 = vpack.c.b16 %v772, %v768
    %v1073 = vpack.c.b16 %v773, %v769
    %v1074 = vpack.c.b16 %v778, %v774
    %v1075 = vpack.c.b16 %v779, %v775
    %v1076 = vpack.c.b16 %v780, %v776
    %v1077 = vpack.c.b16 %v781, %v777
    %v1078 = vpack.c.b16 %v786, %v782
    %v1079 = vpack.c.b16 %v787, %v783
    %v1080 = vpack.c.b16 %v788, %v784
    %v1081 = vpack.c.b16 %v789, %v785
    %v1082 = vpack.c.b16 %v794, %v790
    %v1083 = vpack.c.b16 %v795, %v791
    %v1084 = vpack.c.b16 %v796, %v792
    %v1085 = vpack.c.b16 %v797, %v793
    %v1086 = vpack.c.b16 %v802, %v798
    %v1087 = vpack.c.b16 %v803, %v799
    %v1088 = vpack.c.b16 %v804, %v800
    %v1089 = vpack.c.b16 %v805, %v801
    %v1090 = vpack.c.b16 %v810, %v806
    %v1091 = vpack.c.b16 %v811, %v807
    %v1092 = vpack.c.b16 %v812, %v808
    %v1093 = vpack.c.b16 %v813, %v809
    %v1094 = vpack.c.b16 %v818, %v814
    %v1095 = vpack.c.b16 %v819, %v815
    %v1096 = vpack.c.b16 %v820, %v816
    %v1097 = vpack.c.b16 %v821, %v817
    %v1098 = vpack.c.b16 %v826, %v822
    %v1099 = vpack.c.b16 %v827, %v823
    %v1100 = vpack.c.b16 %v828, %v824
    %v1101 = vpack.c.b16 %v829, %v825
    %v1102 = vpack.c.b16 %v834, %v830
    %v1103 = vpack.c.b16 %v835, %v831
    %v1104 = vpack.c.b16 %v836, %v832
    %v1105 = vpack.c.b16 %v837, %v833
    %v1106 = vpack.c.b16 %v842, %v838
    %v1107 = vpack.c.b16 %v843, %v839
    %v1108 = vpack.c.b16 %v844, %v840
    %v1109 = vpack.c.b16 %v845, %v841
    %v1110 = vpack.c.b16 %v850, %v846
    %v1111 = vpack.c.b16 %v851, %v847
    %v1112 = vpack.c.b16 %v852, %v848
    %v1113 = vpack.c.b16 %v853, %v849
    %v1114 = vpack.c.b16 %v858, %v854
    %v1115 = vpack.c.b16 %v859, %v855
    %v1116 = vpack.c.b16 %v860, %v856
    %v1117 = vpack.c.b16 %v861, %v857
    %v1118 = vpack.c.b16 %v866, %v862
    %v1119 = vpack.c.b16 %v867, %v863
    %v1120 = vpack.c.b16 %v868, %v864
    %v1121 = vpack.c.b16 %v869, %v865
    %v1122 = vpack.c.b16 %v874, %v870
    %v1123 = vpack.c.b16 %v875, %v871
    %v1124 = vpack.c.b16 %v876, %v872
    %v1125 = vpack.c.b16 %v877, %v873
    %v1126 = vpack.c.b16 %v882, %v878
    %v1127 = vpack.c.b16 %v883, %v879
    %v1128 = vpack.c.b16 %v884, %v880
    %v1129 = vpack.c.b16 %v885, %v881
    %v1130 = vpack.c.b16 %v890, %v886
    %v1131 = vpack.c.b16 %v891, %v887
    %v1132 = vpack.c.b16 %v892, %v888
    %v1133 = vpack.c.b16 %v893, %v889
    %v1134 = vpack.c.b16 %v898, %v894
    %v1135 = vpack.c.b16 %v899, %v895
    %v1136 = vpack.c.b16 %v900, %v896
    %v1137 = vpack.c.b16 %v901, %v897
    %v1138 = vpack.c.b16 %v906, %v902
    %v1139 = vpack.c.b16 %v907, %v903
    %v1140 = vpack.c.b16 %v908, %v904
    %v1141 = vpack.c.b16 %v909, %v905
    %v1142 = vpack.c.b16 %v914, %v910
    %v1143 = vpack.c.b16 %v915, %v911
    %v1144 = vpack.c.b16 %v916, %v912
    %v1145 = vpack.c.b16 %v917, %v913
    %v1146 = vpack.c.b16 %v922, %v918
    %v1147 = vpack.c.b16 %v923, %v919
    %v1148 = vpack.c.b16 %v924, %v920
    %v1149 = vpack.c.b16 %v925, %v921
    %v1150 = vpack.c.b16 %v930, %v926
    %v1151 = vpack.c.b16 %v931, %v927
    %v1152 = vpack.c.b16 %v932, %v928
    %v1153 = vpack.c.b16 %v933, %v929
    %v1154 = vpack.c.b16 %v938, %v934
    %v1155 = vpack.c.b16 %v939, %v935
    %v1156 = vpack.c.b16 %v940, %v936
    %v1157 = vpack.c.b16 %v941, %v937
    %v1158 = vpack.c.b16 %v946, %v942
    %v1159 = vpack.c.b16 %v947, %v943
    %v1160 = vpack.c.b16 %v948, %v944
    %v1161 = vpack.c.b16 %v949, %v945
    %v1162 = vpack.c.b16 %v954, %v950
    %v1163 = vpack.c.b16 %v955, %v951
    %v1164 = vpack.c.b16 %v956, %v952
    %v1165 = vpack.c.b16 %v957, %v953
    %v1166 = vpack.c.b16 %v962, %v958
    %v1167 = vpack.c.b16 %v963, %v959
    %v1168 = vpack.c.b16 %v964, %v960
    %v1169 = vpack.c.b16 %v965, %v961
    %v1170 = vpack.c.b16 %v970, %v966
    %v1171 = vpack.c.b16 %v971, %v967
    %v1172 = vpack.c.b16 %v972, %v968
    %v1173 = vpack.c.b16 %v973, %v969
    %v1174 = vpack.c.b16 %v978, %v974
    %v1175 = vpack.c.b16 %v979, %v975
    %v1176 = vpack.c.b16 %v980, %v976
    %v1177 = vpack.c.b16 %v981, %v977
    %vm1374 = vcmask 130048
    %v1376 = vsel %vm1374, %v387, 0
    %1378 = vmatprep.subr.bf16.mxu0 %v1011
    %1379 = vmatpush1.bf16.msra.mxu0 %v1010
    %1380 = vmatprep.subr.bf16.mxu0 %v1007
    %1381 = vmatpush1.bf16.msra.mxu0 %v1006
    %1382 = vmatprep.subr.bf16.mxu0 %v1003
    %1383 = vmatpush1.bf16.msra.mxu0 %v1002
    %1384 = vmatprep.subr.bf16.mxu0 %v999
    %1385 = vmatpush1.bf16.msra.mxu0 %v998
    %1386 = vmatprep.subr.bf16.mxu0 %v995
    %1387 = vmatpush1.bf16.msra.mxu0 %v994
    %1388 = vmatprep.subr.bf16.mxu0 %v991
    %1389 = vmatpush1.bf16.msra.mxu0 %v990
    %1390 = vmatprep.subr.bf16.mxu0 %v987
    %1391 = vmatpush1.bf16.msra.mxu0 %v986
    %1392 = vmatprep.subr.bf16.mxu0 %v983
    %1393 = vmatpush1.bf16.msra.mxu0 %v982
    %1394 = vmatprep.subr.bf16.mxu0 %v1043
    %1395 = vmatpush2.bf16.msra.mxu0 %v1042
    %1396 = vmatprep.subr.bf16.mxu0 %v1039
    %1397 = vmatpush2.bf16.msra.mxu0 %v1038
    %1398 = vmatprep.subr.bf16.mxu0 %v1035
    %1399 = vmatpush2.bf16.msra.mxu0 %v1034
    %1400 = vmatprep.subr.bf16.mxu0 %v1031
    %1401 = vmatpush2.bf16.msra.mxu0 %v1030
    %1402 = vmatprep.subr.bf16.mxu0 %v1027
    %1403 = vmatpush2.bf16.msra.mxu0 %v1026
    %1404 = vmatprep.subr.bf16.mxu0 %v1023
    %1405 = vmatpush2.bf16.msra.mxu0 %v1022
    %1406 = vmatprep.subr.bf16.mxu0 %v1019
    %1407 = vmatpush2.bf16.msra.mxu0 %v1018
    %1408 = vmatprep.subr.bf16.mxu0 %v1015
    %1409 = vmatpush2.bf16.msra.mxu0 %v1014
    %1410 = vmatprep.mubr.bf16.mxu0 %v382
    %1411 = vmatmul.mubr.bf16.gmra.mxu0 %v381
    %v1412 = vpop.f32.mrf.mxu0
    %v1413 = vadd.f32 %v342, %v1412
    %v1414 = vpop.f32.mrf.mxu0
    %v1415 = vadd.f32 %v346, %v1414
    %v1416 = vpop.f32.mrf.mxu0
    %v1417 = vadd.f32 %v342, %v1416
    %v1418 = vpop.f32.mrf.mxu0
    %v1419 = vadd.f32 %v346, %v1418
    %1420 = vdwg.mxu0
    %1421 = vmatprep.subr.bf16.mxu0 %v1075
    %1422 = vmatpush1.bf16.msra.mxu0 %v1074
    %1423 = vmatprep.subr.bf16.mxu0 %v1071
    %1424 = vmatpush1.bf16.msra.mxu0 %v1070
    %1425 = vmatprep.subr.bf16.mxu0 %v1067
    %1426 = vmatpush1.bf16.msra.mxu0 %v1066
    %1427 = vmatprep.subr.bf16.mxu0 %v1063
    %1428 = vmatpush1.bf16.msra.mxu0 %v1062
    %1429 = vmatprep.subr.bf16.mxu0 %v1059
    %1430 = vmatpush1.bf16.msra.mxu0 %v1058
    %1431 = vmatprep.subr.bf16.mxu0 %v1055
    %1432 = vmatpush1.bf16.msra.mxu0 %v1054
    %1433 = vmatprep.subr.bf16.mxu0 %v1051
    %1434 = vmatpush1.bf16.msra.mxu0 %v1050
    %1435 = vmatprep.subr.bf16.mxu0 %v1047
    %1436 = vmatpush1.bf16.msra.mxu0 %v1046
    %1437 = vmatprep.subr.bf16.mxu0 %v1107
    %1438 = vmatpush2.bf16.msra.mxu0 %v1106
    %1439 = vmatprep.subr.bf16.mxu0 %v1103
    %1440 = vmatpush2.bf16.msra.mxu0 %v1102
    %1441 = vmatprep.subr.bf16.mxu0 %v1099
    %1442 = vmatpush2.bf16.msra.mxu0 %v1098
    %1443 = vmatprep.subr.bf16.mxu0 %v1095
    %1444 = vmatpush2.bf16.msra.mxu0 %v1094
    %1445 = vmatprep.subr.bf16.mxu0 %v1091
    %1446 = vmatpush2.bf16.msra.mxu0 %v1090
    %1447 = vmatprep.subr.bf16.mxu0 %v1087
    %1448 = vmatpush2.bf16.msra.mxu0 %v1086
    %1449 = vmatprep.subr.bf16.mxu0 %v1083
    %1450 = vmatpush2.bf16.msra.mxu0 %v1082
    %1451 = vmatprep.subr.bf16.mxu0 %v1079
    %1452 = vmatpush2.bf16.msra.mxu0 %v1078
    %1453 = vmatprep.mubr.bf16.mxu0 %v384
    %1454 = vmatmul.mubr.bf16.gmra.mxu0 %v383
    %v1455 = vpop.f32.mrf.mxu0
    %v1456 = vadd.f32 %v1413, %v1455
    %v1457 = vpop.f32.mrf.mxu0
    %v1458 = vadd.f32 %v1415, %v1457
    %v1459 = vpop.f32.mrf.mxu0
    %v1460 = vadd.f32 %v1417, %v1459
    %v1461 = vpop.f32.mrf.mxu0
    %v1462 = vadd.f32 %v1419, %v1461
    %1463 = vdwg.mxu0
    %1464 = vmatprep.subr.bf16.mxu0 %v1139
    %1465 = vmatpush1.bf16.msra.mxu0 %v1138
    %1466 = vmatprep.subr.bf16.mxu0 %v1135
    %1467 = vmatpush1.bf16.msra.mxu0 %v1134
    %1468 = vmatprep.subr.bf16.mxu0 %v1131
    %1469 = vmatpush1.bf16.msra.mxu0 %v1130
    %1470 = vmatprep.subr.bf16.mxu0 %v1127
    %1471 = vmatpush1.bf16.msra.mxu0 %v1126
    %1472 = vmatprep.subr.bf16.mxu0 %v1123
    %1473 = vmatpush1.bf16.msra.mxu0 %v1122
    %1474 = vmatprep.subr.bf16.mxu0 %v1119
    %1475 = vmatpush1.bf16.msra.mxu0 %v1118
    %1476 = vmatprep.subr.bf16.mxu0 %v1115
    %1477 = vmatpush1.bf16.msra.mxu0 %v1114
    %1478 = vmatprep.subr.bf16.mxu0 %v1111
    %1479 = vmatpush1.bf16.msra.mxu0 %v1110
    %1480 = vmatprep.subr.bf16.mxu0 %v1171
    %1481 = vmatpush2.bf16.msra.mxu0 %v1170
    %1482 = vmatprep.subr.bf16.mxu0 %v1167
    %1483 = vmatpush2.bf16.msra.mxu0 %v1166
    %1484 = vmatprep.subr.bf16.mxu0 %v1163
    %1485 = vmatpush2.bf16.msra.mxu0 %v1162
    %1486 = vmatprep.subr.bf16.mxu0 %v1159
    %1487 = vmatpush2.bf16.msra.mxu0 %v1158
    %1488 = vmatprep.subr.bf16.mxu0 %v1155
    %1489 = vmatpush2.bf16.msra.mxu0 %v1154
    %1490 = vmatprep.subr.bf16.mxu0 %v1151
    %1491 = vmatpush2.bf16.msra.mxu0 %v1150
    %1492 = vmatprep.subr.bf16.mxu0 %v1147
    %1493 = vmatpush2.bf16.msra.mxu0 %v1146
    %1494 = vmatprep.subr.bf16.mxu0 %v1143
    %1495 = vmatpush2.bf16.msra.mxu0 %v1142
    %1496 = vmatprep.mubr.bf16.mxu0 %v386
    %1497 = vmatmul.mubr.bf16.gmra.mxu0 %v385
    %v1498 = vpop.f32.mrf.mxu0
    %v1499 = vadd.f32 %v1456, %v1498
    %v1500 = vpop.f32.mrf.mxu0
    %v1501 = vadd.f32 %v1458, %v1500
    %v1502 = vpop.f32.mrf.mxu0
    %v1503 = vadd.f32 %v1460, %v1502
    %v1504 = vpop.f32.mrf.mxu0
    %v1505 = vadd.f32 %v1462, %v1504
    %1506 = vdwg.mxu0
    %1507 = vmatprep.subr.bf16.mxu0 0
    %1508 = vmatpush1.bf16.msra.mxu0 0
    %1509 = vmatprep.subr.bf16.mxu0 0
    %1510 = vmatpush1.bf16.msra.mxu0 0
    %1511 = vmatprep.subr.bf16.mxu0 0
    %1512 = vmatpush1.bf16.msra.mxu0 0
    %1513 = vmatprep.subr.bf16.mxu0 0
    %1514 = vmatpush1.bf16.msra.mxu0 0
    %1515 = vmatprep.subr.bf16.mxu0 0
    %1516 = vmatpush1.bf16.msra.mxu0 0
    %1517 = vmatprep.subr.bf16.mxu0 0
    %1518 = vmatpush1.bf16.msra.mxu0 0
    %1519 = vmatprep.subr.bf16.mxu0 0
    %1520 = vmatpush1.bf16.msra.mxu0 0
    %1521 = vmatprep.subr.bf16.mxu0 %v1175
    %1522 = vmatpush1.bf16.msra.mxu0 %v1174
    %1523 = vmatprep.subr.bf16.mxu0 0
    %1524 = vmatpush2.bf16.msra.mxu0 0
    %1525 = vmatprep.subr.bf16.mxu0 0
    %1526 = vmatpush2.bf16.msra.mxu0 0
    %1527 = vmatprep.subr.bf16.mxu0 0
    %1528 = vmatpush2.bf16.msra.mxu0 0
    %1529 = vmatprep.subr.bf16.mxu0 0
    %1530 = vmatpush2.bf16.msra.mxu0 0
    %1531 = vmatprep.subr.bf16.mxu0 0
    %1532 = vmatpush2.bf16.msra.mxu0 0
    %1533 = vmatprep.subr.bf16.mxu0 0
    %1534 = vmatpush2.bf16.msra.mxu0 0
    %1535 = vmatprep.subr.bf16.mxu0 0
    %1536 = vmatpush2.bf16.msra.mxu0 0
    %1537 = vmatprep.subr.bf16.mxu0 0
    %1538 = vmatpush2.bf16.msra.mxu0 0
    %1539 = vmatprep.mubr.bf16.mxu0 0
    %1540 = vmatmul.mubr.bf16.gmra.mxu0 %v1376
    %v1541 = vpop.f32.mrf.mxu0
    %v1542 = vadd.f32 %v1499, %v1541
    %v1543 = vpop.f32.mrf.mxu0
    %v1544 = vadd.f32 %v1501, %v1543
    %v1545 = vpop.f32.mrf.mxu0
    %v1546 = vadd.f32 %v1503, %v1545
    %v1547 = vpop.f32.mrf.mxu0
    %v1548 = vadd.f32 %v1505, %v1547
    %1549 = vdwg.mxu0
    %1550 = vmatprep.subr.bf16.mxu0 %v1013
    %1551 = vmatpush1.bf16.msra.mxu0 %v1012
    %1552 = vmatprep.subr.bf16.mxu0 %v1009
    %1553 = vmatpush1.bf16.msra.mxu0 %v1008
    %1554 = vmatprep.subr.bf16.mxu0 %v1005
    %1555 = vmatpush1.bf16.msra.mxu0 %v1004
    %1556 = vmatprep.subr.bf16.mxu0 %v1001
    %1557 = vmatpush1.bf16.msra.mxu0 %v1000
    %1558 = vmatprep.subr.bf16.mxu0 %v997
    %1559 = vmatpush1.bf16.msra.mxu0 %v996
    %1560 = vmatprep.subr.bf16.mxu0 %v993
    %1561 = vmatpush1.bf16.msra.mxu0 %v992
    %1562 = vmatprep.subr.bf16.mxu0 %v989
    %1563 = vmatpush1.bf16.msra.mxu0 %v988
    %1564 = vmatprep.subr.bf16.mxu0 %v985
    %1565 = vmatpush1.bf16.msra.mxu0 %v984
    %1566 = vmatprep.subr.bf16.mxu0 %v1045
    %1567 = vmatpush2.bf16.msra.mxu0 %v1044
    %1568 = vmatprep.subr.bf16.mxu0 %v1041
    %1569 = vmatpush2.bf16.msra.mxu0 %v1040
    %1570 = vmatprep.subr.bf16.mxu0 %v1037
    %1571 = vmatpush2.bf16.msra.mxu0 %v1036
    %1572 = vmatprep.subr.bf16.mxu0 %v1033
    %1573 = vmatpush2.bf16.msra.mxu0 %v1032
    %1574 = vmatprep.subr.bf16.mxu0 %v1029
    %1575 = vmatpush2.bf16.msra.mxu0 %v1028
    %1576 = vmatprep.subr.bf16.mxu0 %v1025
    %1577 = vmatpush2.bf16.msra.mxu0 %v1024
    %1578 = vmatprep.subr.bf16.mxu0 %v1021
    %1579 = vmatpush2.bf16.msra.mxu0 %v1020
    %1580 = vmatprep.subr.bf16.mxu0 %v1017
    %1581 = vmatpush2.bf16.msra.mxu0 %v1016
    %1582 = vmatprep.mubr.bf16.mxu0 %v382
    %1583 = vmatmul.mubr.bf16.gmra.mxu0 %v381
    %v1584 = vpop.f32.mrf.mxu0
    %v1585 = vadd.f32 %v350, %v1584
    %v1586 = vpop.f32.mrf.mxu0
    %v1587 = vadd.f32 %v354, %v1586
    %v1588 = vpop.f32.mrf.mxu0
    %v1589 = vadd.f32 %v350, %v1588
    %v1590 = vpop.f32.mrf.mxu0
    %v1591 = vadd.f32 %v354, %v1590
    %1592 = vdwg.mxu0
    %1593 = vmatprep.subr.bf16.mxu0 %v1077
    %1594 = vmatpush1.bf16.msra.mxu0 %v1076
    %1595 = vmatprep.subr.bf16.mxu0 %v1073
    %1596 = vmatpush1.bf16.msra.mxu0 %v1072
    %1597 = vmatprep.subr.bf16.mxu0 %v1069
    %1598 = vmatpush1.bf16.msra.mxu0 %v1068
    %1599 = vmatprep.subr.bf16.mxu0 %v1065
    %1600 = vmatpush1.bf16.msra.mxu0 %v1064
    %1601 = vmatprep.subr.bf16.mxu0 %v1061
    %1602 = vmatpush1.bf16.msra.mxu0 %v1060
    %1603 = vmatprep.subr.bf16.mxu0 %v1057
    %1604 = vmatpush1.bf16.msra.mxu0 %v1056
    %1605 = vmatprep.subr.bf16.mxu0 %v1053
    %1606 = vmatpush1.bf16.msra.mxu0 %v1052
    %1607 = vmatprep.subr.bf16.mxu0 %v1049
    %1608 = vmatpush1.bf16.msra.mxu0 %v1048
    %1609 = vmatprep.subr.bf16.mxu0 %v1109
    %1610 = vmatpush2.bf16.msra.mxu0 %v1108
    %1611 = vmatprep.subr.bf16.mxu0 %v1105
    %1612 = vmatpush2.bf16.msra.mxu0 %v1104
    %1613 = vmatprep.subr.bf16.mxu0 %v1101
    %1614 = vmatpush2.bf16.msra.mxu0 %v1100
    %1615 = vmatprep.subr.bf16.mxu0 %v1097
    %1616 = vmatpush2.bf16.msra.mxu0 %v1096
    %1617 = vmatprep.subr.bf16.mxu0 %v1093
    %1618 = vmatpush2.bf16.msra.mxu0 %v1092
    %1619 = vmatprep.subr.bf16.mxu0 %v1089
    %1620 = vmatpush2.bf16.msra.mxu0 %v1088
    %1621 = vmatprep.subr.bf16.mxu0 %v1085
    %1622 = vmatpush2.bf16.msra.mxu0 %v1084
    %1623 = vmatprep.subr.bf16.mxu0 %v1081
    %1624 = vmatpush2.bf16.msra.mxu0 %v1080
    %1625 = vmatprep.mubr.bf16.mxu0 %v384
    %1626 = vmatmul.mubr.bf16.gmra.mxu0 %v383
    %v1627 = vpop.f32.mrf.mxu0
    %v1628 = vadd.f32 %v1585, %v1627
    %v1629 = vpop.f32.mrf.mxu0
    %v1630 = vadd.f32 %v1587, %v1629
    %v1631 = vpop.f32.mrf.mxu0
    %v1632 = vadd.f32 %v1589, %v1631
    %v1633 = vpop.f32.mrf.mxu0
    %v1634 = vadd.f32 %v1591, %v1633
    %1635 = vdwg.mxu0
    %1636 = vmatprep.subr.bf16.mxu0 %v1141
    %1637 = vmatpush1.bf16.msra.mxu0 %v1140
    %1638 = vmatprep.subr.bf16.mxu0 %v1137
    %1639 = vmatpush1.bf16.msra.mxu0 %v1136
    %1640 = vmatprep.subr.bf16.mxu0 %v1133
    %1641 = vmatpush1.bf16.msra.mxu0 %v1132
    %1642 = vmatprep.subr.bf16.mxu0 %v1129
    %1643 = vmatpush1.bf16.msra.mxu0 %v1128
    %1644 = vmatprep.subr.bf16.mxu0 %v1125
    %1645 = vmatpush1.bf16.msra.mxu0 %v1124
    %1646 = vmatprep.subr.bf16.mxu0 %v1121
    %1647 = vmatpush1.bf16.msra.mxu0 %v1120
    %1648 = vmatprep.subr.bf16.mxu0 %v1117
    %1649 = vmatpush1.bf16.msra.mxu0 %v1116
    %1650 = vmatprep.subr.bf16.mxu0 %v1113
    %1651 = vmatpush1.bf16.msra.mxu0 %v1112
    %1652 = vmatprep.subr.bf16.mxu0 %v1173
    %1653 = vmatpush2.bf16.msra.mxu0 %v1172
    %1654 = vmatprep.subr.bf16.mxu0 %v1169
    %1655 = vmatpush2.bf16.msra.mxu0 %v1168
    %1656 = vmatprep.subr.bf16.mxu0 %v1165
    %1657 = vmatpush2.bf16.msra.mxu0 %v1164
    %1658 = vmatprep.subr.bf16.mxu0 %v1161
    %1659 = vmatpush2.bf16.msra.mxu0 %v1160
    %1660 = vmatprep.subr.bf16.mxu0 %v1157
    %1661 = vmatpush2.bf16.msra.mxu0 %v1156
    %1662 = vmatprep.subr.bf16.mxu0 %v1153
    %1663 = vmatpush2.bf16.msra.mxu0 %v1152
    %1664 = vmatprep.subr.bf16.mxu0 %v1149
    %1665 = vmatpush2.bf16.msra.mxu0 %v1148
    %1666 = vmatprep.subr.bf16.mxu0 %v1145
    %1667 = vmatpush2.bf16.msra.mxu0 %v1144
    %1668 = vmatprep.mubr.bf16.mxu0 %v386
    %1669 = vmatmul.mubr.bf16.gmra.mxu0 %v385
    %v1670 = vpop.f32.mrf.mxu0
    %v1671 = vadd.f32 %v1628, %v1670
    %v1672 = vpop.f32.mrf.mxu0
    %v1673 = vadd.f32 %v1630, %v1672
    %v1674 = vpop.f32.mrf.mxu0
    %v1675 = vadd.f32 %v1632, %v1674
    %v1676 = vpop.f32.mrf.mxu0
    %v1677 = vadd.f32 %v1634, %v1676
    %1678 = vdwg.mxu0
    %1679 = vmatprep.subr.bf16.mxu0 0
    %1680 = vmatpush1.bf16.msra.mxu0 0
    %1681 = vmatprep.subr.bf16.mxu0 0
    %1682 = vmatpush1.bf16.msra.mxu0 0
    %1683 = vmatprep.subr.bf16.mxu0 0
    %1684 = vmatpush1.bf16.msra.mxu0 0
    %1685 = vmatprep.subr.bf16.mxu0 0
    %1686 = vmatpush1.bf16.msra.mxu0 0
    %1687 = vmatprep.subr.bf16.mxu0 0
    %1688 = vmatpush1.bf16.msra.mxu0 0
    %1689 = vmatprep.subr.bf16.mxu0 0
    %1690 = vmatpush1.bf16.msra.mxu0 0
    %1691 = vmatprep.subr.bf16.mxu0 0
    %1692 = vmatpush1.bf16.msra.mxu0 0
    %1693 = vmatprep.subr.bf16.mxu0 %v1177
    %1694 = vmatpush1.bf16.msra.mxu0 %v1176
    %1695 = vmatprep.subr.bf16.mxu0 0
    %1696 = vmatpush2.bf16.msra.mxu0 0
    %1697 = vmatprep.subr.bf16.mxu0 0
    %1698 = vmatpush2.bf16.msra.mxu0 0
    %1699 = vmatprep.subr.bf16.mxu0 0
    %1700 = vmatpush2.bf16.msra.mxu0 0
    %1701 = vmatprep.subr.bf16.mxu0 0
    %1702 = vmatpush2.bf16.msra.mxu0 0
    %1703 = vmatprep.subr.bf16.mxu0 0
    %1704 = vmatpush2.bf16.msra.mxu0 0
    %1705 = vmatprep.subr.bf16.mxu0 0
    %1706 = vmatpush2.bf16.msra.mxu0 0
    %1707 = vmatprep.subr.bf16.mxu0 0
    %1708 = vmatpush2.bf16.msra.mxu0 0
    %1709 = vmatprep.subr.bf16.mxu0 0
    %1710 = vmatpush2.bf16.msra.mxu0 0
    %1711 = vmatprep.mubr.bf16.mxu0 0
    %1712 = vmatmul.mubr.bf16.gmra.mxu0 %v1376
    %v1713 = vpop.f32.mrf.mxu0
    %v1714 = vadd.f32 %v1671, %v1713
    %v1715 = vpop.f32.mrf.mxu0
    %v1716 = vadd.f32 %v1673, %v1715
    %v1717 = vpop.f32.mrf.mxu0
    %v1718 = vadd.f32 %v1675, %v1717
    %v1719 = vpop.f32.mrf.mxu0
    %v1720 = vadd.f32 %v1677, %v1719
    %1721 = vdwg.mxu0
    %v1722 = vmax.f32 %v1542, 0.0
    %v1723 = vmax.f32 %v1544, 0.0
    %v1724 = vmax.f32 %v1714, 0.0
    %v1725 = vmax.f32 %v1716, 0.0
    %v1726 = vmax.f32 %v1546, 0.0
    %v1727 = vmax.f32 %v1548, 0.0
    %v1728 = vmax.f32 %v1718, 0.0
    %v1729 = vmax.f32 %v1720, 0.0
    %v1730 = vpack.c.bf16 %v1726, %v1722
    %v1731 = vpack.c.bf16 %v1727, %v1723
    %v1732 = vpack.c.bf16 %v1728, %v1724
    %v1733 = vpack.c.bf16 %v1729, %v1725
    %v1734 = vld [vmem:[#allocation8] sm:$0xff]
    %v1735 = vld [vmem:[#allocation8 + $0x8] sm:$0xff]
    %v1736 = vld [vmem:[#allocation8 + $0x10] sm:$0xff]
    %v1737 = vld [vmem:[#allocation8 + $0x18] sm:$0xff]
    %v1738 = vld [vmem:[#allocation8 + $0x20] sm:$0xff]
    %v1739 = vld [vmem:[#allocation8 + $0x28] sm:$0xff]
    %v1740 = vld [vmem:[#allocation8 + $0x30] sm:$0xff]
    %v1741 = vld [vmem:[#allocation8 + $0x38] sm:$0xff]
    %v1742 = vld [vmem:[#allocation8 + $0x40] sm:$0xff]
    %v1743 = vld [vmem:[#allocation8 + $0x48] sm:$0xff]
    %v1744 = vld [vmem:[#allocation8 + $0x50] sm:$0xff]
    %v1745 = vld [vmem:[#allocation8 + $0x58] sm:$0xff]
    %v1746 = vld [vmem:[#allocation8 + $0x60] sm:$0xff]
    %v1747 = vld [vmem:[#allocation8 + $0x68] sm:$0xff]
    %v1748 = vld [vmem:[#allocation8 + $0x70] sm:$0xff]
    %v1749 = vld [vmem:[#allocation8 + $0x78] sm:$0xff]
    %v1750 = vld [vmem:[#allocation8 + $0x80] sm:$0xff]
    %v1751 = vld [vmem:[#allocation8 + $0x88] sm:$0xff]
    %v1752 = vld [vmem:[#allocation8 + $0x90] sm:$0xff]
    %v1753 = vld [vmem:[#allocation8 + $0x98] sm:$0xff]
    %v1754 = vld [vmem:[#allocation8 + $0xa0] sm:$0xff]
    %v1755 = vld [vmem:[#allocation8 + $0xa8] sm:$0xff]
    %v1756 = vld [vmem:[#allocation8 + $0xb0] sm:$0xff]
    %v1757 = vld [vmem:[#allocation8 + $0xb8] sm:$0xff]
    %v1758 = vld [vmem:[#allocation8 + $0xc0] sm:$0xff]
    %v1759 = vld [vmem:[#allocation8 + $0xc8] sm:$0xff]
    %v1760 = vld [vmem:[#allocation8 + $0xd0] sm:$0xff]
    %v1761 = vld [vmem:[#allocation8 + $0xd8] sm:$0xff]
    %v1762 = vld [vmem:[#allocation8 + $0xe0] sm:$0xff]
    %v1763 = vld [vmem:[#allocation8 + $0xe8] sm:$0xff]
    %v1764 = vld [vmem:[#allocation8 + $0xf0] sm:$0xff]
    %v1765 = vld [vmem:[#allocation8 + $0xf8] sm:$0xff]
    %v1766 = vld [vmem:[#allocation8 + $0x100] sm:$0xff]
    %v1767 = vld [vmem:[#allocation8 + $0x108] sm:$0xff]
    %v1768 = vld [vmem:[#allocation8 + $0x110] sm:$0xff]
    %v1769 = vld [vmem:[#allocation8 + $0x118] sm:$0xff]
    %v1770 = vld [vmem:[#allocation8 + $0x120] sm:$0xff]
    %v1771 = vld [vmem:[#allocation8 + $0x128] sm:$0xff]
    %v1772 = vld [vmem:[#allocation8 + $0x130] sm:$0xff]
    %v1773 = vld [vmem:[#allocation8 + $0x138] sm:$0xff]
    %v1774 = vld [vmem:[#allocation8 + $0x140] sm:$0xff]
    %v1775 = vld [vmem:[#allocation8 + $0x148] sm:$0xff]
    %v1776 = vld [vmem:[#allocation8 + $0x150] sm:$0xff]
    %v1777 = vld [vmem:[#allocation8 + $0x158] sm:$0xff]
    %v1778 = vld [vmem:[#allocation8 + $0x160] sm:$0xff]
    %v1779 = vld [vmem:[#allocation8 + $0x168] sm:$0xff]
    %v1780 = vld [vmem:[#allocation8 + $0x170] sm:$0xff]
    %v1781 = vld [vmem:[#allocation8 + $0x178] sm:$0xff]
    %v1782 = vld [vmem:[#allocation8 + $0x180] sm:$0xff]
    %v1783 = vld [vmem:[#allocation8 + $0x188] sm:$0xff]
    %v1784 = vld [vmem:[#allocation8 + $0x190] sm:$0xff]
    %v1785 = vld [vmem:[#allocation8 + $0x198] sm:$0xff]
    %v1786 = vld [vmem:[#allocation8 + $0x1a0] sm:$0xff]
    %v1787 = vld [vmem:[#allocation8 + $0x1a8] sm:$0xff]
    %v1788 = vld [vmem:[#allocation8 + $0x1b0] sm:$0xff]
    %v1789 = vld [vmem:[#allocation8 + $0x1b8] sm:$0xff]
    %v1790 = vld [vmem:[#allocation8 + $0x1c0] sm:$0xff]
    %v1791 = vld [vmem:[#allocation8 + $0x1c8] sm:$0xff]
    %v1792 = vld [vmem:[#allocation8 + $0x1d0] sm:$0xff]
    %v1793 = vld [vmem:[#allocation8 + $0x1d8] sm:$0xff]
    %v1794 = vld [vmem:[#allocation8 + $0x1e0] sm:$0xff]
    %v1795 = vld [vmem:[#allocation8 + $0x1e8] sm:$0xff]
    %v1796 = vld [vmem:[#allocation8 + $0x1f0] sm:$0xff]
    %v1797 = vld [vmem:[#allocation8 + $0x1f8] sm:$0xff]
    %v1798 = vld [vmem:[%s5] sm:$0x3]
    %v1800 = vlaneseq
    %v1801 = vshrl.u32 %v1800, 7
    %v1802 = vsub.s32 0, %v1801
    %v1803 = vrot.slane %v1798, %v1802
    %v1804 = vlaneseq
    %v1805 = vshrl.u32 %v1804, 7
    %v1806 = vsub.s32 1, %v1805
    %v1807 = vrot.slane %v1798, %v1806
    %v1874 = vunpack.c.l.b16 %v1734
    %v1875 = vunpack.c.h.b16 %v1734
    %v1876 = vunpack.c.l.b16 %v1735
    %v1877 = vunpack.c.h.b16 %v1735
    %v1878 = vunpack.c.l.b16 %v1736
    %v1879 = vunpack.c.h.b16 %v1736
    %v1880 = vunpack.c.l.b16 %v1737
    %v1881 = vunpack.c.h.b16 %v1737
    %v1882 = vunpack.c.l.b16 %v1738
    %v1883 = vunpack.c.h.b16 %v1738
    %v1884 = vunpack.c.l.b16 %v1739
    %v1885 = vunpack.c.h.b16 %v1739
    %v1886 = vunpack.c.l.b16 %v1740
    %v1887 = vunpack.c.h.b16 %v1740
    %v1888 = vunpack.c.l.b16 %v1741
    %v1889 = vunpack.c.h.b16 %v1741
    %v1890 = vunpack.c.l.b16 %v1742
    %v1891 = vunpack.c.h.b16 %v1742
    %v1892 = vunpack.c.l.b16 %v1743
    %v1893 = vunpack.c.h.b16 %v1743
    %v1894 = vunpack.c.l.b16 %v1744
    %v1895 = vunpack.c.h.b16 %v1744
    %v1896 = vunpack.c.l.b16 %v1745
    %v1897 = vunpack.c.h.b16 %v1745
    %v1898 = vunpack.c.l.b16 %v1746
    %v1899 = vunpack.c.h.b16 %v1746
    %v1900 = vunpack.c.l.b16 %v1747
    %v1901 = vunpack.c.h.b16 %v1747
    %v1902 = vunpack.c.l.b16 %v1748
    %v1903 = vunpack.c.h.b16 %v1748
    %v1904 = vunpack.c.l.b16 %v1749
    %v1905 = vunpack.c.h.b16 %v1749
    %v1906 = vunpack.c.l.b16 %v1750
    %v1907 = vunpack.c.h.b16 %v1750
    %v1908 = vunpack.c.l.b16 %v1751
    %v1909 = vunpack.c.h.b16 %v1751
    %v1910 = vunpack.c.l.b16 %v1752
    %v1911 = vunpack.c.h.b16 %v1752
    %v1912 = vunpack.c.l.b16 %v1753
    %v1913 = vunpack.c.h.b16 %v1753
    %v1914 = vunpack.c.l.b16 %v1754
    %v1915 = vunpack.c.h.b16 %v1754
    %v1916 = vunpack.c.l.b16 %v1755
    %v1917 = vunpack.c.h.b16 %v1755
    %v1918 = vunpack.c.l.b16 %v1756
    %v1919 = vunpack.c.h.b16 %v1756
    %v1920 = vunpack.c.l.b16 %v1757
    %v1921 = vunpack.c.h.b16 %v1757
    %v1922 = vunpack.c.l.b16 %v1758
    %v1923 = vunpack.c.h.b16 %v1758
    %v1924 = vunpack.c.l.b16 %v1759
    %v1925 = vunpack.c.h.b16 %v1759
    %v1926 = vunpack.c.l.b16 %v1760
    %v1927 = vunpack.c.h.b16 %v1760
    %v1928 = vunpack.c.l.b16 %v1761
    %v1929 = vunpack.c.h.b16 %v1761
    %v1930 = vunpack.c.l.b16 %v1762
    %v1931 = vunpack.c.h.b16 %v1762
    %v1932 = vunpack.c.l.b16 %v1763
    %v1933 = vunpack.c.h.b16 %v1763
    %v1934 = vunpack.c.l.b16 %v1764
    %v1935 = vunpack.c.h.b16 %v1764
    %v1936 = vunpack.c.l.b16 %v1765
    %v1937 = vunpack.c.h.b16 %v1765
    %v1938 = vunpack.c.l.b16 %v1766
    %v1939 = vunpack.c.h.b16 %v1766
    %v1940 = vunpack.c.l.b16 %v1767
    %v1941 = vunpack.c.h.b16 %v1767
    %v1942 = vunpack.c.l.b16 %v1768
    %v1943 = vunpack.c.h.b16 %v1768
    %v1944 = vunpack.c.l.b16 %v1769
    %v1945 = vunpack.c.h.b16 %v1769
    %v1946 = vunpack.c.l.b16 %v1770
    %v1947 = vunpack.c.h.b16 %v1770
    %v1948 = vunpack.c.l.b16 %v1771
    %v1949 = vunpack.c.h.b16 %v1771
    %v1950 = vunpack.c.l.b16 %v1772
    %v1951 = vunpack.c.h.b16 %v1772
    %v1952 = vunpack.c.l.b16 %v1773
    %v1953 = vunpack.c.h.b16 %v1773
    %v1954 = vunpack.c.l.b16 %v1774
    %v1955 = vunpack.c.h.b16 %v1774
    %v1956 = vunpack.c.l.b16 %v1775
    %v1957 = vunpack.c.h.b16 %v1775
    %v1958 = vunpack.c.l.b16 %v1776
    %v1959 = vunpack.c.h.b16 %v1776
    %v1960 = vunpack.c.l.b16 %v1777
    %v1961 = vunpack.c.h.b16 %v1777
    %v1962 = vunpack.c.l.b16 %v1778
    %v1963 = vunpack.c.h.b16 %v1778
    %v1964 = vunpack.c.l.b16 %v1779
    %v1965 = vunpack.c.h.b16 %v1779
    %v1966 = vunpack.c.l.b16 %v1780
    %v1967 = vunpack.c.h.b16 %v1780
    %v1968 = vunpack.c.l.b16 %v1781
    %v1969 = vunpack.c.h.b16 %v1781
    %v1970 = vunpack.c.l.b16 %v1782
    %v1971 = vunpack.c.h.b16 %v1782
    %v1972 = vunpack.c.l.b16 %v1783
    %v1973 = vunpack.c.h.b16 %v1783
    %v1974 = vunpack.c.l.b16 %v1784
    %v1975 = vunpack.c.h.b16 %v1784
    %v1976 = vunpack.c.l.b16 %v1785
    %v1977 = vunpack.c.h.b16 %v1785
    %v1978 = vunpack.c.l.b16 %v1786
    %v1979 = vunpack.c.h.b16 %v1786
    %v1980 = vunpack.c.l.b16 %v1787
    %v1981 = vunpack.c.h.b16 %v1787
    %v1982 = vunpack.c.l.b16 %v1788
    %v1983 = vunpack.c.h.b16 %v1788
    %v1984 = vunpack.c.l.b16 %v1789
    %v1985 = vunpack.c.h.b16 %v1789
    %v1986 = vunpack.c.l.b16 %v1790
    %v1987 = vunpack.c.h.b16 %v1790
    %v1988 = vunpack.c.l.b16 %v1791
    %v1989 = vunpack.c.h.b16 %v1791
    %v1990 = vunpack.c.l.b16 %v1792
    %v1991 = vunpack.c.h.b16 %v1792
    %v1992 = vunpack.c.l.b16 %v1793
    %v1993 = vunpack.c.h.b16 %v1793
    %v1994 = vunpack.c.l.b16 %v1794
    %v1995 = vunpack.c.h.b16 %v1794
    %v1996 = vunpack.c.l.b16 %v1795
    %v1997 = vunpack.c.h.b16 %v1795
    %v1998 = vunpack.c.l.b16 %v1796
    %v1999 = vunpack.c.h.b16 %v1796
    %v2000 = vunpack.c.l.b16 %v1797
    %v2001 = vunpack.c.h.b16 %v1797
    %v2002 = vpack.c.b16 %v1876, %v1874
    %v2003 = vpack.c.b16 %v1877, %v1875
    %v2004 = vpack.c.b16 %v1880, %v1878
    %v2005 = vpack.c.b16 %v1881, %v1879
    %v2006 = vpack.c.b16 %v1884, %v1882
    %v2007 = vpack.c.b16 %v1885, %v1883
    %v2008 = vpack.c.b16 %v1888, %v1886
    %v2009 = vpack.c.b16 %v1889, %v1887
    %v2010 = vpack.c.b16 %v1892, %v1890
    %v2011 = vpack.c.b16 %v1893, %v1891
    %v2012 = vpack.c.b16 %v1896, %v1894
    %v2013 = vpack.c.b16 %v1897, %v1895
    %v2014 = vpack.c.b16 %v1900, %v1898
    %v2015 = vpack.c.b16 %v1901, %v1899
    %v2016 = vpack.c.b16 %v1904, %v1902
    %v2017 = vpack.c.b16 %v1905, %v1903
    %v2018 = vpack.c.b16 %v1908, %v1906
    %v2019 = vpack.c.b16 %v1909, %v1907
    %v2020 = vpack.c.b16 %v1912, %v1910
    %v2021 = vpack.c.b16 %v1913, %v1911
    %v2022 = vpack.c.b16 %v1916, %v1914
    %v2023 = vpack.c.b16 %v1917, %v1915
    %v2024 = vpack.c.b16 %v1920, %v1918
    %v2025 = vpack.c.b16 %v1921, %v1919
    %v2026 = vpack.c.b16 %v1924, %v1922
    %v2027 = vpack.c.b16 %v1925, %v1923
    %v2028 = vpack.c.b16 %v1928, %v1926
    %v2029 = vpack.c.b16 %v1929, %v1927
    %v2030 = vpack.c.b16 %v1932, %v1930
    %v2031 = vpack.c.b16 %v1933, %v1931
    %v2032 = vpack.c.b16 %v1936, %v1934
    %v2033 = vpack.c.b16 %v1937, %v1935
    %v2034 = vpack.c.b16 %v1940, %v1938
    %v2035 = vpack.c.b16 %v1941, %v1939
    %v2036 = vpack.c.b16 %v1944, %v1942
    %v2037 = vpack.c.b16 %v1945, %v1943
    %v2038 = vpack.c.b16 %v1948, %v1946
    %v2039 = vpack.c.b16 %v1949, %v1947
    %v2040 = vpack.c.b16 %v1952, %v1950
    %v2041 = vpack.c.b16 %v1953, %v1951
    %v2042 = vpack.c.b16 %v1956, %v1954
    %v2043 = vpack.c.b16 %v1957, %v1955
    %v2044 = vpack.c.b16 %v1960, %v1958
    %v2045 = vpack.c.b16 %v1961, %v1959
    %v2046 = vpack.c.b16 %v1964, %v1962
    %v2047 = vpack.c.b16 %v1965, %v1963
    %v2048 = vpack.c.b16 %v1968, %v1966
    %v2049 = vpack.c.b16 %v1969, %v1967
    %v2050 = vpack.c.b16 %v1972, %v1970
    %v2051 = vpack.c.b16 %v1973, %v1971
    %v2052 = vpack.c.b16 %v1976, %v1974
    %v2053 = vpack.c.b16 %v1977, %v1975
    %v2054 = vpack.c.b16 %v1980, %v1978
    %v2055 = vpack.c.b16 %v1981, %v1979
    %v2056 = vpack.c.b16 %v1984, %v1982
    %v2057 = vpack.c.b16 %v1985, %v1983
    %v2058 = vpack.c.b16 %v1988, %v1986
    %v2059 = vpack.c.b16 %v1989, %v1987
    %v2060 = vpack.c.b16 %v1992, %v1990
    %v2061 = vpack.c.b16 %v1993, %v1991
    %v2062 = vpack.c.b16 %v1996, %v1994
    %v2063 = vpack.c.b16 %v1997, %v1995
    %v2064 = vpack.c.b16 %v2000, %v1998
    %v2065 = vpack.c.b16 %v2001, %v1999
    %2130 = vmatprep.subr.bf16.mxu0 %v2017
    %2131 = vmatpush1.bf16.msra.mxu0 %v2016
    %2132 = vmatprep.subr.bf16.mxu0 %v2015
    %2133 = vmatpush1.bf16.msra.mxu0 %v2014
    %2134 = vmatprep.subr.bf16.mxu0 %v2013
    %2135 = vmatpush1.bf16.msra.mxu0 %v2012
    %2136 = vmatprep.subr.bf16.mxu0 %v2011
    %2137 = vmatpush1.bf16.msra.mxu0 %v2010
    %2138 = vmatprep.subr.bf16.mxu0 %v2009
    %2139 = vmatpush1.bf16.msra.mxu0 %v2008
    %2140 = vmatprep.subr.bf16.mxu0 %v2007
    %2141 = vmatpush1.bf16.msra.mxu0 %v2006
    %2142 = vmatprep.subr.bf16.mxu0 %v2005
    %2143 = vmatpush1.bf16.msra.mxu0 %v2004
    %2144 = vmatprep.subr.bf16.mxu0 %v2003
    %2145 = vmatpush1.bf16.msra.mxu0 %v2002
    %2146 = vmatprep.subr.bf16.mxu0 %v2033
    %2147 = vmatpush2.bf16.msra.mxu0 %v2032
    %2148 = vmatprep.subr.bf16.mxu0 %v2031
    %2149 = vmatpush2.bf16.msra.mxu0 %v2030
    %2150 = vmatprep.subr.bf16.mxu0 %v2029
    %2151 = vmatpush2.bf16.msra.mxu0 %v2028
    %2152 = vmatprep.subr.bf16.mxu0 %v2027
    %2153 = vmatpush2.bf16.msra.mxu0 %v2026
    %2154 = vmatprep.subr.bf16.mxu0 %v2025
    %2155 = vmatpush2.bf16.msra.mxu0 %v2024
    %2156 = vmatprep.subr.bf16.mxu0 %v2023
    %2157 = vmatpush2.bf16.msra.mxu0 %v2022
    %2158 = vmatprep.subr.bf16.mxu0 %v2021
    %2159 = vmatpush2.bf16.msra.mxu0 %v2020
    %2160 = vmatprep.subr.bf16.mxu0 %v2019
    %2161 = vmatpush2.bf16.msra.mxu0 %v2018
    %2162 = vmatprep.mubr.bf16.mxu0 %v1731
    %2163 = vmatmul.mubr.bf16.gmra.mxu0 %v1730
    %v2164 = vpop.f32.mrf.mxu0
    %v2165 = vadd.f32 %v1803, %v2164
    %v2166 = vpop.f32.mrf.mxu0
    %v2167 = vadd.f32 %v1807, %v2166
    %v2168 = vpop.f32.mrf.mxu0
    %v2169 = vadd.f32 %v1803, %v2168
    %v2170 = vpop.f32.mrf.mxu0
    %v2171 = vadd.f32 %v1807, %v2170
    %2172 = vdwg.mxu0
    %2173 = vmatprep.subr.bf16.mxu0 %v2049
    %2174 = vmatpush1.bf16.msra.mxu0 %v2048
    %2175 = vmatprep.subr.bf16.mxu0 %v2047
    %2176 = vmatpush1.bf16.msra.mxu0 %v2046
    %2177 = vmatprep.subr.bf16.mxu0 %v2045
    %2178 = vmatpush1.bf16.msra.mxu0 %v2044
    %2179 = vmatprep.subr.bf16.mxu0 %v2043
    %2180 = vmatpush1.bf16.msra.mxu0 %v2042
    %2181 = vmatprep.subr.bf16.mxu0 %v2041
    %2182 = vmatpush1.bf16.msra.mxu0 %v2040
    %2183 = vmatprep.subr.bf16.mxu0 %v2039
    %2184 = vmatpush1.bf16.msra.mxu0 %v2038
    %2185 = vmatprep.subr.bf16.mxu0 %v2037
    %2186 = vmatpush1.bf16.msra.mxu0 %v2036
    %2187 = vmatprep.subr.bf16.mxu0 %v2035
    %2188 = vmatpush1.bf16.msra.mxu0 %v2034
    %2189 = vmatprep.subr.bf16.mxu0 %v2065
    %2190 = vmatpush2.bf16.msra.mxu0 %v2064
    %2191 = vmatprep.subr.bf16.mxu0 %v2063
    %2192 = vmatpush2.bf16.msra.mxu0 %v2062
    %2193 = vmatprep.subr.bf16.mxu0 %v2061
    %2194 = vmatpush2.bf16.msra.mxu0 %v2060
    %2195 = vmatprep.subr.bf16.mxu0 %v2059
    %2196 = vmatpush2.bf16.msra.mxu0 %v2058
    %2197 = vmatprep.subr.bf16.mxu0 %v2057
    %2198 = vmatpush2.bf16.msra.mxu0 %v2056
    %2199 = vmatprep.subr.bf16.mxu0 %v2055
    %2200 = vmatpush2.bf16.msra.mxu0 %v2054
    %2201 = vmatprep.subr.bf16.mxu0 %v2053
    %2202 = vmatpush2.bf16.msra.mxu0 %v2052
    %2203 = vmatprep.subr.bf16.mxu0 %v2051
    %2204 = vmatpush2.bf16.msra.mxu0 %v2050
    %2205 = vmatprep.mubr.bf16.mxu0 %v1733
    %2206 = vmatmul.mubr.bf16.gmra.mxu0 %v1732
    %v2207 = vpop.f32.mrf.mxu0
    %v2208 = vadd.f32 %v2165, %v2207
    %v2209 = vpop.f32.mrf.mxu0
    %v2210 = vadd.f32 %v2167, %v2209
    %v2211 = vpop.f32.mrf.mxu0
    %v2212 = vadd.f32 %v2169, %v2211
    %v2213 = vpop.f32.mrf.mxu0
    %v2214 = vadd.f32 %v2171, %v2213
    %2215 = vdwg.mxu0
    %2216 = vst [vmem:[#allocation15] sm:$0xff] %v2208
    %2217 = vst [vmem:[#allocation15 + $0x8] sm:$0xff] %v2210
    %2218 = vst [vmem:[#allocation15 + $0x10] sm:$0xff] %v2212
    %2219 = vst [vmem:[#allocation15 + $0x18] sm:$0xff] %v2214
    %v2220 = vmul.f32 %v2210, 0.5
    %v2221 = vmul.f32 %v2214, 0.5
    %v2222 = vmul.f32 %v2220, 1.442695
    %v2223 = vpow.pop %v2222
    %v2224 = vmul.f32 %v2221, 1.442695
    %v2225 = vpow.pop %v2224
    %v2226 = vld [vmem:[#allocation5] sm:$0xff]
    %v2227 = vld [vmem:[#allocation5 + $0x8] sm:$0xff]
    %v2228 = vmul.f32 %v2226, %v2223
    %v2229 = vmul.f32 %v2227, %v2225
    %v2230 = vadd.f32 %v2208, %v2228
    %v2231 = vadd.f32 %v2212, %v2229
    %v2232 = vpack.c.bf16 %v2231, %v2230
    %v2233 = vld [vmem:[#allocation10] sm:$0xff]
    %v2234 = vld [vmem:[#allocation10 + $0x8] sm:$0xff]
    %v2235 = vld [vmem:[#allocation10 + $0x10] sm:$0xff]
    %v2236 = vld [vmem:[#allocation10 + $0x18] sm:$0xff]
    %v2237 = vld [vmem:[#allocation10 + $0x20] sm:$0xff]
    %v2238 = vld [vmem:[#allocation10 + $0x28] sm:$0xff]
    %v2239 = vld [vmem:[#allocation10 + $0x30] sm:$0xff]
    %v2240 = vld [vmem:[#allocation10 + $0x38] sm:$0xff]
    %v2241 = vld [vmem:[#allocation10 + $0x40] sm:$0xff]
    %v2242 = vld [vmem:[#allocation10 + $0x48] sm:$0xff]
    %v2243 = vld [vmem:[#allocation10 + $0x50] sm:$0xff]
    %v2244 = vld [vmem:[#allocation10 + $0x58] sm:$0xff]
    %v2245 = vld [vmem:[#allocation10 + $0x60] sm:$0xff]
    %v2246 = vld [vmem:[#allocation10 + $0x68] sm:$0xff]
    %v2247 = vld [vmem:[#allocation10 + $0x70] sm:$0xff]
    %v2248 = vld [vmem:[#allocation10 + $0x78] sm:$0xff]
    %v2249 = vld [vmem:[#allocation10 + $0x80] sm:$0xff]
    %v2250 = vld [vmem:[#allocation10 + $0x88] sm:$0xff]
    %v2251 = vld [vmem:[#allocation10 + $0x90] sm:$0xff]
    %v2252 = vld [vmem:[#allocation10 + $0x98] sm:$0xff]
    %v2253 = vld [vmem:[#allocation10 + $0xa0] sm:$0xff]
    %v2254 = vld [vmem:[#allocation10 + $0xa8] sm:$0xff]
    %v2255 = vld [vmem:[#allocation10 + $0xb0] sm:$0xff]
    %v2256 = vld [vmem:[#allocation10 + $0xb8] sm:$0xff]
    %v2257 = vld [vmem:[#allocation10 + $0xc0] sm:$0xff]
    %v2258 = vld [vmem:[#allocation10 + $0xc8] sm:$0xff]
    %v2259 = vld [vmem:[#allocation10 + $0xd0] sm:$0xff]
    %v2260 = vld [vmem:[#allocation10 + $0xd8] sm:$0xff]
    %v2261 = vld [vmem:[#allocation10 + $0xe0] sm:$0xff]
    %v2262 = vld [vmem:[#allocation10 + $0xe8] sm:$0xff]
    %v2263 = vld [vmem:[#allocation10 + $0xf0] sm:$0xff]
    %v2264 = vld [vmem:[#allocation10 + $0xf8] sm:$0xff]
    %v2265 = vld [vmem:[#allocation11] sm:$0xf]
    %v2267 = vlaneseq
    %v2268 = vshrl.u32 %v2267, 7
    %v2269 = vsub.s32 0, %v2268
    %v2270 = vrot.slane %v2265, %v2269
    %v2271 = vlaneseq
    %v2272 = vshrl.u32 %v2271, 7
    %v2273 = vsub.s32 1, %v2272
    %v2274 = vrot.slane %v2265, %v2273
    %v2275 = vlaneseq
    %v2276 = vshrl.u32 %v2275, 7
    %v2277 = vsub.s32 2, %v2276
    %v2278 = vrot.slane %v2265, %v2277
    %v2279 = vlaneseq
    %v2280 = vshrl.u32 %v2279, 7
    %v2281 = vsub.s32 3, %v2280
    %v2282 = vrot.slane %v2265, %v2281
    %v2319 = vunpack.c.l.b16 %v2233
    %v2320 = vunpack.c.h.b16 %v2233
    %v2321 = vunpack.c.l.b16 %v2234
    %v2322 = vunpack.c.h.b16 %v2234
    %v2323 = vunpack.c.l.b16 %v2235
    %v2324 = vunpack.c.h.b16 %v2235
    %v2325 = vunpack.c.l.b16 %v2236
    %v2326 = vunpack.c.h.b16 %v2236
    %v2327 = vunpack.c.l.b16 %v2237
    %v2328 = vunpack.c.h.b16 %v2237
    %v2329 = vunpack.c.l.b16 %v2238
    %v2330 = vunpack.c.h.b16 %v2238
    %v2331 = vunpack.c.l.b16 %v2239
    %v2332 = vunpack.c.h.b16 %v2239
    %v2333 = vunpack.c.l.b16 %v2240
    %v2334 = vunpack.c.h.b16 %v2240
    %v2335 = vunpack.c.l.b16 %v2241
    %v2336 = vunpack.c.h.b16 %v2241
    %v2337 = vunpack.c.l.b16 %v2242
    %v2338 = vunpack.c.h.b16 %v2242
    %v2339 = vunpack.c.l.b16 %v2243
    %v2340 = vunpack.c.h.b16 %v2243
    %v2341 = vunpack.c.l.b16 %v2244
    %v2342 = vunpack.c.h.b16 %v2244
    %v2343 = vunpack.c.l.b16 %v2245
    %v2344 = vunpack.c.h.b16 %v2245
    %v2345 = vunpack.c.l.b16 %v2246
    %v2346 = vunpack.c.h.b16 %v2246
    %v2347 = vunpack.c.l.b16 %v2247
    %v2348 = vunpack.c.h.b16 %v2247
    %v2349 = vunpack.c.l.b16 %v2248
    %v2350 = vunpack.c.h.b16 %v2248
    %v2351 = vunpack.c.l.b16 %v2249
    %v2352 = vunpack.c.h.b16 %v2249
    %v2353 = vunpack.c.l.b16 %v2250
    %v2354 = vunpack.c.h.b16 %v2250
    %v2355 = vunpack.c.l.b16 %v2251
    %v2356 = vunpack.c.h.b16 %v2251
    %v2357 = vunpack.c.l.b16 %v2252
    %v2358 = vunpack.c.h.b16 %v2252
    %v2359 = vunpack.c.l.b16 %v2253
    %v2360 = vunpack.c.h.b16 %v2253
    %v2361 = vunpack.c.l.b16 %v2254
    %v2362 = vunpack.c.h.b16 %v2254
    %v2363 = vunpack.c.l.b16 %v2255
    %v2364 = vunpack.c.h.b16 %v2255
    %v2365 = vunpack.c.l.b16 %v2256
    %v2366 = vunpack.c.h.b16 %v2256
    %v2367 = vunpack.c.l.b16 %v2257
    %v2368 = vunpack.c.h.b16 %v2257
    %v2369 = vunpack.c.l.b16 %v2258
    %v2370 = vunpack.c.h.b16 %v2258
    %v2371 = vunpack.c.l.b16 %v2259
    %v2372 = vunpack.c.h.b16 %v2259
    %v2373 = vunpack.c.l.b16 %v2260
    %v2374 = vunpack.c.h.b16 %v2260
    %v2375 = vunpack.c.l.b16 %v2261
    %v2376 = vunpack.c.h.b16 %v2261
    %v2377 = vunpack.c.l.b16 %v2262
    %v2378 = vunpack.c.h.b16 %v2262
    %v2379 = vunpack.c.l.b16 %v2263
    %v2380 = vunpack.c.h.b16 %v2263
    %v2381 = vunpack.c.l.b16 %v2264
    %v2382 = vunpack.c.h.b16 %v2264
    %v2383 = vpack.c.b16 %v2323, %v2319
    %v2384 = vpack.c.b16 %v2324, %v2320
    %v2385 = vpack.c.b16 %v2325, %v2321
    %v2386 = vpack.c.b16 %v2326, %v2322
    %v2387 = vpack.c.b16 %v2331, %v2327
    %v2388 = vpack.c.b16 %v2332, %v2328
    %v2389 = vpack.c.b16 %v2333, %v2329
    %v2390 = vpack.c.b16 %v2334, %v2330
    %v2391 = vpack.c.b16 %v2339, %v2335
    %v2392 = vpack.c.b16 %v2340, %v2336
    %v2393 = vpack.c.b16 %v2341, %v2337
    %v2394 = vpack.c.b16 %v2342, %v2338
    %v2395 = vpack.c.b16 %v2347, %v2343
    %v2396 = vpack.c.b16 %v2348, %v2344
    %v2397 = vpack.c.b16 %v2349, %v2345
    %v2398 = vpack.c.b16 %v2350, %v2346
    %v2399 = vpack.c.b16 %v2355, %v2351
    %v2400 = vpack.c.b16 %v2356, %v2352
    %v2401 = vpack.c.b16 %v2357, %v2353
    %v2402 = vpack.c.b16 %v2358, %v2354
    %v2403 = vpack.c.b16 %v2363, %v2359
    %v2404 = vpack.c.b16 %v2364, %v2360
    %v2405 = vpack.c.b16 %v2365, %v2361
    %v2406 = vpack.c.b16 %v2366, %v2362
    %v2407 = vpack.c.b16 %v2371, %v2367
    %v2408 = vpack.c.b16 %v2372, %v2368
    %v2409 = vpack.c.b16 %v2373, %v2369
    %v2410 = vpack.c.b16 %v2374, %v2370
    %v2411 = vpack.c.b16 %v2379, %v2375
    %v2412 = vpack.c.b16 %v2380, %v2376
    %v2413 = vpack.c.b16 %v2381, %v2377
    %v2414 = vpack.c.b16 %v2382, %v2378
    %2447 = vmatprep.subr.bf16.mxu0 %v2412
    %2448 = vmatpush1.bf16.msra.mxu0 %v2411
    %2449 = vmatprep.subr.bf16.mxu0 %v2408
    %2450 = vmatpush1.bf16.msra.mxu0 %v2407
    %2451 = vmatprep.subr.bf16.mxu0 %v2404
    %2452 = vmatpush1.bf16.msra.mxu0 %v2403
    %2453 = vmatprep.subr.bf16.mxu0 %v2400
    %2454 = vmatpush1.bf16.msra.mxu0 %v2399
    %2455 = vmatprep.subr.bf16.mxu0 %v2396
    %2456 = vmatpush1.bf16.msra.mxu0 %v2395
    %2457 = vmatprep.subr.bf16.mxu0 %v2392
    %2458 = vmatpush1.bf16.msra.mxu0 %v2391
    %2459 = vmatprep.subr.bf16.mxu0 %v2388
    %2460 = vmatpush1.bf16.msra.mxu0 %v2387
    %2461 = vmatprep.subr.bf16.mxu0 %v2384
    %2462 = vmatpush1.bf16.msra.mxu0 %v2383
    %2463 = vmatprep.subr.bf16.mxu0 0
    %2464 = vmatpush2.bf16.msra.mxu0 0
    %2465 = vmatprep.subr.bf16.mxu0 0
    %2466 = vmatpush2.bf16.msra.mxu0 0
    %2467 = vmatprep.subr.bf16.mxu0 0
    %2468 = vmatpush2.bf16.msra.mxu0 0
    %2469 = vmatprep.subr.bf16.mxu0 0
    %2470 = vmatpush2.bf16.msra.mxu0 0
    %2471 = vmatprep.subr.bf16.mxu0 0
    %2472 = vmatpush2.bf16.msra.mxu0 0
    %2473 = vmatprep.subr.bf16.mxu0 0
    %2474 = vmatpush2.bf16.msra.mxu0 0
    %2475 = vmatprep.subr.bf16.mxu0 0
    %2476 = vmatpush2.bf16.msra.mxu0 0
    %2477 = vmatprep.subr.bf16.mxu0 0
    %2478 = vmatpush2.bf16.msra.mxu0 0
    %2479 = vmatprep.mubr.bf16.mxu0 0
    %2480 = vmatmul.mubr.bf16.gmra.mxu0 %v2232
    %v2481 = vpop.f32.mrf.mxu0
    %v2482 = vadd.f32 %v2270, %v2481
    %v2483 = vpop.f32.mrf.mxu0
    %v2484 = vadd.f32 %v2274, %v2483
    %v2485 = vpop.f32.mrf.mxu0
    %v2486 = vadd.f32 %v2270, %v2485
    %v2487 = vpop.f32.mrf.mxu0
    %v2488 = vadd.f32 %v2274, %v2487
    %2489 = vdwg.mxu0
    %2490 = vmatprep.subr.bf16.mxu0 %v2414
    %2491 = vmatpush1.bf16.msra.mxu0 %v2413
    %2492 = vmatprep.subr.bf16.mxu0 %v2410
    %2493 = vmatpush1.bf16.msra.mxu0 %v2409
    %2494 = vmatprep.subr.bf16.mxu0 %v2406
    %2495 = vmatpush1.bf16.msra.mxu0 %v2405
    %2496 = vmatprep.subr.bf16.mxu0 %v2402
    %2497 = vmatpush1.bf16.msra.mxu0 %v2401
    %2498 = vmatprep.subr.bf16.mxu0 %v2398
    %2499 = vmatpush1.bf16.msra.mxu0 %v2397
    %2500 = vmatprep.subr.bf16.mxu0 %v2394
    %2501 = vmatpush1.bf16.msra.mxu0 %v2393
    %2502 = vmatprep.subr.bf16.mxu0 %v2390
    %2503 = vmatpush1.bf16.msra.mxu0 %v2389
    %2504 = vmatprep.subr.bf16.mxu0 %v2386
    %2505 = vmatpush1.bf16.msra.mxu0 %v2385
    %2506 = vmatprep.subr.bf16.mxu0 0
    %2507 = vmatpush2.bf16.msra.mxu0 0
    %2508 = vmatprep.subr.bf16.mxu0 0
    %2509 = vmatpush2.bf16.msra.mxu0 0
    %2510 = vmatprep.subr.bf16.mxu0 0
    %2511 = vmatpush2.bf16.msra.mxu0 0
    %2512 = vmatprep.subr.bf16.mxu0 0
    %2513 = vmatpush2.bf16.msra.mxu0 0
    %2514 = vmatprep.subr.bf16.mxu0 0
    %2515 = vmatpush2.bf16.msra.mxu0 0
    %2516 = vmatprep.subr.bf16.mxu0 0
    %2517 = vmatpush2.bf16.msra.mxu0 0
    %2518 = vmatprep.subr.bf16.mxu0 0
    %2519 = vmatpush2.bf16.msra.mxu0 0
    %2520 = vmatprep.subr.bf16.mxu0 0
    %2521 = vmatpush2.bf16.msra.mxu0 0
    %2522 = vmatprep.mubr.bf16.mxu0 0
    %2523 = vmatmul.mubr.bf16.gmra.mxu0 %v2232
    %v2524 = vpop.f32.mrf.mxu0
    %v2525 = vadd.f32 %v2278, %v2524
    %v2526 = vpop.f32.mrf.mxu0
    %v2527 = vadd.f32 %v2282, %v2526
    %v2528 = vpop.f32.mrf.mxu0
    %v2529 = vadd.f32 %v2278, %v2528
    %v2530 = vpop.f32.mrf.mxu0
    %v2531 = vadd.f32 %v2282, %v2530
    %2532 = vdwg.mxu0
    %v2533 = vmax.f32 %v2482, 0.0
    %v2534 = vmax.f32 %v2484, 0.0
    %v2535 = vmax.f32 %v2525, 0.0
    %v2536 = vmax.f32 %v2527, 0.0
    %v2537 = vmax.f32 %v2486, 0.0
    %v2538 = vmax.f32 %v2488, 0.0
    %v2539 = vmax.f32 %v2529, 0.0
    %v2540 = vmax.f32 %v2531, 0.0
    %v2541 = vpack.c.bf16 %v2537, %v2533
    %v2542 = vpack.c.bf16 %v2538, %v2534
    %v2543 = vpack.c.bf16 %v2539, %v2535
    %v2544 = vpack.c.bf16 %v2540, %v2536
    %v2545 = vld [vmem:[#allocation13] sm:$0xff]
    %v2546 = vld [vmem:[#allocation13 + $0x8] sm:$0xff]
    %v2547 = vld [vmem:[#allocation13 + $0x10] sm:$0xff]
    %v2548 = vld [vmem:[#allocation13 + $0x18] sm:$0xf]
    %v2549 = vld [vmem:[#allocation13 + $0x1c] sm:$0xff]
    %v2550 = vld [vmem:[#allocation13 + $0x24] sm:$0xff]
    %v2551 = vld [vmem:[#allocation13 + $0x2c] sm:$0xff]
    %v2552 = vld [vmem:[#allocation13 + $0x34] sm:$0xf]
    %v2553 = vld [vmem:[#allocation13 + $0x38] sm:$0xff]
    %v2554 = vld [vmem:[#allocation13 + $0x40] sm:$0xff]
    %v2555 = vld [vmem:[#allocation13 + $0x48] sm:$0xff]
    %v2556 = vld [vmem:[#allocation13 + $0x50] sm:$0xf]
    %v2557 = vld [vmem:[#allocation13 + $0x54] sm:$0xff]
    %v2558 = vld [vmem:[#allocation13 + $0x5c] sm:$0xff]
    %v2559 = vld [vmem:[#allocation13 + $0x64] sm:$0xff]
    %v2560 = vld [vmem:[#allocation13 + $0x6c] sm:$0xf]
    %v2561 = vld [vmem:[#allocation13 + $0x70] sm:$0xff]
    %v2562 = vld [vmem:[#allocation13 + $0x78] sm:$0xff]
    %v2563 = vld [vmem:[#allocation13 + $0x80] sm:$0xff]
    %v2564 = vld [vmem:[#allocation13 + $0x88] sm:$0xf]
    %v2565 = vld [vmem:[#allocation13 + $0x8c] sm:$0xff]
    %v2566 = vld [vmem:[#allocation13 + $0x94] sm:$0xff]
    %v2567 = vld [vmem:[#allocation13 + $0x9c] sm:$0xff]
    %v2568 = vld [vmem:[#allocation13 + $0xa4] sm:$0xf]
    %v2569 = vld [vmem:[#allocation13 + $0xa8] sm:$0xff]
    %v2570 = vld [vmem:[#allocation13 + $0xb0] sm:$0xff]
    %v2571 = vld [vmem:[#allocation13 + $0xb8] sm:$0xff]
    %v2572 = vld [vmem:[#allocation13 + $0xc0] sm:$0xf]
    %v2573 = vld [vmem:[#allocation13 + $0xc4] sm:$0xff]
    %v2574 = vld [vmem:[#allocation13 + $0xcc] sm:$0xff]
    %v2575 = vld [vmem:[#allocation13 + $0xd4] sm:$0xff]
    %v2576 = vld [vmem:[#allocation13 + $0xdc] sm:$0xf]
    %v2577 = vld [vmem:[#allocation13 + $0xe0] sm:$0xff]
    %v2578 = vld [vmem:[#allocation13 + $0xe8] sm:$0xff]
    %v2579 = vld [vmem:[#allocation13 + $0xf0] sm:$0xff]
    %v2580 = vld [vmem:[#allocation13 + $0xf8] sm:$0xf]
    %v2581 = vld [vmem:[#allocation13 + $0xfc] sm:$0xff]
    %v2582 = vld [vmem:[#allocation13 + $0x104] sm:$0xff]
    %v2583 = vld [vmem:[#allocation13 + $0x10c] sm:$0xff]
    %v2584 = vld [vmem:[#allocation13 + $0x114] sm:$0xf]
    %v2585 = vld [vmem:[#allocation13 + $0x118] sm:$0xff]
    %v2586 = vld [vmem:[#allocation13 + $0x120] sm:$0xff]
    %v2587 = vld [vmem:[#allocation13 + $0x128] sm:$0xff]
    %v2588 = vld [vmem:[#allocation13 + $0x130] sm:$0xf]
    %v2589 = vld [vmem:[#allocation13 + $0x134] sm:$0xff]
    %v2590 = vld [vmem:[#allocation13 + $0x13c] sm:$0xff]
    %v2591 = vld [vmem:[#allocation13 + $0x144] sm:$0xff]
    %v2592 = vld [vmem:[#allocation13 + $0x14c] sm:$0xf]
    %v2593 = vld [vmem:[#allocation13 + $0x150] sm:$0xff]
    %v2594 = vld [vmem:[#allocation13 + $0x158] sm:$0xff]
    %v2595 = vld [vmem:[#allocation13 + $0x160] sm:$0xff]
    %v2596 = vld [vmem:[#allocation13 + $0x168] sm:$0xf]
    %v2597 = vld [vmem:[#allocation13 + $0x16c] sm:$0xff]
    %v2598 = vld [vmem:[#allocation13 + $0x174] sm:$0xff]
    %v2599 = vld [vmem:[#allocation13 + $0x17c] sm:$0xff]
    %v2600 = vld [vmem:[#allocation13 + $0x184] sm:$0xf]
    %v2601 = vld [vmem:[#allocation13 + $0x188] sm:$0xff]
    %v2602 = vld [vmem:[#allocation13 + $0x190] sm:$0xff]
    %v2603 = vld [vmem:[#allocation13 + $0x198] sm:$0xff]
    %v2604 = vld [vmem:[#allocation13 + $0x1a0] sm:$0xf]
    %v2605 = vld [vmem:[#allocation13 + $0x1a4] sm:$0xff]
    %v2606 = vld [vmem:[#allocation13 + $0x1ac] sm:$0xff]
    %v2607 = vld [vmem:[#allocation13 + $0x1b4] sm:$0xff]
    %v2608 = vld [vmem:[#allocation13 + $0x1bc] sm:$0xf]
    %v2609 = vld [vmem:[#allocation13 + $0x1c0] sm:$0xff]
    %v2610 = vld [vmem:[#allocation13 + $0x1c8] sm:$0xff]
    %v2611 = vld [vmem:[#allocation13 + $0x1d0] sm:$0xff]
    %v2612 = vld [vmem:[#allocation13 + $0x1d8] sm:$0xf]
    %v2613 = vld [vmem:[#allocation13 + $0x1dc] sm:$0xff]
    %v2614 = vld [vmem:[#allocation13 + $0x1e4] sm:$0xff]
    %v2615 = vld [vmem:[#allocation13 + $0x1ec] sm:$0xff]
    %v2616 = vld [vmem:[#allocation13 + $0x1f4] sm:$0xf]
    %v2617 = vld [vmem:[#allocation13 + $0x1f8] sm:$0xff]
    %v2618 = vld [vmem:[#allocation13 + $0x200] sm:$0xff]
    %v2619 = vld [vmem:[#allocation13 + $0x208] sm:$0xff]
    %v2620 = vld [vmem:[#allocation13 + $0x210] sm:$0xf]
    %v2621 = vld [vmem:[#allocation13 + $0x214] sm:$0xff]
    %v2622 = vld [vmem:[#allocation13 + $0x21c] sm:$0xff]
    %v2623 = vld [vmem:[#allocation13 + $0x224] sm:$0xff]
    %v2624 = vld [vmem:[#allocation13 + $0x22c] sm:$0xf]
    %v2625 = vld [vmem:[#allocation13 + $0x230] sm:$0xff]
    %v2626 = vld [vmem:[#allocation13 + $0x238] sm:$0xff]
    %v2627 = vld [vmem:[#allocation13 + $0x240] sm:$0xff]
    %v2628 = vld [vmem:[#allocation13 + $0x248] sm:$0xf]
    %v2629 = vld [vmem:[#allocation13 + $0x24c] sm:$0xff]
    %v2630 = vld [vmem:[#allocation13 + $0x254] sm:$0xff]
    %v2631 = vld [vmem:[#allocation13 + $0x25c] sm:$0xff]
    %v2632 = vld [vmem:[#allocation13 + $0x264] sm:$0xf]
    %v2633 = vld [vmem:[#allocation13 + $0x268] sm:$0xff]
    %v2634 = vld [vmem:[#allocation13 + $0x270] sm:$0xff]
    %v2635 = vld [vmem:[#allocation13 + $0x278] sm:$0xff]
    %v2636 = vld [vmem:[#allocation13 + $0x280] sm:$0xf]
    %v2637 = vld [vmem:[#allocation13 + $0x284] sm:$0xff]
    %v2638 = vld [vmem:[#allocation13 + $0x28c] sm:$0xff]
    %v2639 = vld [vmem:[#allocation13 + $0x294] sm:$0xff]
    %v2640 = vld [vmem:[#allocation13 + $0x29c] sm:$0xf]
    %v2641 = vld [vmem:[#allocation13 + $0x2a0] sm:$0xff]
    %v2642 = vld [vmem:[#allocation13 + $0x2a8] sm:$0xff]
    %v2643 = vld [vmem:[#allocation13 + $0x2b0] sm:$0xff]
    %v2644 = vld [vmem:[#allocation13 + $0x2b8] sm:$0xf]
    %v2645 = vld [vmem:[#allocation13 + $0x2bc] sm:$0xff]
    %v2646 = vld [vmem:[#allocation13 + $0x2c4] sm:$0xff]
    %v2647 = vld [vmem:[#allocation13 + $0x2cc] sm:$0xff]
    %v2648 = vld [vmem:[#allocation13 + $0x2d4] sm:$0xf]
    %v2649 = vld [vmem:[#allocation13 + $0x2d8] sm:$0xff]
    %v2650 = vld [vmem:[#allocation13 + $0x2e0] sm:$0xff]
    %v2651 = vld [vmem:[#allocation13 + $0x2e8] sm:$0xff]
    %v2652 = vld [vmem:[#allocation13 + $0x2f0] sm:$0xf]
    %v2653 = vld [vmem:[#allocation13 + $0x2f4] sm:$0xff]
    %v2654 = vld [vmem:[#allocation13 + $0x2fc] sm:$0xff]
    %v2655 = vld [vmem:[#allocation13 + $0x304] sm:$0xff]
    %v2656 = vld [vmem:[#allocation13 + $0x30c] sm:$0xf]
    %v2657 = vld [vmem:[#allocation13 + $0x310] sm:$0xff]
    %v2658 = vld [vmem:[#allocation13 + $0x318] sm:$0xff]
    %v2659 = vld [vmem:[#allocation13 + $0x320] sm:$0xff]
    %v2660 = vld [vmem:[#allocation13 + $0x328] sm:$0xf]
    %v2661 = vld [vmem:[#allocation13 + $0x32c] sm:$0xff]
    %v2662 = vld [vmem:[#allocation13 + $0x334] sm:$0xff]
    %v2663 = vld [vmem:[#allocation13 + $0x33c] sm:$0xff]
    %v2664 = vld [vmem:[#allocation13 + $0x344] sm:$0xf]
    %v2665 = vld [vmem:[#allocation13 + $0x348] sm:$0xff]
    %v2666 = vld [vmem:[#allocation13 + $0x350] sm:$0xff]
    %v2667 = vld [vmem:[#allocation13 + $0x358] sm:$0xff]
    %v2668 = vld [vmem:[#allocation13 + $0x360] sm:$0xf]
    %v2669 = vld [vmem:[#allocation13 + $0x364] sm:$0xff]
    %v2670 = vld [vmem:[#allocation13 + $0x36c] sm:$0xff]
    %v2671 = vld [vmem:[#allocation13 + $0x374] sm:$0xff]
    %v2672 = vld [vmem:[#allocation13 + $0x37c] sm:$0xf]
    %v2673 = vld [vmem:[#allocation13 + $0x380] sm:$0xff]
    %v2674 = vld [vmem:[#allocation13 + $0x388] sm:$0xff]
    %v2675 = vld [vmem:[#allocation13 + $0x390] sm:$0xff]
    %v2676 = vld [vmem:[#allocation13 + $0x398] sm:$0xf]
    %v2677 = vld [vmem:[#allocation13 + $0x39c] sm:$0xff]
    %v2678 = vld [vmem:[#allocation13 + $0x3a4] sm:$0xff]
    %v2679 = vld [vmem:[#allocation13 + $0x3ac] sm:$0xff]
    %v2680 = vld [vmem:[#allocation13 + $0x3b4] sm:$0xf]
    %v2681 = vld [vmem:[#allocation13 + $0x3b8] sm:$0xff]
    %v2682 = vld [vmem:[#allocation13 + $0x3c0] sm:$0xff]
    %v2683 = vld [vmem:[#allocation13 + $0x3c8] sm:$0xff]
    %v2684 = vld [vmem:[#allocation13 + $0x3d0] sm:$0xf]
    %v2685 = vld [vmem:[#allocation13 + $0x3d4] sm:$0xff]
    %v2686 = vld [vmem:[#allocation13 + $0x3dc] sm:$0xff]
    %v2687 = vld [vmem:[#allocation13 + $0x3e4] sm:$0xff]
    %v2688 = vld [vmem:[#allocation13 + $0x3ec] sm:$0xf]
    %v2689 = vld [vmem:[#allocation13 + $0x3f0] sm:$0xff]
    %v2690 = vld [vmem:[#allocation13 + $0x3f8] sm:$0xff]
    %v2691 = vld [vmem:[#allocation13 + $0x400] sm:$0xff]
    %v2692 = vld [vmem:[#allocation13 + $0x408] sm:$0xf]
    %v2693 = vld [vmem:[#allocation13 + $0x40c] sm:$0xff]
    %v2694 = vld [vmem:[#allocation13 + $0x414] sm:$0xff]
    %v2695 = vld [vmem:[#allocation13 + $0x41c] sm:$0xff]
    %v2696 = vld [vmem:[#allocation13 + $0x424] sm:$0xf]
    %v2697 = vld [vmem:[#allocation13 + $0x428] sm:$0xff]
    %v2698 = vld [vmem:[#allocation13 + $0x430] sm:$0xff]
    %v2699 = vld [vmem:[#allocation13 + $0x438] sm:$0xff]
    %v2700 = vld [vmem:[#allocation13 + $0x440] sm:$0xf]
    %v2701 = vld [vmem:[#allocation13 + $0x444] sm:$0xff]
    %v2702 = vld [vmem:[#allocation13 + $0x44c] sm:$0xff]
    %v2703 = vld [vmem:[#allocation13 + $0x454] sm:$0xff]
    %v2704 = vld [vmem:[#allocation13 + $0x45c] sm:$0xf]
    %v2705 = vld [vmem:[#allocation13 + $0x460] sm:$0xff]
    %v2706 = vld [vmem:[#allocation13 + $0x468] sm:$0xff]
    %v2707 = vld [vmem:[#allocation13 + $0x470] sm:$0xff]
    %v2708 = vld [vmem:[#allocation13 + $0x478] sm:$0xf]
    %v2709 = vld [vmem:[#allocation13 + $0x47c] sm:$0xff]
    %v2710 = vld [vmem:[#allocation13 + $0x484] sm:$0xff]
    %v2711 = vld [vmem:[#allocation13 + $0x48c] sm:$0xff]
    %v2712 = vld [vmem:[#allocation13 + $0x494] sm:$0xf]
    %v2713 = vld [vmem:[#allocation13 + $0x498] sm:$0xff]
    %v2714 = vld [vmem:[#allocation13 + $0x4a0] sm:$0xff]
    %v2715 = vld [vmem:[#allocation13 + $0x4a8] sm:$0xff]
    %v2716 = vld [vmem:[#allocation13 + $0x4b0] sm:$0xf]
    %v2717 = vld [vmem:[#allocation13 + $0x4b4] sm:$0xff]
    %v2718 = vld [vmem:[#allocation13 + $0x4bc] sm:$0xff]
    %v2719 = vld [vmem:[#allocation13 + $0x4c4] sm:$0xff]
    %v2720 = vld [vmem:[#allocation13 + $0x4cc] sm:$0xf]
    %v2721 = vld [vmem:[#allocation13 + $0x4d0] sm:$0xff]
    %v2722 = vld [vmem:[#allocation13 + $0x4d8] sm:$0xff]
    %v2723 = vld [vmem:[#allocation13 + $0x4e0] sm:$0xff]
    %v2724 = vld [vmem:[#allocation13 + $0x4e8] sm:$0xf]
    %v2725 = vld [vmem:[#allocation13 + $0x4ec] sm:$0xff]
    %v2726 = vld [vmem:[#allocation13 + $0x4f4] sm:$0xff]
    %v2727 = vld [vmem:[#allocation13 + $0x4fc] sm:$0xff]
    %v2728 = vld [vmem:[#allocation13 + $0x504] sm:$0xf]
    %v2729 = vld [vmem:[#allocation13 + $0x508] sm:$0xff]
    %v2730 = vld [vmem:[#allocation13 + $0x510] sm:$0xff]
    %v2731 = vld [vmem:[#allocation13 + $0x518] sm:$0xff]
    %v2732 = vld [vmem:[#allocation13 + $0x520] sm:$0xf]
    %v2733 = vld [vmem:[#allocation13 + $0x524] sm:$0xff]
    %v2734 = vld [vmem:[#allocation13 + $0x52c] sm:$0xff]
    %v2735 = vld [vmem:[#allocation13 + $0x534] sm:$0xff]
    %v2736 = vld [vmem:[#allocation13 + $0x53c] sm:$0xf]
    %v2737 = vld [vmem:[#allocation13 + $0x540] sm:$0xff]
    %v2738 = vld [vmem:[#allocation13 + $0x548] sm:$0xff]
    %v2739 = vld [vmem:[#allocation13 + $0x550] sm:$0xff]
    %v2740 = vld [vmem:[#allocation13 + $0x558] sm:$0xf]
    %v2741 = vld [vmem:[#allocation13 + $0x55c] sm:$0xff]
    %v2742 = vld [vmem:[#allocation13 + $0x564] sm:$0xff]
    %v2743 = vld [vmem:[#allocation13 + $0x56c] sm:$0xff]
    %v2744 = vld [vmem:[#allocation13 + $0x574] sm:$0xf]
    %v2745 = vld [vmem:[#allocation13 + $0x578] sm:$0xff]
    %v2746 = vld [vmem:[#allocation13 + $0x580] sm:$0xff]
    %v2747 = vld [vmem:[#allocation13 + $0x588] sm:$0xff]
    %v2748 = vld [vmem:[#allocation13 + $0x590] sm:$0xf]
    %v2749 = vld [vmem:[#allocation13 + $0x594] sm:$0xff]
    %v2750 = vld [vmem:[#allocation13 + $0x59c] sm:$0xff]
    %v2751 = vld [vmem:[#allocation13 + $0x5a4] sm:$0xff]
    %v2752 = vld [vmem:[#allocation13 + $0x5ac] sm:$0xf]
    %v2753 = vld [vmem:[#allocation13 + $0x5b0] sm:$0xff]
    %v2754 = vld [vmem:[#allocation13 + $0x5b8] sm:$0xff]
    %v2755 = vld [vmem:[#allocation13 + $0x5c0] sm:$0xff]
    %v2756 = vld [vmem:[#allocation13 + $0x5c8] sm:$0xf]
    %v2757 = vld [vmem:[#allocation13 + $0x5cc] sm:$0xff]
    %v2758 = vld [vmem:[#allocation13 + $0x5d4] sm:$0xff]
    %v2759 = vld [vmem:[#allocation13 + $0x5dc] sm:$0xff]
    %v2760 = vld [vmem:[#allocation13 + $0x5e4] sm:$0xf]
    %v2761 = vld [vmem:[#allocation13 + $0x5e8] sm:$0xff]
    %v2762 = vld [vmem:[#allocation13 + $0x5f0] sm:$0xff]
    %v2763 = vld [vmem:[#allocation13 + $0x5f8] sm:$0xff]
    %v2764 = vld [vmem:[#allocation13 + $0x600] sm:$0xf]
    %v2765 = vld [vmem:[#allocation13 + $0x604] sm:$0xff]
    %v2766 = vld [vmem:[#allocation13 + $0x60c] sm:$0xff]
    %v2767 = vld [vmem:[#allocation13 + $0x614] sm:$0xff]
    %v2768 = vld [vmem:[#allocation13 + $0x61c] sm:$0xf]
    %v2769 = vld [vmem:[#allocation13 + $0x620] sm:$0xff]
    %v2770 = vld [vmem:[#allocation13 + $0x628] sm:$0xff]
    %v2771 = vld [vmem:[#allocation13 + $0x630] sm:$0xff]
    %v2772 = vld [vmem:[#allocation13 + $0x638] sm:$0xf]
    %v2773 = vld [vmem:[#allocation13 + $0x63c] sm:$0xff]
    %v2774 = vld [vmem:[#allocation13 + $0x644] sm:$0xff]
    %v2775 = vld [vmem:[#allocation13 + $0x64c] sm:$0xff]
    %v2776 = vld [vmem:[#allocation13 + $0x654] sm:$0xf]
    %v2777 = vld [vmem:[#allocation13 + $0x658] sm:$0xff]
    %v2778 = vld [vmem:[#allocation13 + $0x660] sm:$0xff]
    %v2779 = vld [vmem:[#allocation13 + $0x668] sm:$0xff]
    %v2780 = vld [vmem:[#allocation13 + $0x670] sm:$0xf]
    %v2781 = vld [vmem:[#allocation13 + $0x674] sm:$0xff]
    %v2782 = vld [vmem:[#allocation13 + $0x67c] sm:$0xff]
    %v2783 = vld [vmem:[#allocation13 + $0x684] sm:$0xff]
    %v2784 = vld [vmem:[#allocation13 + $0x68c] sm:$0xf]
    %v2785 = vld [vmem:[#allocation13 + $0x690] sm:$0xff]
    %v2786 = vld [vmem:[#allocation13 + $0x698] sm:$0xff]
    %v2787 = vld [vmem:[#allocation13 + $0x6a0] sm:$0xff]
    %v2788 = vld [vmem:[#allocation13 + $0x6a8] sm:$0xf]
    %v2789 = vld [vmem:[#allocation13 + $0x6ac] sm:$0xff]
    %v2790 = vld [vmem:[#allocation13 + $0x6b4] sm:$0xff]
    %v2791 = vld [vmem:[#allocation13 + $0x6bc] sm:$0xff]
    %v2792 = vld [vmem:[#allocation13 + $0x6c4] sm:$0xf]
    %v2793 = vld [vmem:[#allocation13 + $0x6c8] sm:$0xff]
    %v2794 = vld [vmem:[#allocation13 + $0x6d0] sm:$0xff]
    %v2795 = vld [vmem:[#allocation13 + $0x6d8] sm:$0xff]
    %v2796 = vld [vmem:[#allocation13 + $0x6e0] sm:$0xf]
    %v2797 = vld [vmem:[#allocation13 + $0x6e4] sm:$0xff]
    %v2798 = vld [vmem:[#allocation13 + $0x6ec] sm:$0xff]
    %v2799 = vld [vmem:[#allocation13 + $0x6f4] sm:$0xff]
    %v2800 = vld [vmem:[#allocation13 + $0x6fc] sm:$0xf]
    %v2801 = vld [vmem:[%s9] sm:$0xff]
    %v2803 = vlaneseq
    %v2804 = vshrl.u32 %v2803, 7
    %v2805 = vsub.s32 0, %v2804
    %v2806 = vrot.slane %v2801, %v2805
    %v2807 = vlaneseq
    %v2808 = vshrl.u32 %v2807, 7
    %v2809 = vsub.s32 1, %v2808
    %v2810 = vrot.slane %v2801, %v2809
    %v2811 = vlaneseq
    %v2812 = vshrl.u32 %v2811, 7
    %v2813 = vsub.s32 2, %v2812
    %v2814 = vrot.slane %v2801, %v2813
    %v2815 = vlaneseq
    %v2816 = vshrl.u32 %v2815, 7
    %v2817 = vsub.s32 3, %v2816
    %v2818 = vrot.slane %v2801, %v2817
    %v2819 = vlaneseq
    %v2820 = vshrl.u32 %v2819, 7
    %v2821 = vsub.s32 4, %v2820
    %v2822 = vrot.slane %v2801, %v2821
    %v2823 = vlaneseq
    %v2824 = vshrl.u32 %v2823, 7
    %v2825 = vsub.s32 5, %v2824
    %v2826 = vrot.slane %v2801, %v2825
    %v2827 = vlaneseq
    %v2828 = vshrl.u32 %v2827, 7
    %v2829 = vsub.s32 6, %v2828
    %v2830 = vrot.slane %v2801, %v2829
    %v3094 = vunpack.c.l.b16 %v2545
    %v3095 = vunpack.c.h.b16 %v2545
    %v3096 = vunpack.c.l.b16 %v2546
    %v3097 = vunpack.c.h.b16 %v2546
    %v3098 = vunpack.c.l.b16 %v2547
    %v3099 = vunpack.c.h.b16 %v2547
    %v3100 = vunpack.c.l.b16 %v2548
    %v3101 = vunpack.c.l.b16 %v2549
    %v3102 = vunpack.c.h.b16 %v2549
    %v3103 = vunpack.c.l.b16 %v2550
    %v3104 = vunpack.c.h.b16 %v2550
    %v3105 = vunpack.c.l.b16 %v2551
    %v3106 = vunpack.c.h.b16 %v2551
    %v3107 = vunpack.c.l.b16 %v2552
    %v3108 = vunpack.c.l.b16 %v2553
    %v3109 = vunpack.c.h.b16 %v2553
    %v3110 = vunpack.c.l.b16 %v2554
    %v3111 = vunpack.c.h.b16 %v2554
    %v3112 = vunpack.c.l.b16 %v2555
    %v3113 = vunpack.c.h.b16 %v2555
    %v3114 = vunpack.c.l.b16 %v2556
    %v3115 = vunpack.c.l.b16 %v2557
    %v3116 = vunpack.c.h.b16 %v2557
    %v3117 = vunpack.c.l.b16 %v2558
    %v3118 = vunpack.c.h.b16 %v2558
    %v3119 = vunpack.c.l.b16 %v2559
    %v3120 = vunpack.c.h.b16 %v2559
    %v3121 = vunpack.c.l.b16 %v2560
    %v3122 = vunpack.c.l.b16 %v2561
    %v3123 = vunpack.c.h.b16 %v2561
    %v3124 = vunpack.c.l.b16 %v2562
    %v3125 = vunpack.c.h.b16 %v2562
    %v3126 = vunpack.c.l.b16 %v2563
    %v3127 = vunpack.c.h.b16 %v2563
    %v3128 = vunpack.c.l.b16 %v2564
    %v3129 = vunpack.c.l.b16 %v2565
    %v3130 = vunpack.c.h.b16 %v2565
    %v3131 = vunpack.c.l.b16 %v2566
    %v3132 = vunpack.c.h.b16 %v2566
    %v3133 = vunpack.c.l.b16 %v2567
    %v3134 = vunpack.c.h.b16 %v2567
    %v3135 = vunpack.c.l.b16 %v2568
    %v3136 = vunpack.c.l.b16 %v2569
    %v3137 = vunpack.c.h.b16 %v2569
    %v3138 = vunpack.c.l.b16 %v2570
    %v3139 = vunpack.c.h.b16 %v2570
    %v3140 = vunpack.c.l.b16 %v2571
    %v3141 = vunpack.c.h.b16 %v2571
    %v3142 = vunpack.c.l.b16 %v2572
    %v3143 = vunpack.c.l.b16 %v2573
    %v3144 = vunpack.c.h.b16 %v2573
    %v3145 = vunpack.c.l.b16 %v2574
    %v3146 = vunpack.c.h.b16 %v2574
    %v3147 = vunpack.c.l.b16 %v2575
    %v3148 = vunpack.c.h.b16 %v2575
    %v3149 = vunpack.c.l.b16 %v2576
    %v3150 = vunpack.c.l.b16 %v2577
    %v3151 = vunpack.c.h.b16 %v2577
    %v3152 = vunpack.c.l.b16 %v2578
    %v3153 = vunpack.c.h.b16 %v2578
    %v3154 = vunpack.c.l.b16 %v2579
    %v3155 = vunpack.c.h.b16 %v2579
    %v3156 = vunpack.c.l.b16 %v2580
    %v3157 = vunpack.c.l.b16 %v2581
    %v3158 = vunpack.c.h.b16 %v2581
    %v3159 = vunpack.c.l.b16 %v2582
    %v3160 = vunpack.c.h.b16 %v2582
    %v3161 = vunpack.c.l.b16 %v2583
    %v3162 = vunpack.c.h.b16 %v2583
    %v3163 = vunpack.c.l.b16 %v2584
    %v3164 = vunpack.c.l.b16 %v2585
    %v3165 = vunpack.c.h.b16 %v2585
    %v3166 = vunpack.c.l.b16 %v2586
    %v3167 = vunpack.c.h.b16 %v2586
    %v3168 = vunpack.c.l.b16 %v2587
    %v3169 = vunpack.c.h.b16 %v2587
    %v3170 = vunpack.c.l.b16 %v2588
    %v3171 = vunpack.c.l.b16 %v2589
    %v3172 = vunpack.c.h.b16 %v2589
    %v3173 = vunpack.c.l.b16 %v2590
    %v3174 = vunpack.c.h.b16 %v2590
    %v3175 = vunpack.c.l.b16 %v2591
    %v3176 = vunpack.c.h.b16 %v2591
    %v3177 = vunpack.c.l.b16 %v2592
    %v3178 = vunpack.c.l.b16 %v2593
    %v3179 = vunpack.c.h.b16 %v2593
    %v3180 = vunpack.c.l.b16 %v2594
    %v3181 = vunpack.c.h.b16 %v2594
    %v3182 = vunpack.c.l.b16 %v2595
    %v3183 = vunpack.c.h.b16 %v2595
    %v3184 = vunpack.c.l.b16 %v2596
    %v3185 = vunpack.c.l.b16 %v2597
    %v3186 = vunpack.c.h.b16 %v2597
    %v3187 = vunpack.c.l.b16 %v2598
    %v3188 = vunpack.c.h.b16 %v2598
    %v3189 = vunpack.c.l.b16 %v2599
    %v3190 = vunpack.c.h.b16 %v2599
    %v3191 = vunpack.c.l.b16 %v2600
    %v3192 = vunpack.c.l.b16 %v2601
    %v3193 = vunpack.c.h.b16 %v2601
    %v3194 = vunpack.c.l.b16 %v2602
    %v3195 = vunpack.c.h.b16 %v2602
    %v3196 = vunpack.c.l.b16 %v2603
    %v3197 = vunpack.c.h.b16 %v2603
    %v3198 = vunpack.c.l.b16 %v2604
    %v3199 = vunpack.c.l.b16 %v2605
    %v3200 = vunpack.c.h.b16 %v2605
    %v3201 = vunpack.c.l.b16 %v2606
    %v3202 = vunpack.c.h.b16 %v2606
    %v3203 = vunpack.c.l.b16 %v2607
    %v3204 = vunpack.c.h.b16 %v2607
    %v3205 = vunpack.c.l.b16 %v2608
    %v3206 = vunpack.c.l.b16 %v2609
    %v3207 = vunpack.c.h.b16 %v2609
    %v3208 = vunpack.c.l.b16 %v2610
    %v3209 = vunpack.c.h.b16 %v2610
    %v3210 = vunpack.c.l.b16 %v2611
    %v3211 = vunpack.c.h.b16 %v2611
    %v3212 = vunpack.c.l.b16 %v2612
    %v3213 = vunpack.c.l.b16 %v2613
    %v3214 = vunpack.c.h.b16 %v2613
    %v3215 = vunpack.c.l.b16 %v2614
    %v3216 = vunpack.c.h.b16 %v2614
    %v3217 = vunpack.c.l.b16 %v2615
    %v3218 = vunpack.c.h.b16 %v2615
    %v3219 = vunpack.c.l.b16 %v2616
    %v3220 = vunpack.c.l.b16 %v2617
    %v3221 = vunpack.c.h.b16 %v2617
    %v3222 = vunpack.c.l.b16 %v2618
    %v3223 = vunpack.c.h.b16 %v2618
    %v3224 = vunpack.c.l.b16 %v2619
    %v3225 = vunpack.c.h.b16 %v2619
    %v3226 = vunpack.c.l.b16 %v2620
    %v3227 = vunpack.c.l.b16 %v2621
    %v3228 = vunpack.c.h.b16 %v2621
    %v3229 = vunpack.c.l.b16 %v2622
    %v3230 = vunpack.c.h.b16 %v2622
    %v3231 = vunpack.c.l.b16 %v2623
    %v3232 = vunpack.c.h.b16 %v2623
    %v3233 = vunpack.c.l.b16 %v2624
    %v3234 = vunpack.c.l.b16 %v2625
    %v3235 = vunpack.c.h.b16 %v2625
    %v3236 = vunpack.c.l.b16 %v2626
    %v3237 = vunpack.c.h.b16 %v2626
    %v3238 = vunpack.c.l.b16 %v2627
    %v3239 = vunpack.c.h.b16 %v2627
    %v3240 = vunpack.c.l.b16 %v2628
    %v3241 = vunpack.c.l.b16 %v2629
    %v3242 = vunpack.c.h.b16 %v2629
    %v3243 = vunpack.c.l.b16 %v2630
    %v3244 = vunpack.c.h.b16 %v2630
    %v3245 = vunpack.c.l.b16 %v2631
    %v3246 = vunpack.c.h.b16 %v2631
    %v3247 = vunpack.c.l.b16 %v2632
    %v3248 = vunpack.c.l.b16 %v2633
    %v3249 = vunpack.c.h.b16 %v2633
    %v3250 = vunpack.c.l.b16 %v2634
    %v3251 = vunpack.c.h.b16 %v2634
    %v3252 = vunpack.c.l.b16 %v2635
    %v3253 = vunpack.c.h.b16 %v2635
    %v3254 = vunpack.c.l.b16 %v2636
    %v3255 = vunpack.c.l.b16 %v2637
    %v3256 = vunpack.c.h.b16 %v2637
    %v3257 = vunpack.c.l.b16 %v2638
    %v3258 = vunpack.c.h.b16 %v2638
    %v3259 = vunpack.c.l.b16 %v2639
    %v3260 = vunpack.c.h.b16 %v2639
    %v3261 = vunpack.c.l.b16 %v2640
    %v3262 = vunpack.c.l.b16 %v2641
    %v3263 = vunpack.c.h.b16 %v2641
    %v3264 = vunpack.c.l.b16 %v2642
    %v3265 = vunpack.c.h.b16 %v2642
    %v3266 = vunpack.c.l.b16 %v2643
    %v3267 = vunpack.c.h.b16 %v2643
    %v3268 = vunpack.c.l.b16 %v2644
    %v3269 = vunpack.c.l.b16 %v2645
    %v3270 = vunpack.c.h.b16 %v2645
    %v3271 = vunpack.c.l.b16 %v2646
    %v3272 = vunpack.c.h.b16 %v2646
    %v3273 = vunpack.c.l.b16 %v2647
    %v3274 = vunpack.c.h.b16 %v2647
    %v3275 = vunpack.c.l.b16 %v2648
    %v3276 = vunpack.c.l.b16 %v2649
    %v3277 = vunpack.c.h.b16 %v2649
    %v3278 = vunpack.c.l.b16 %v2650
    %v3279 = vunpack.c.h.b16 %v2650
    %v3280 = vunpack.c.l.b16 %v2651
    %v3281 = vunpack.c.h.b16 %v2651
    %v3282 = vunpack.c.l.b16 %v2652
    %v3283 = vunpack.c.l.b16 %v2653
    %v3284 = vunpack.c.h.b16 %v2653
    %v3285 = vunpack.c.l.b16 %v2654
    %v3286 = vunpack.c.h.b16 %v2654
    %v3287 = vunpack.c.l.b16 %v2655
    %v3288 = vunpack.c.h.b16 %v2655
    %v3289 = vunpack.c.l.b16 %v2656
    %v3290 = vunpack.c.l.b16 %v2657
    %v3291 = vunpack.c.h.b16 %v2657
    %v3292 = vunpack.c.l.b16 %v2658
    %v3293 = vunpack.c.h.b16 %v2658
    %v3294 = vunpack.c.l.b16 %v2659
    %v3295 = vunpack.c.h.b16 %v2659
    %v3296 = vunpack.c.l.b16 %v2660
    %v3297 = vunpack.c.l.b16 %v2661
    %v3298 = vunpack.c.h.b16 %v2661
    %v3299 = vunpack.c.l.b16 %v2662
    %v3300 = vunpack.c.h.b16 %v2662
    %v3301 = vunpack.c.l.b16 %v2663
    %v3302 = vunpack.c.h.b16 %v2663
    %v3303 = vunpack.c.l.b16 %v2664
    %v3304 = vunpack.c.l.b16 %v2665
    %v3305 = vunpack.c.h.b16 %v2665
    %v3306 = vunpack.c.l.b16 %v2666
    %v3307 = vunpack.c.h.b16 %v2666
    %v3308 = vunpack.c.l.b16 %v2667
    %v3309 = vunpack.c.h.b16 %v2667
    %v3310 = vunpack.c.l.b16 %v2668
    %v3311 = vunpack.c.l.b16 %v2669
    %v3312 = vunpack.c.h.b16 %v2669
    %v3313 = vunpack.c.l.b16 %v2670
    %v3314 = vunpack.c.h.b16 %v2670
    %v3315 = vunpack.c.l.b16 %v2671
    %v3316 = vunpack.c.h.b16 %v2671
    %v3317 = vunpack.c.l.b16 %v2672
    %v3318 = vunpack.c.l.b16 %v2673
    %v3319 = vunpack.c.h.b16 %v2673
    %v3320 = vunpack.c.l.b16 %v2674
    %v3321 = vunpack.c.h.b16 %v2674
    %v3322 = vunpack.c.l.b16 %v2675
    %v3323 = vunpack.c.h.b16 %v2675
    %v3324 = vunpack.c.l.b16 %v2676
    %v3325 = vunpack.c.l.b16 %v2677
    %v3326 = vunpack.c.h.b16 %v2677
    %v3327 = vunpack.c.l.b16 %v2678
    %v3328 = vunpack.c.h.b16 %v2678
    %v3329 = vunpack.c.l.b16 %v2679
    %v3330 = vunpack.c.h.b16 %v2679
    %v3331 = vunpack.c.l.b16 %v2680
    %v3332 = vunpack.c.l.b16 %v2681
    %v3333 = vunpack.c.h.b16 %v2681
    %v3334 = vunpack.c.l.b16 %v2682
    %v3335 = vunpack.c.h.b16 %v2682
    %v3336 = vunpack.c.l.b16 %v2683
    %v3337 = vunpack.c.h.b16 %v2683
    %v3338 = vunpack.c.l.b16 %v2684
    %v3339 = vunpack.c.l.b16 %v2685
    %v3340 = vunpack.c.h.b16 %v2685
    %v3341 = vunpack.c.l.b16 %v2686
    %v3342 = vunpack.c.h.b16 %v2686
    %v3343 = vunpack.c.l.b16 %v2687
    %v3344 = vunpack.c.h.b16 %v2687
    %v3345 = vunpack.c.l.b16 %v2688
    %v3346 = vunpack.c.l.b16 %v2689
    %v3347 = vunpack.c.h.b16 %v2689
    %v3348 = vunpack.c.l.b16 %v2690
    %v3349 = vunpack.c.h.b16 %v2690
    %v3350 = vunpack.c.l.b16 %v2691
    %v3351 = vunpack.c.h.b16 %v2691
    %v3352 = vunpack.c.l.b16 %v2692
    %v3353 = vunpack.c.l.b16 %v2693
    %v3354 = vunpack.c.h.b16 %v2693
    %v3355 = vunpack.c.l.b16 %v2694
    %v3356 = vunpack.c.h.b16 %v2694
    %v3357 = vunpack.c.l.b16 %v2695
    %v3358 = vunpack.c.h.b16 %v2695
    %v3359 = vunpack.c.l.b16 %v2696
    %v3360 = vunpack.c.l.b16 %v2697
    %v3361 = vunpack.c.h.b16 %v2697
    %v3362 = vunpack.c.l.b16 %v2698
    %v3363 = vunpack.c.h.b16 %v2698
    %v3364 = vunpack.c.l.b16 %v2699
    %v3365 = vunpack.c.h.b16 %v2699
    %v3366 = vunpack.c.l.b16 %v2700
    %v3367 = vunpack.c.l.b16 %v2701
    %v3368 = vunpack.c.h.b16 %v2701
    %v3369 = vunpack.c.l.b16 %v2702
    %v3370 = vunpack.c.h.b16 %v2702
    %v3371 = vunpack.c.l.b16 %v2703
    %v3372 = vunpack.c.h.b16 %v2703
    %v3373 = vunpack.c.l.b16 %v2704
    %v3374 = vunpack.c.l.b16 %v2705
    %v3375 = vunpack.c.h.b16 %v2705
    %v3376 = vunpack.c.l.b16 %v2706
    %v3377 = vunpack.c.h.b16 %v2706
    %v3378 = vunpack.c.l.b16 %v2707
    %v3379 = vunpack.c.h.b16 %v2707
    %v3380 = vunpack.c.l.b16 %v2708
    %v3381 = vunpack.c.l.b16 %v2709
    %v3382 = vunpack.c.h.b16 %v2709
    %v3383 = vunpack.c.l.b16 %v2710
    %v3384 = vunpack.c.h.b16 %v2710
    %v3385 = vunpack.c.l.b16 %v2711
    %v3386 = vunpack.c.h.b16 %v2711
    %v3387 = vunpack.c.l.b16 %v2712
    %v3388 = vunpack.c.l.b16 %v2713
    %v3389 = vunpack.c.h.b16 %v2713
    %v3390 = vunpack.c.l.b16 %v2714
    %v3391 = vunpack.c.h.b16 %v2714
    %v3392 = vunpack.c.l.b16 %v2715
    %v3393 = vunpack.c.h.b16 %v2715
    %v3394 = vunpack.c.l.b16 %v2716
    %v3395 = vunpack.c.l.b16 %v2717
    %v3396 = vunpack.c.h.b16 %v2717
    %v3397 = vunpack.c.l.b16 %v2718
    %v3398 = vunpack.c.h.b16 %v2718
    %v3399 = vunpack.c.l.b16 %v2719
    %v3400 = vunpack.c.h.b16 %v2719
    %v3401 = vunpack.c.l.b16 %v2720
    %v3402 = vunpack.c.l.b16 %v2721
    %v3403 = vunpack.c.h.b16 %v2721
    %v3404 = vunpack.c.l.b16 %v2722
    %v3405 = vunpack.c.h.b16 %v2722
    %v3406 = vunpack.c.l.b16 %v2723
    %v3407 = vunpack.c.h.b16 %v2723
    %v3408 = vunpack.c.l.b16 %v2724
    %v3409 = vunpack.c.l.b16 %v2725
    %v3410 = vunpack.c.h.b16 %v2725
    %v3411 = vunpack.c.l.b16 %v2726
    %v3412 = vunpack.c.h.b16 %v2726
    %v3413 = vunpack.c.l.b16 %v2727
    %v3414 = vunpack.c.h.b16 %v2727
    %v3415 = vunpack.c.l.b16 %v2728
    %v3416 = vunpack.c.l.b16 %v2729
    %v3417 = vunpack.c.h.b16 %v2729
    %v3418 = vunpack.c.l.b16 %v2730
    %v3419 = vunpack.c.h.b16 %v2730
    %v3420 = vunpack.c.l.b16 %v2731
    %v3421 = vunpack.c.h.b16 %v2731
    %v3422 = vunpack.c.l.b16 %v2732
    %v3423 = vunpack.c.l.b16 %v2733
    %v3424 = vunpack.c.h.b16 %v2733
    %v3425 = vunpack.c.l.b16 %v2734
    %v3426 = vunpack.c.h.b16 %v2734
    %v3427 = vunpack.c.l.b16 %v2735
    %v3428 = vunpack.c.h.b16 %v2735
    %v3429 = vunpack.c.l.b16 %v2736
    %v3430 = vunpack.c.l.b16 %v2737
    %v3431 = vunpack.c.h.b16 %v2737
    %v3432 = vunpack.c.l.b16 %v2738
    %v3433 = vunpack.c.h.b16 %v2738
    %v3434 = vunpack.c.l.b16 %v2739
    %v3435 = vunpack.c.h.b16 %v2739
    %v3436 = vunpack.c.l.b16 %v2740
    %v3437 = vunpack.c.l.b16 %v2741
    %v3438 = vunpack.c.h.b16 %v2741
    %v3439 = vunpack.c.l.b16 %v2742
    %v3440 = vunpack.c.h.b16 %v2742
    %v3441 = vunpack.c.l.b16 %v2743
    %v3442 = vunpack.c.h.b16 %v2743
    %v3443 = vunpack.c.l.b16 %v2744
    %v3444 = vunpack.c.l.b16 %v2745
    %v3445 = vunpack.c.h.b16 %v2745
    %v3446 = vunpack.c.l.b16 %v2746
    %v3447 = vunpack.c.h.b16 %v2746
    %v3448 = vunpack.c.l.b16 %v2747
    %v3449 = vunpack.c.h.b16 %v2747
    %v3450 = vunpack.c.l.b16 %v2748
    %v3451 = vunpack.c.l.b16 %v2749
    %v3452 = vunpack.c.h.b16 %v2749
    %v3453 = vunpack.c.l.b16 %v2750
    %v3454 = vunpack.c.h.b16 %v2750
    %v3455 = vunpack.c.l.b16 %v2751
    %v3456 = vunpack.c.h.b16 %v2751
    %v3457 = vunpack.c.l.b16 %v2752
    %v3458 = vunpack.c.l.b16 %v2753
    %v3459 = vunpack.c.h.b16 %v2753
    %v3460 = vunpack.c.l.b16 %v2754
    %v3461 = vunpack.c.h.b16 %v2754
    %v3462 = vunpack.c.l.b16 %v2755
    %v3463 = vunpack.c.h.b16 %v2755
    %v3464 = vunpack.c.l.b16 %v2756
    %v3465 = vunpack.c.l.b16 %v2757
    %v3466 = vunpack.c.h.b16 %v2757
    %v3467 = vunpack.c.l.b16 %v2758
    %v3468 = vunpack.c.h.b16 %v2758
    %v3469 = vunpack.c.l.b16 %v2759
    %v3470 = vunpack.c.h.b16 %v2759
    %v3471 = vunpack.c.l.b16 %v2760
    %v3472 = vunpack.c.l.b16 %v2761
    %v3473 = vunpack.c.h.b16 %v2761
    %v3474 = vunpack.c.l.b16 %v2762
    %v3475 = vunpack.c.h.b16 %v2762
    %v3476 = vunpack.c.l.b16 %v2763
    %v3477 = vunpack.c.h.b16 %v2763
    %v3478 = vunpack.c.l.b16 %v2764
    %v3479 = vunpack.c.l.b16 %v2765
    %v3480 = vunpack.c.h.b16 %v2765
    %v3481 = vunpack.c.l.b16 %v2766
    %v3482 = vunpack.c.h.b16 %v2766
    %v3483 = vunpack.c.l.b16 %v2767
    %v3484 = vunpack.c.h.b16 %v2767
    %v3485 = vunpack.c.l.b16 %v2768
    %v3486 = vunpack.c.l.b16 %v2769
    %v3487 = vunpack.c.h.b16 %v2769
    %v3488 = vunpack.c.l.b16 %v2770
    %v3489 = vunpack.c.h.b16 %v2770
    %v3490 = vunpack.c.l.b16 %v2771
    %v3491 = vunpack.c.h.b16 %v2771
    %v3492 = vunpack.c.l.b16 %v2772
    %v3493 = vunpack.c.l.b16 %v2773
    %v3494 = vunpack.c.h.b16 %v2773
    %v3495 = vunpack.c.l.b16 %v2774
    %v3496 = vunpack.c.h.b16 %v2774
    %v3497 = vunpack.c.l.b16 %v2775
    %v3498 = vunpack.c.h.b16 %v2775
    %v3499 = vunpack.c.l.b16 %v2776
    %v3500 = vunpack.c.l.b16 %v2777
    %v3501 = vunpack.c.h.b16 %v2777
    %v3502 = vunpack.c.l.b16 %v2778
    %v3503 = vunpack.c.h.b16 %v2778
    %v3504 = vunpack.c.l.b16 %v2779
    %v3505 = vunpack.c.h.b16 %v2779
    %v3506 = vunpack.c.l.b16 %v2780
    %v3507 = vunpack.c.l.b16 %v2781
    %v3508 = vunpack.c.h.b16 %v2781
    %v3509 = vunpack.c.l.b16 %v2782
    %v3510 = vunpack.c.h.b16 %v2782
    %v3511 = vunpack.c.l.b16 %v2783
    %v3512 = vunpack.c.h.b16 %v2783
    %v3513 = vunpack.c.l.b16 %v2784
    %v3514 = vunpack.c.l.b16 %v2785
    %v3515 = vunpack.c.h.b16 %v2785
    %v3516 = vunpack.c.l.b16 %v2786
    %v3517 = vunpack.c.h.b16 %v2786
    %v3518 = vunpack.c.l.b16 %v2787
    %v3519 = vunpack.c.h.b16 %v2787
    %v3520 = vunpack.c.l.b16 %v2788
    %v3521 = vunpack.c.l.b16 %v2789
    %v3522 = vunpack.c.h.b16 %v2789
    %v3523 = vunpack.c.l.b16 %v2790
    %v3524 = vunpack.c.h.b16 %v2790
    %v3525 = vunpack.c.l.b16 %v2791
    %v3526 = vunpack.c.h.b16 %v2791
    %v3527 = vunpack.c.l.b16 %v2792
    %v3528 = vunpack.c.l.b16 %v2793
    %v3529 = vunpack.c.h.b16 %v2793
    %v3530 = vunpack.c.l.b16 %v2794
    %v3531 = vunpack.c.h.b16 %v2794
    %v3532 = vunpack.c.l.b16 %v2795
    %v3533 = vunpack.c.h.b16 %v2795
    %v3534 = vunpack.c.l.b16 %v2796
    %v3535 = vunpack.c.l.b16 %v2797
    %v3536 = vunpack.c.h.b16 %v2797
    %v3537 = vunpack.c.l.b16 %v2798
    %v3538 = vunpack.c.h.b16 %v2798
    %v3539 = vunpack.c.l.b16 %v2799
    %v3540 = vunpack.c.h.b16 %v2799
    %v3541 = vunpack.c.l.b16 %v2800
    %v3542 = vpack.c.b16 %v3101, %v3094
    %v3543 = vpack.c.b16 %v3102, %v3095
    %v3544 = vpack.c.b16 %v3103, %v3096
    %v3545 = vpack.c.b16 %v3104, %v3097
    %v3546 = vpack.c.b16 %v3105, %v3098
    %v3547 = vpack.c.b16 %v3106, %v3099
    %v3548 = vpack.c.b16 %v3107, %v3100
    %v3549 = vpack.c.b16 %v3115, %v3108
    %v3550 = vpack.c.b16 %v3116, %v3109
    %v3551 = vpack.c.b16 %v3117, %v3110
    %v3552 = vpack.c.b16 %v3118, %v3111
    %v3553 = vpack.c.b16 %v3119, %v3112
    %v3554 = vpack.c.b16 %v3120, %v3113
    %v3555 = vpack.c.b16 %v3121, %v3114
    %v3556 = vpack.c.b16 %v3129, %v3122
    %v3557 = vpack.c.b16 %v3130, %v3123
    %v3558 = vpack.c.b16 %v3131, %v3124
    %v3559 = vpack.c.b16 %v3132, %v3125
    %v3560 = vpack.c.b16 %v3133, %v3126
    %v3561 = vpack.c.b16 %v3134, %v3127
    %v3562 = vpack.c.b16 %v3135, %v3128
    %v3563 = vpack.c.b16 %v3143, %v3136
    %v3564 = vpack.c.b16 %v3144, %v3137
    %v3565 = vpack.c.b16 %v3145, %v3138
    %v3566 = vpack.c.b16 %v3146, %v3139
    %v3567 = vpack.c.b16 %v3147, %v3140
    %v3568 = vpack.c.b16 %v3148, %v3141
    %v3569 = vpack.c.b16 %v3149, %v3142
    %v3570 = vpack.c.b16 %v3157, %v3150
    %v3571 = vpack.c.b16 %v3158, %v3151
    %v3572 = vpack.c.b16 %v3159, %v3152
    %v3573 = vpack.c.b16 %v3160, %v3153
    %v3574 = vpack.c.b16 %v3161, %v3154
    %v3575 = vpack.c.b16 %v3162, %v3155
    %v3576 = vpack.c.b16 %v3163, %v3156
    %v3577 = vpack.c.b16 %v3171, %v3164
    %v3578 = vpack.c.b16 %v3172, %v3165
    %v3579 = vpack.c.b16 %v3173, %v3166
    %v3580 = vpack.c.b16 %v3174, %v3167
    %v3581 = vpack.c.b16 %v3175, %v3168
    %v3582 = vpack.c.b16 %v3176, %v3169
    %v3583 = vpack.c.b16 %v3177, %v3170
    %v3584 = vpack.c.b16 %v3185, %v3178
    %v3585 = vpack.c.b16 %v3186, %v3179
    %v3586 = vpack.c.b16 %v3187, %v3180
    %v3587 = vpack.c.b16 %v3188, %v3181
    %v3588 = vpack.c.b16 %v3189, %v3182
    %v3589 = vpack.c.b16 %v3190, %v3183
    %v3590 = vpack.c.b16 %v3191, %v3184
    %v3591 = vpack.c.b16 %v3199, %v3192
    %v3592 = vpack.c.b16 %v3200, %v3193
    %v3593 = vpack.c.b16 %v3201, %v3194
    %v3594 = vpack.c.b16 %v3202, %v3195
    %v3595 = vpack.c.b16 %v3203, %v3196
    %v3596 = vpack.c.b16 %v3204, %v3197
    %v3597 = vpack.c.b16 %v3205, %v3198
    %v3598 = vpack.c.b16 %v3213, %v3206
    %v3599 = vpack.c.b16 %v3214, %v3207
    %v3600 = vpack.c.b16 %v3215, %v3208
    %v3601 = vpack.c.b16 %v3216, %v3209
    %v3602 = vpack.c.b16 %v3217, %v3210
    %v3603 = vpack.c.b16 %v3218, %v3211
    %v3604 = vpack.c.b16 %v3219, %v3212
    %v3605 = vpack.c.b16 %v3227, %v3220
    %v3606 = vpack.c.b16 %v3228, %v3221
    %v3607 = vpack.c.b16 %v3229, %v3222
    %v3608 = vpack.c.b16 %v3230, %v3223
    %v3609 = vpack.c.b16 %v3231, %v3224
    %v3610 = vpack.c.b16 %v3232, %v3225
    %v3611 = vpack.c.b16 %v3233, %v3226
    %v3612 = vpack.c.b16 %v3241, %v3234
    %v3613 = vpack.c.b16 %v3242, %v3235
    %v3614 = vpack.c.b16 %v3243, %v3236
    %v3615 = vpack.c.b16 %v3244, %v3237
    %v3616 = vpack.c.b16 %v3245, %v3238
    %v3617 = vpack.c.b16 %v3246, %v3239
    %v3618 = vpack.c.b16 %v3247, %v3240
    %v3619 = vpack.c.b16 %v3255, %v3248
    %v3620 = vpack.c.b16 %v3256, %v3249
    %v3621 = vpack.c.b16 %v3257, %v3250
    %v3622 = vpack.c.b16 %v3258, %v3251
    %v3623 = vpack.c.b16 %v3259, %v3252
    %v3624 = vpack.c.b16 %v3260, %v3253
    %v3625 = vpack.c.b16 %v3261, %v3254
    %v3626 = vpack.c.b16 %v3269, %v3262
    %v3627 = vpack.c.b16 %v3270, %v3263
    %v3628 = vpack.c.b16 %v3271, %v3264
    %v3629 = vpack.c.b16 %v3272, %v3265
    %v3630 = vpack.c.b16 %v3273, %v3266
    %v3631 = vpack.c.b16 %v3274, %v3267
    %v3632 = vpack.c.b16 %v3275, %v3268
    %v3633 = vpack.c.b16 %v3283, %v3276
    %v3634 = vpack.c.b16 %v3284, %v3277
    %v3635 = vpack.c.b16 %v3285, %v3278
    %v3636 = vpack.c.b16 %v3286, %v3279
    %v3637 = vpack.c.b16 %v3287, %v3280
    %v3638 = vpack.c.b16 %v3288, %v3281
    %v3639 = vpack.c.b16 %v3289, %v3282
    %v3640 = vpack.c.b16 %v3297, %v3290
    %v3641 = vpack.c.b16 %v3298, %v3291
    %v3642 = vpack.c.b16 %v3299, %v3292
    %v3643 = vpack.c.b16 %v3300, %v3293
    %v3644 = vpack.c.b16 %v3301, %v3294
    %v3645 = vpack.c.b16 %v3302, %v3295
    %v3646 = vpack.c.b16 %v3303, %v3296
    %v3647 = vpack.c.b16 %v3311, %v3304
    %v3648 = vpack.c.b16 %v3312, %v3305
    %v3649 = vpack.c.b16 %v3313, %v3306
    %v3650 = vpack.c.b16 %v3314, %v3307
    %v3651 = vpack.c.b16 %v3315, %v3308
    %v3652 = vpack.c.b16 %v3316, %v3309
    %v3653 = vpack.c.b16 %v3317, %v3310
    %v3654 = vpack.c.b16 %v3325, %v3318
    %v3655 = vpack.c.b16 %v3326, %v3319
    %v3656 = vpack.c.b16 %v3327, %v3320
    %v3657 = vpack.c.b16 %v3328, %v3321
    %v3658 = vpack.c.b16 %v3329, %v3322
    %v3659 = vpack.c.b16 %v3330, %v3323
    %v3660 = vpack.c.b16 %v3331, %v3324
    %v3661 = vpack.c.b16 %v3339, %v3332
    %v3662 = vpack.c.b16 %v3340, %v3333
    %v3663 = vpack.c.b16 %v3341, %v3334
    %v3664 = vpack.c.b16 %v3342, %v3335
    %v3665 = vpack.c.b16 %v3343, %v3336
    %v3666 = vpack.c.b16 %v3344, %v3337
    %v3667 = vpack.c.b16 %v3345, %v3338
    %v3668 = vpack.c.b16 %v3353, %v3346
    %v3669 = vpack.c.b16 %v3354, %v3347
    %v3670 = vpack.c.b16 %v3355, %v3348
    %v3671 = vpack.c.b16 %v3356, %v3349
    %v3672 = vpack.c.b16 %v3357, %v3350
    %v3673 = vpack.c.b16 %v3358, %v3351
    %v3674 = vpack.c.b16 %v3359, %v3352
    %v3675 = vpack.c.b16 %v3367, %v3360
    %v3676 = vpack.c.b16 %v3368, %v3361
    %v3677 = vpack.c.b16 %v3369, %v3362
    %v3678 = vpack.c.b16 %v3370, %v3363
    %v3679 = vpack.c.b16 %v3371, %v3364
    %v3680 = vpack.c.b16 %v3372, %v3365
    %v3681 = vpack.c.b16 %v3373, %v3366
    %v3682 = vpack.c.b16 %v3381, %v3374
    %v3683 = vpack.c.b16 %v3382, %v3375
    %v3684 = vpack.c.b16 %v3383, %v3376
    %v3685 = vpack.c.b16 %v3384, %v3377
    %v3686 = vpack.c.b16 %v3385, %v3378
    %v3687 = vpack.c.b16 %v3386, %v3379
    %v3688 = vpack.c.b16 %v3387, %v3380
    %v3689 = vpack.c.b16 %v3395, %v3388
    %v3690 = vpack.c.b16 %v3396, %v3389
    %v3691 = vpack.c.b16 %v3397, %v3390
    %v3692 = vpack.c.b16 %v3398, %v3391
    %v3693 = vpack.c.b16 %v3399, %v3392
    %v3694 = vpack.c.b16 %v3400, %v3393
    %v3695 = vpack.c.b16 %v3401, %v3394
    %v3696 = vpack.c.b16 %v3409, %v3402
    %v3697 = vpack.c.b16 %v3410, %v3403
    %v3698 = vpack.c.b16 %v3411, %v3404
    %v3699 = vpack.c.b16 %v3412, %v3405
    %v3700 = vpack.c.b16 %v3413, %v3406
    %v3701 = vpack.c.b16 %v3414, %v3407
    %v3702 = vpack.c.b16 %v3415, %v3408
    %v3703 = vpack.c.b16 %v3423, %v3416
    %v3704 = vpack.c.b16 %v3424, %v3417
    %v3705 = vpack.c.b16 %v3425, %v3418
    %v3706 = vpack.c.b16 %v3426, %v3419
    %v3707 = vpack.c.b16 %v3427, %v3420
    %v3708 = vpack.c.b16 %v3428, %v3421
    %v3709 = vpack.c.b16 %v3429, %v3422
    %v3710 = vpack.c.b16 %v3437, %v3430
    %v3711 = vpack.c.b16 %v3438, %v3431
    %v3712 = vpack.c.b16 %v3439, %v3432
    %v3713 = vpack.c.b16 %v3440, %v3433
    %v3714 = vpack.c.b16 %v3441, %v3434
    %v3715 = vpack.c.b16 %v3442, %v3435
    %v3716 = vpack.c.b16 %v3443, %v3436
    %v3717 = vpack.c.b16 %v3451, %v3444
    %v3718 = vpack.c.b16 %v3452, %v3445
    %v3719 = vpack.c.b16 %v3453, %v3446
    %v3720 = vpack.c.b16 %v3454, %v3447
    %v3721 = vpack.c.b16 %v3455, %v3448
    %v3722 = vpack.c.b16 %v3456, %v3449
    %v3723 = vpack.c.b16 %v3457, %v3450
    %v3724 = vpack.c.b16 %v3465, %v3458
    %v3725 = vpack.c.b16 %v3466, %v3459
    %v3726 = vpack.c.b16 %v3467, %v3460
    %v3727 = vpack.c.b16 %v3468, %v3461
    %v3728 = vpack.c.b16 %v3469, %v3462
    %v3729 = vpack.c.b16 %v3470, %v3463
    %v3730 = vpack.c.b16 %v3471, %v3464
    %v3731 = vpack.c.b16 %v3479, %v3472
    %v3732 = vpack.c.b16 %v3480, %v3473
    %v3733 = vpack.c.b16 %v3481, %v3474
    %v3734 = vpack.c.b16 %v3482, %v3475
    %v3735 = vpack.c.b16 %v3483, %v3476
    %v3736 = vpack.c.b16 %v3484, %v3477
    %v3737 = vpack.c.b16 %v3485, %v3478
    %v3738 = vpack.c.b16 %v3493, %v3486
    %v3739 = vpack.c.b16 %v3494, %v3487
    %v3740 = vpack.c.b16 %v3495, %v3488
    %v3741 = vpack.c.b16 %v3496, %v3489
    %v3742 = vpack.c.b16 %v3497, %v3490
    %v3743 = vpack.c.b16 %v3498, %v3491
    %v3744 = vpack.c.b16 %v3499, %v3492
    %v3745 = vpack.c.b16 %v3507, %v3500
    %v3746 = vpack.c.b16 %v3508, %v3501
    %v3747 = vpack.c.b16 %v3509, %v3502
    %v3748 = vpack.c.b16 %v3510, %v3503
    %v3749 = vpack.c.b16 %v3511, %v3504
    %v3750 = vpack.c.b16 %v3512, %v3505
    %v3751 = vpack.c.b16 %v3513, %v3506
    %v3752 = vpack.c.b16 %v3521, %v3514
    %v3753 = vpack.c.b16 %v3522, %v3515
    %v3754 = vpack.c.b16 %v3523, %v3516
    %v3755 = vpack.c.b16 %v3524, %v3517
    %v3756 = vpack.c.b16 %v3525, %v3518
    %v3757 = vpack.c.b16 %v3526, %v3519
    %v3758 = vpack.c.b16 %v3527, %v3520
    %v3759 = vpack.c.b16 %v3535, %v3528
    %v3760 = vpack.c.b16 %v3536, %v3529
    %v3761 = vpack.c.b16 %v3537, %v3530
    %v3762 = vpack.c.b16 %v3538, %v3531
    %v3763 = vpack.c.b16 %v3539, %v3532
    %v3764 = vpack.c.b16 %v3540, %v3533
    %v3765 = vpack.c.b16 %v3541, %v3534
    %3990 = vmatprep.subr.bf16.mxu0 %v3592
    %3991 = vmatpush1.bf16.msra.mxu0 %v3591
    %3992 = vmatprep.subr.bf16.mxu0 %v3585
    %3993 = vmatpush1.bf16.msra.mxu0 %v3584
    %3994 = vmatprep.subr.bf16.mxu0 %v3578
    %3995 = vmatpush1.bf16.msra.mxu0 %v3577
    %3996 = vmatprep.subr.bf16.mxu0 %v3571
    %3997 = vmatpush1.bf16.msra.mxu0 %v3570
    %3998 = vmatprep.subr.bf16.mxu0 %v3564
    %3999 = vmatpush1.bf16.msra.mxu0 %v3563
    %4000 = vmatprep.subr.bf16.mxu0 %v3557
    %4001 = vmatpush1.bf16.msra.mxu0 %v3556
    %4002 = vmatprep.subr.bf16.mxu0 %v3550
    %4003 = vmatpush1.bf16.msra.mxu0 %v3549
    %4004 = vmatprep.subr.bf16.mxu0 %v3543
    %4005 = vmatpush1.bf16.msra.mxu0 %v3542
    %4006 = vmatprep.subr.bf16.mxu0 %v3648
    %4007 = vmatpush2.bf16.msra.mxu0 %v3647
    %4008 = vmatprep.subr.bf16.mxu0 %v3641
    %4009 = vmatpush2.bf16.msra.mxu0 %v3640
    %4010 = vmatprep.subr.bf16.mxu0 %v3634
    %4011 = vmatpush2.bf16.msra.mxu0 %v3633
    %4012 = vmatprep.subr.bf16.mxu0 %v3627
    %4013 = vmatpush2.bf16.msra.mxu0 %v3626
    %4014 = vmatprep.subr.bf16.mxu0 %v3620
    %4015 = vmatpush2.bf16.msra.mxu0 %v3619
    %4016 = vmatprep.subr.bf16.mxu0 %v3613
    %4017 = vmatpush2.bf16.msra.mxu0 %v3612
    %4018 = vmatprep.subr.bf16.mxu0 %v3606
    %4019 = vmatpush2.bf16.msra.mxu0 %v3605
    %4020 = vmatprep.subr.bf16.mxu0 %v3599
    %4021 = vmatpush2.bf16.msra.mxu0 %v3598
    %4022 = vmatprep.mubr.bf16.mxu0 %v2542
    %4023 = vmatmul.mubr.bf16.gmra.mxu0 %v2541
    %v4024 = vpop.f32.mrf.mxu0
    %v4025 = vadd.f32 %v2806, %v4024
    %v4026 = vpop.f32.mrf.mxu0
    %v4027 = vadd.f32 %v2810, %v4026
    %v4028 = vpop.f32.mrf.mxu0
    %v4029 = vadd.f32 %v2806, %v4028
    %v4030 = vpop.f32.mrf.mxu0
    %v4031 = vadd.f32 %v2810, %v4030
    %4032 = vdwg.mxu0
    %4033 = vmatprep.subr.bf16.mxu0 %v3704
    %4034 = vmatpush1.bf16.msra.mxu0 %v3703
    %4035 = vmatprep.subr.bf16.mxu0 %v3697
    %4036 = vmatpush1.bf16.msra.mxu0 %v3696
    %4037 = vmatprep.subr.bf16.mxu0 %v3690
    %4038 = vmatpush1.bf16.msra.mxu0 %v3689
    %4039 = vmatprep.subr.bf16.mxu0 %v3683
    %4040 = vmatpush1.bf16.msra.mxu0 %v3682
    %4041 = vmatprep.subr.bf16.mxu0 %v3676
    %4042 = vmatpush1.bf16.msra.mxu0 %v3675
    %4043 = vmatprep.subr.bf16.mxu0 %v3669
    %4044 = vmatpush1.bf16.msra.mxu0 %v3668
    %4045 = vmatprep.subr.bf16.mxu0 %v3662
    %4046 = vmatpush1.bf16.msra.mxu0 %v3661
    %4047 = vmatprep.subr.bf16.mxu0 %v3655
    %4048 = vmatpush1.bf16.msra.mxu0 %v3654
    %4049 = vmatprep.subr.bf16.mxu0 %v3760
    %4050 = vmatpush2.bf16.msra.mxu0 %v3759
    %4051 = vmatprep.subr.bf16.mxu0 %v3753
    %4052 = vmatpush2.bf16.msra.mxu0 %v3752
    %4053 = vmatprep.subr.bf16.mxu0 %v3746
    %4054 = vmatpush2.bf16.msra.mxu0 %v3745
    %4055 = vmatprep.subr.bf16.mxu0 %v3739
    %4056 = vmatpush2.bf16.msra.mxu0 %v3738
    %4057 = vmatprep.subr.bf16.mxu0 %v3732
    %4058 = vmatpush2.bf16.msra.mxu0 %v3731
    %4059 = vmatprep.subr.bf16.mxu0 %v3725
    %4060 = vmatpush2.bf16.msra.mxu0 %v3724
    %4061 = vmatprep.subr.bf16.mxu0 %v3718
    %4062 = vmatpush2.bf16.msra.mxu0 %v3717
    %4063 = vmatprep.subr.bf16.mxu0 %v3711
    %4064 = vmatpush2.bf16.msra.mxu0 %v3710
    %4065 = vmatprep.mubr.bf16.mxu0 %v2544
    %4066 = vmatmul.mubr.bf16.gmra.mxu0 %v2543
    %v4067 = vpop.f32.mrf.mxu0
    %v4068 = vadd.f32 %v4025, %v4067
    %v4069 = vpop.f32.mrf.mxu0
    %v4070 = vadd.f32 %v4027, %v4069
    %v4071 = vpop.f32.mrf.mxu0
    %v4072 = vadd.f32 %v4029, %v4071
    %v4073 = vpop.f32.mrf.mxu0
    %v4074 = vadd.f32 %v4031, %v4073
    %4075 = vdwg.mxu0
    %4076 = vmatprep.subr.bf16.mxu0 %v3594
    %4077 = vmatpush1.bf16.msra.mxu0 %v3593
    %4078 = vmatprep.subr.bf16.mxu0 %v3587
    %4079 = vmatpush1.bf16.msra.mxu0 %v3586
    %4080 = vmatprep.subr.bf16.mxu0 %v3580
    %4081 = vmatpush1.bf16.msra.mxu0 %v3579
    %4082 = vmatprep.subr.bf16.mxu0 %v3573
    %4083 = vmatpush1.bf16.msra.mxu0 %v3572
    %4084 = vmatprep.subr.bf16.mxu0 %v3566
    %4085 = vmatpush1.bf16.msra.mxu0 %v3565
    %4086 = vmatprep.subr.bf16.mxu0 %v3559
    %4087 = vmatpush1.bf16.msra.mxu0 %v3558
    %4088 = vmatprep.subr.bf16.mxu0 %v3552
    %4089 = vmatpush1.bf16.msra.mxu0 %v3551
    %4090 = vmatprep.subr.bf16.mxu0 %v3545
    %4091 = vmatpush1.bf16.msra.mxu0 %v3544
    %4092 = vmatprep.subr.bf16.mxu0 %v3650
    %4093 = vmatpush2.bf16.msra.mxu0 %v3649
    %4094 = vmatprep.subr.bf16.mxu0 %v3643
    %4095 = vmatpush2.bf16.msra.mxu0 %v3642
    %4096 = vmatprep.subr.bf16.mxu0 %v3636
    %4097 = vmatpush2.bf16.msra.mxu0 %v3635
    %4098 = vmatprep.subr.bf16.mxu0 %v3629
    %4099 = vmatpush2.bf16.msra.mxu0 %v3628
    %4100 = vmatprep.subr.bf16.mxu0 %v3622
    %4101 = vmatpush2.bf16.msra.mxu0 %v3621
    %4102 = vmatprep.subr.bf16.mxu0 %v3615
    %4103 = vmatpush2.bf16.msra.mxu0 %v3614
    %4104 = vmatprep.subr.bf16.mxu0 %v3608
    %4105 = vmatpush2.bf16.msra.mxu0 %v3607
    %4106 = vmatprep.subr.bf16.mxu0 %v3601
    %4107 = vmatpush2.bf16.msra.mxu0 %v3600
    %4108 = vmatprep.mubr.bf16.mxu0 %v2542
    %4109 = vmatmul.mubr.bf16.gmra.mxu0 %v2541
    %v4110 = vpop.f32.mrf.mxu0
    %v4111 = vadd.f32 %v2814, %v4110
    %v4112 = vpop.f32.mrf.mxu0
    %v4113 = vadd.f32 %v2818, %v4112
    %v4114 = vpop.f32.mrf.mxu0
    %v4115 = vadd.f32 %v2814, %v4114
    %v4116 = vpop.f32.mrf.mxu0
    %v4117 = vadd.f32 %v2818, %v4116
    %4118 = vdwg.mxu0
    %4119 = vmatprep.subr.bf16.mxu0 %v3706
    %4120 = vmatpush1.bf16.msra.mxu0 %v3705
    %4121 = vmatprep.subr.bf16.mxu0 %v3699
    %4122 = vmatpush1.bf16.msra.mxu0 %v3698
    %4123 = vmatprep.subr.bf16.mxu0 %v3692
    %4124 = vmatpush1.bf16.msra.mxu0 %v3691
    %4125 = vmatprep.subr.bf16.mxu0 %v3685
    %4126 = vmatpush1.bf16.msra.mxu0 %v3684
    %4127 = vmatprep.subr.bf16.mxu0 %v3678
    %4128 = vmatpush1.bf16.msra.mxu0 %v3677
    %4129 = vmatprep.subr.bf16.mxu0 %v3671
    %4130 = vmatpush1.bf16.msra.mxu0 %v3670
    %4131 = vmatprep.subr.bf16.mxu0 %v3664
    %4132 = vmatpush1.bf16.msra.mxu0 %v3663
    %4133 = vmatprep.subr.bf16.mxu0 %v3657
    %4134 = vmatpush1.bf16.msra.mxu0 %v3656
    %4135 = vmatprep.subr.bf16.mxu0 %v3762
    %4136 = vmatpush2.bf16.msra.mxu0 %v3761
    %4137 = vmatprep.subr.bf16.mxu0 %v3755
    %4138 = vmatpush2.bf16.msra.mxu0 %v3754
    %4139 = vmatprep.subr.bf16.mxu0 %v3748
    %4140 = vmatpush2.bf16.msra.mxu0 %v3747
    %4141 = vmatprep.subr.bf16.mxu0 %v3741
    %4142 = vmatpush2.bf16.msra.mxu0 %v3740
    %4143 = vmatprep.subr.bf16.mxu0 %v3734
    %4144 = vmatpush2.bf16.msra.mxu0 %v3733
    %4145 = vmatprep.subr.bf16.mxu0 %v3727
    %4146 = vmatpush2.bf16.msra.mxu0 %v3726
    %4147 = vmatprep.subr.bf16.mxu0 %v3720
    %4148 = vmatpush2.bf16.msra.mxu0 %v3719
    %4149 = vmatprep.subr.bf16.mxu0 %v3713
    %4150 = vmatpush2.bf16.msra.mxu0 %v3712
    %4151 = vmatprep.mubr.bf16.mxu0 %v2544
    %4152 = vmatmul.mubr.bf16.gmra.mxu0 %v2543
    %v4153 = vpop.f32.mrf.mxu0
    %v4154 = vadd.f32 %v4111, %v4153
    %v4155 = vpop.f32.mrf.mxu0
    %v4156 = vadd.f32 %v4113, %v4155
    %v4157 = vpop.f32.mrf.mxu0
    %v4158 = vadd.f32 %v4115, %v4157
    %v4159 = vpop.f32.mrf.mxu0
    %v4160 = vadd.f32 %v4117, %v4159
    %4161 = vdwg.mxu0
    %4162 = vmatprep.subr.bf16.mxu0 %v3596
    %4163 = vmatpush1.bf16.msra.mxu0 %v3595
    %4164 = vmatprep.subr.bf16.mxu0 %v3589
    %4165 = vmatpush1.bf16.msra.mxu0 %v3588
    %4166 = vmatprep.subr.bf16.mxu0 %v3582
    %4167 = vmatpush1.bf16.msra.mxu0 %v3581
    %4168 = vmatprep.subr.bf16.mxu0 %v3575
    %4169 = vmatpush1.bf16.msra.mxu0 %v3574
    %4170 = vmatprep.subr.bf16.mxu0 %v3568
    %4171 = vmatpush1.bf16.msra.mxu0 %v3567
    %4172 = vmatprep.subr.bf16.mxu0 %v3561
    %4173 = vmatpush1.bf16.msra.mxu0 %v3560
    %4174 = vmatprep.subr.bf16.mxu0 %v3554
    %4175 = vmatpush1.bf16.msra.mxu0 %v3553
    %4176 = vmatprep.subr.bf16.mxu0 %v3547
    %4177 = vmatpush1.bf16.msra.mxu0 %v3546
    %4178 = vmatprep.subr.bf16.mxu0 %v3652
    %4179 = vmatpush2.bf16.msra.mxu0 %v3651
    %4180 = vmatprep.subr.bf16.mxu0 %v3645
    %4181 = vmatpush2.bf16.msra.mxu0 %v3644
    %4182 = vmatprep.subr.bf16.mxu0 %v3638
    %4183 = vmatpush2.bf16.msra.mxu0 %v3637
    %4184 = vmatprep.subr.bf16.mxu0 %v3631
    %4185 = vmatpush2.bf16.msra.mxu0 %v3630
    %4186 = vmatprep.subr.bf16.mxu0 %v3624
    %4187 = vmatpush2.bf16.msra.mxu0 %v3623
    %4188 = vmatprep.subr.bf16.mxu0 %v3617
    %4189 = vmatpush2.bf16.msra.mxu0 %v3616
    %4190 = vmatprep.subr.bf16.mxu0 %v3610
    %4191 = vmatpush2.bf16.msra.mxu0 %v3609
    %4192 = vmatprep.subr.bf16.mxu0 %v3603
    %4193 = vmatpush2.bf16.msra.mxu0 %v3602
    %4194 = vmatprep.mubr.bf16.mxu0 %v2542
    %4195 = vmatmul.mubr.bf16.gmra.mxu0 %v2541
    %v4196 = vpop.f32.mrf.mxu0
    %v4197 = vadd.f32 %v2822, %v4196
    %v4198 = vpop.f32.mrf.mxu0
    %v4199 = vadd.f32 %v2826, %v4198
    %v4200 = vpop.f32.mrf.mxu0
    %v4201 = vadd.f32 %v2822, %v4200
    %v4202 = vpop.f32.mrf.mxu0
    %v4203 = vadd.f32 %v2826, %v4202
    %4204 = vdwg.mxu0
    %4205 = vmatprep.subr.bf16.mxu0 %v3708
    %4206 = vmatpush1.bf16.msra.mxu0 %v3707
    %4207 = vmatprep.subr.bf16.mxu0 %v3701
    %4208 = vmatpush1.bf16.msra.mxu0 %v3700
    %4209 = vmatprep.subr.bf16.mxu0 %v3694
    %4210 = vmatpush1.bf16.msra.mxu0 %v3693
    %4211 = vmatprep.subr.bf16.mxu0 %v3687
    %4212 = vmatpush1.bf16.msra.mxu0 %v3686
    %4213 = vmatprep.subr.bf16.mxu0 %v3680
    %4214 = vmatpush1.bf16.msra.mxu0 %v3679
    %4215 = vmatprep.subr.bf16.mxu0 %v3673
    %4216 = vmatpush1.bf16.msra.mxu0 %v3672
    %4217 = vmatprep.subr.bf16.mxu0 %v3666
    %4218 = vmatpush1.bf16.msra.mxu0 %v3665
    %4219 = vmatprep.subr.bf16.mxu0 %v3659
    %4220 = vmatpush1.bf16.msra.mxu0 %v3658
    %4221 = vmatprep.subr.bf16.mxu0 %v3764
    %4222 = vmatpush2.bf16.msra.mxu0 %v3763
    %4223 = vmatprep.subr.bf16.mxu0 %v3757
    %4224 = vmatpush2.bf16.msra.mxu0 %v3756
    %4225 = vmatprep.subr.bf16.mxu0 %v3750
    %4226 = vmatpush2.bf16.msra.mxu0 %v3749
    %4227 = vmatprep.subr.bf16.mxu0 %v3743
    %4228 = vmatpush2.bf16.msra.mxu0 %v3742
    %4229 = vmatprep.subr.bf16.mxu0 %v3736
    %4230 = vmatpush2.bf16.msra.mxu0 %v3735
    %4231 = vmatprep.subr.bf16.mxu0 %v3729
    %4232 = vmatpush2.bf16.msra.mxu0 %v3728
    %4233 = vmatprep.subr.bf16.mxu0 %v3722
    %4234 = vmatpush2.bf16.msra.mxu0 %v3721
    %4235 = vmatprep.subr.bf16.mxu0 %v3715
    %4236 = vmatpush2.bf16.msra.mxu0 %v3714
    %4237 = vmatprep.mubr.bf16.mxu0 %v2544
    %4238 = vmatmul.mubr.bf16.gmra.mxu0 %v2543
    %v4239 = vpop.f32.mrf.mxu0
    %v4240 = vadd.f32 %v4197, %v4239
    %v4241 = vpop.f32.mrf.mxu0
    %v4242 = vadd.f32 %v4199, %v4241
    %v4243 = vpop.f32.mrf.mxu0
    %v4244 = vadd.f32 %v4201, %v4243
    %v4245 = vpop.f32.mrf.mxu0
    %v4246 = vadd.f32 %v4203, %v4245
    %4247 = vdwg.mxu0
    %4248 = vmatprep.subr.bf16.mxu0 0
    %4249 = vmatpush1.bf16.msra.mxu0 %v3597
    %4250 = vmatprep.subr.bf16.mxu0 0
    %4251 = vmatpush1.bf16.msra.mxu0 %v3590
    %4252 = vmatprep.subr.bf16.mxu0 0
    %4253 = vmatpush1.bf16.msra.mxu0 %v3583
    %4254 = vmatprep.subr.bf16.mxu0 0
    %4255 = vmatpush1.bf16.msra.mxu0 %v3576
    %4256 = vmatprep.subr.bf16.mxu0 0
    %4257 = vmatpush1.bf16.msra.mxu0 %v3569
    %4258 = vmatprep.subr.bf16.mxu0 0
    %4259 = vmatpush1.bf16.msra.mxu0 %v3562
    %4260 = vmatprep.subr.bf16.mxu0 0
    %4261 = vmatpush1.bf16.msra.mxu0 %v3555
    %4262 = vmatprep.subr.bf16.mxu0 0
    %4263 = vmatpush1.bf16.msra.mxu0 %v3548
    %4264 = vmatprep.subr.bf16.mxu0 0
    %4265 = vmatpush2.bf16.msra.mxu0 %v3653
    %4266 = vmatprep.subr.bf16.mxu0 0
    %4267 = vmatpush2.bf16.msra.mxu0 %v3646
    %4268 = vmatprep.subr.bf16.mxu0 0
    %4269 = vmatpush2.bf16.msra.mxu0 %v3639
    %4270 = vmatprep.subr.bf16.mxu0 0
    %4271 = vmatpush2.bf16.msra.mxu0 %v3632
    %4272 = vmatprep.subr.bf16.mxu0 0
    %4273 = vmatpush2.bf16.msra.mxu0 %v3625
    %4274 = vmatprep.subr.bf16.mxu0 0
    %4275 = vmatpush2.bf16.msra.mxu0 %v3618
    %4276 = vmatprep.subr.bf16.mxu0 0
    %4277 = vmatpush2.bf16.msra.mxu0 %v3611
    %4278 = vmatprep.subr.bf16.mxu0 0
    %4279 = vmatpush2.bf16.msra.mxu0 %v3604
    %4280 = vmatprep.mubr.bf16.mxu0 %v2542
    %4281 = vmatmul.mubr.bf16.gmra.mxu0 %v2541
    %v4282 = vpop.f32.mrf.mxu0
    %v4283 = vadd.f32 %v2830, %v4282
    %v4284 = vpop.f32.mrf.mxu0
    %v4285 = vpop.f32.mrf.mxu0
    %v4286 = vadd.f32 %v2830, %v4285
    %v4287 = vpop.f32.mrf.mxu0
    %4288 = vdwg.mxu0
    %4289 = vmatprep.subr.bf16.mxu0 0
    %4290 = vmatpush1.bf16.msra.mxu0 %v3709
    %4291 = vmatprep.subr.bf16.mxu0 0
    %4292 = vmatpush1.bf16.msra.mxu0 %v3702
    %4293 = vmatprep.subr.bf16.mxu0 0
    %4294 = vmatpush1.bf16.msra.mxu0 %v3695
    %4295 = vmatprep.subr.bf16.mxu0 0
    %4296 = vmatpush1.bf16.msra.mxu0 %v3688
    %4297 = vmatprep.subr.bf16.mxu0 0
    %4298 = vmatpush1.bf16.msra.mxu0 %v3681
    %4299 = vmatprep.subr.bf16.mxu0 0
    %4300 = vmatpush1.bf16.msra.mxu0 %v3674
    %4301 = vmatprep.subr.bf16.mxu0 0
    %4302 = vmatpush1.bf16.msra.mxu0 %v3667
    %4303 = vmatprep.subr.bf16.mxu0 0
    %4304 = vmatpush1.bf16.msra.mxu0 %v3660
    %4305 = vmatprep.subr.bf16.mxu0 0
    %4306 = vmatpush2.bf16.msra.mxu0 %v3765
    %4307 = vmatprep.subr.bf16.mxu0 0
    %4308 = vmatpush2.bf16.msra.mxu0 %v3758
    %4309 = vmatprep.subr.bf16.mxu0 0
    %4310 = vmatpush2.bf16.msra.mxu0 %v3751
    %4311 = vmatprep.subr.bf16.mxu0 0
    %4312 = vmatpush2.bf16.msra.mxu0 %v3744
    %4313 = vmatprep.subr.bf16.mxu0 0
    %4314 = vmatpush2.bf16.msra.mxu0 %v3737
    %4315 = vmatprep.subr.bf16.mxu0 0
    %4316 = vmatpush2.bf16.msra.mxu0 %v3730
    %4317 = vmatprep.subr.bf16.mxu0 0
    %4318 = vmatpush2.bf16.msra.mxu0 %v3723
    %4319 = vmatprep.subr.bf16.mxu0 0
    %4320 = vmatpush2.bf16.msra.mxu0 %v3716
    %4321 = vmatprep.mubr.bf16.mxu0 %v2544
    %4322 = vmatmul.mubr.bf16.gmra.mxu0 %v2543
    %v4323 = vpop.f32.mrf.mxu0
    %v4324 = vadd.f32 %v4283, %v4323
    %v4325 = vpop.f32.mrf.mxu0
    %v4326 = vpop.f32.mrf.mxu0
    %v4327 = vadd.f32 %v4286, %v4326
    %v4328 = vpop.f32.mrf.mxu0
    %4329 = vdwg.mxu0
    %v4330 = vmul.f32 %v4068, 0.5
    %v4331 = vmul.f32 %v4070, 0.5
    %v4332 = vmul.f32 %v4154, 0.5
    %v4333 = vmul.f32 %v4156, 0.5
    %v4334 = vmul.f32 %v4240, 0.5
    %v4335 = vmul.f32 %v4242, 0.5
    %v4336 = vmul.f32 %v4324, 0.5
    %v4337 = vmul.f32 %v4072, 0.5
    %v4338 = vmul.f32 %v4074, 0.5
    %v4339 = vmul.f32 %v4158, 0.5
    %v4340 = vmul.f32 %v4160, 0.5
    %v4341 = vmul.f32 %v4244, 0.5
    %v4342 = vmul.f32 %v4246, 0.5
    %v4343 = vmul.f32 %v4327, 0.5
    %v4344 = vtanh.pop %v4330
    %v4345 = vtanh.pop %v4331
    %v4346 = vtanh.pop %v4332
    %v4347 = vtanh.pop %v4333
    %v4348 = vtanh.pop %v4334
    %v4349 = vtanh.pop %v4335
    %v4350 = vtanh.pop %v4336
    %v4351 = vtanh.pop %v4337
    %v4352 = vtanh.pop %v4338
    %v4353 = vtanh.pop %v4339
    %v4354 = vtanh.pop %v4340
    %v4355 = vtanh.pop %v4341
    %v4356 = vtanh.pop %v4342
    %v4357 = vtanh.pop %v4343
    %v4358 = vmul.f32 %v4344, 0.5
    %v4359 = vmul.f32 %v4345, 0.5
    %v4360 = vmul.f32 %v4346, 0.5
    %v4361 = vmul.f32 %v4347, 0.5
    %v4362 = vmul.f32 %v4348, 0.5
    %v4363 = vmul.f32 %v4349, 0.5
    %v4364 = vmul.f32 %v4350, 0.5
    %v4365 = vmul.f32 %v4351, 0.5
    %v4366 = vmul.f32 %v4352, 0.5
    %v4367 = vmul.f32 %v4353, 0.5
    %v4368 = vmul.f32 %v4354, 0.5
    %v4369 = vmul.f32 %v4355, 0.5
    %v4370 = vmul.f32 %v4356, 0.5
    %v4371 = vmul.f32 %v4357, 0.5
    %v4372 = vadd.f32 %v4358, 0.5
    %v4373 = vadd.f32 %v4359, 0.5
    %v4374 = vadd.f32 %v4360, 0.5
    %v4375 = vadd.f32 %v4361, 0.5
    %v4376 = vadd.f32 %v4362, 0.5
    %v4377 = vadd.f32 %v4363, 0.5
    %v4378 = vadd.f32 %v4364, 0.5
    %v4379 = vadd.f32 %v4365, 0.5
    %v4380 = vadd.f32 %v4366, 0.5
    %v4381 = vadd.f32 %v4367, 0.5
    %v4382 = vadd.f32 %v4368, 0.5
    %v4383 = vadd.f32 %v4369, 0.5
    %v4384 = vadd.f32 %v4370, 0.5
    %v4385 = vadd.f32 %v4371, 0.5
    %v4386 = vpack.c.bf16 %v4379, %v4372
    %v4387 = vpack.c.bf16 %v4380, %v4373
    %v4388 = vpack.c.bf16 %v4381, %v4374
    %v4389 = vpack.c.bf16 %v4382, %v4375
    %v4390 = vpack.c.bf16 %v4383, %v4376
    %v4391 = vpack.c.bf16 %v4384, %v4377
    %v4392 = vpack.c.bf16 %v4385, %v4378
    %v4400 = vunpack.c.l.b16 %v4386
    %v4401 = vunpack.c.l.b16 %v4387
    %v4402 = vunpack.c.l.b16 %v4388
    %v4403 = vunpack.c.l.b16 %v4389
    %v4404 = vunpack.c.l.b16 %v4390
    %v4405 = vunpack.c.l.b16 %v4391
    %v4406 = vunpack.c.l.b16 %v4392
    %v4407 = vunpack.c.h.b16 %v4386
    %v4408 = vunpack.c.h.b16 %v4387
    %v4409 = vunpack.c.h.b16 %v4388
    %v4410 = vunpack.c.h.b16 %v4389
    %v4411 = vunpack.c.h.b16 %v4390
    %v4412 = vunpack.c.h.b16 %v4391
    %v4413 = vunpack.c.h.b16 %v4392
    %v4414 = vpack.c.b16 %v4401, %v4400
    %v4415 = vpack.c.b16 %v4403, %v4402
    %v4416 = vpack.c.b16 %v4405, %v4404
    %v4417 = vpack.c.b16 %v4406, %v4406
    %v4418 = vpack.c.b16 %v4408, %v4407
    %v4419 = vpack.c.b16 %v4410, %v4409
    %v4420 = vpack.c.b16 %v4412, %v4411
    %v4421 = vpack.c.b16 %v4413, %v4413
    %4430 = vst [vmem:[#allocation14] sm:$0xff] %v4414
    %4431 = vst [vmem:[#allocation14 + $0x8] sm:$0xff] %v4415
    %4432 = vst [vmem:[#allocation14 + $0x10] sm:$0xff] %v4416
    %4433 = vst [vmem:[#allocation14 + $0x18] sm:$0xf] %v4417
    %4434 = vst [vmem:[#allocation14 + $0x1c] sm:$0xff] %v4418
    %4435 = vst [vmem:[#allocation14 + $0x24] sm:$0xff] %v4419
    %4436 = vst [vmem:[#allocation14 + $0x2c] sm:$0xff] %v4420
    %4437 = vst [vmem:[#allocation14 + $0x34] sm:$0xf] %v4421
    // Predicated region
    $region70: #{tpu_custom_call.1} parent=1 // pred_check
      _
    $region71: #{tpu_custom_call.1} parent=1 // pred_check_branch
      %4439 = sbr.rel (0) target = $region73
    $region72: #{tpu_custom_call.1} parent=1 // pred_region
      %s4441 = ssub.s32 896, 896
      %4442 = vsyncadd [#allocation4], %s4441
      %s4443 = sshll.u32 [#allocation14], 4
      %s4444 = int_to_ptr.vmem [resolvable:$true] %s4443
      %4449 = dma.vmem_to_hbm [thread:$0]  %s4444, 896, %s10, [#allocation4], 448, 448, 28
    $region73: #{tpu_custom_call.1} parent=1 // pred_fallthru
      _
    // Predicated region
    $region74: #{tpu_custom_call.1} parent=1 // pred_check
      _
    $region75: #{tpu_custom_call.1} parent=1 // pred_check_branch
      %4451 = sbr.rel (0) target = $region77
    $region76: #{tpu_custom_call.1} parent=1 // pred_region
      %s4453 = ssub.s32 512, 512
      %4454 = vsyncadd [#allocation16], %s4453
      %s4455 = sshll.u32 [#allocation15], 4
      %s4456 = int_to_ptr.vmem [resolvable:$true] %s4455
      %4461 = dma.vmem_to_hbm [thread:$0]  %s4456, 512, %s11, [#allocation16], 256, 256, 16
    $region77: #{tpu_custom_call.1} parent=1 // pred_fallthru
      _
    // Predicated region
    $region78: #{tpu_custom_call.1} parent=1 // pred_check
      _
    $region79: #{tpu_custom_call.1} parent=1 // pred_check_branch
      %4463 = sbr.rel (0) target = $region81
    $region80: #{tpu_custom_call.1} parent=1 // pred_region
      %4464 = dma.done [#allocation4], 896
    $region81: #{tpu_custom_call.1} parent=1 // pred_fallthru
      _
    // Predicated region
    $region82: #{tpu_custom_call.1} parent=1 // pred_check
      _
    $region83: #{tpu_custom_call.1} parent=1 // pred_check_branch
      %4466 = sbr.rel (0) target = $region85
    $region84: #{tpu_custom_call.1} parent=1 // pred_region
      %4467 = dma.done [#allocation16], 512
    $region85: #{tpu_custom_call.1} parent=1 // pred_fallthru
      _
    %4468 = vsyncpa [#allocation3], 1
    %4469 = vsyncpa [#allocation6], 1
    %4470 = vsyncpa [#allocation9], 1
    %4471 = vsyncpa [#allocation12], 1
    %4472 = vsyncpa [#allocation4], 1
    %4473 = vsyncpa [#allocation16], 1

</llo_original>
